<compile_context>
chip_gen: v7x
topology: tpu7x:2x2x1
jax: 0.10.0
libtpu: 0.0.40
codegen_flags: <defaults>
</compile_context>

<pallas_src>
import functools

import jax
import jax.numpy as jnp
import numpy as np
from jax import lax
from jax.experimental import pallas as pl
from jax.experimental.pallas import tpu as pltpu

_BN_EPS = 1e-5


# ------------------------------- Pallas kernels -------------------------------

def _pw_bias_relu_kernel(x_ref, w_ref, b_ref, o_ref):
    """relu(x @ w + b) on a (TM, Cin) row tile.  BN scale already folded into w (bf16)."""
    y = jnp.dot(x_ref[...].astype(w_ref.dtype), w_ref[...],
                preferred_element_type=jnp.float32)
    o_ref[...] = jnp.maximum(y + b_ref[...], 0.0).astype(o_ref.dtype)


def _pw_bias_add_relu_kernel(x_ref, w_ref, b_ref, r_ref, o_ref):
    """relu(x @ w + b + residual) on a (TM, Cin) row tile."""
    y = jnp.dot(x_ref[...].astype(w_ref.dtype), w_ref[...],
                preferred_element_type=jnp.float32)
    y = y + b_ref[...] + r_ref[...].astype(jnp.float32)
    o_ref[...] = jnp.maximum(y, 0.0).astype(o_ref.dtype)


def _conv3x3x3_bias_relu_kernel(h_ref, w_ref, b_ref, o_ref, acc_ref, *, dil, H, W):
    """One (n, d) output depth-slice of a 3x3x3 conv, reduced over the kd grid axis.

    h_ref:   (Hp, Wp, C)      bf16  padded input depth-row for this kd tap
    w_ref:   (3, 3, 3, C, C)  bf16  full weight, VMEM-resident (constant index_map)
    acc_ref: (H*W, C)         f32   VMEM accumulator; init at kd==0, finalize at kd==last
    """
    kd = pl.program_id(2)

    @pl.when(kd == 0)
    def _init():
        acc_ref[...] = jnp.zeros_like(acc_ref)

    c_in = h_ref.shape[-1]
    # Accumulate all 9 (kh, kw) taps of this kd into a local f32 value (chained sum ->
    # MRB in-place accumulate on v7x), then a single VMEM accumulator update per kd.
    part = None
    for kh in range(3):
        for kw in range(3):
            # NOTE: the kw slice shifts along the sublane axis; pltpu.roll could avoid the
            # relayout, but the kernel is MXU-bound at realistic channel counts.
            patch = h_ref[pl.ds(kh * dil, H), pl.ds(kw * dil, W), :].reshape(H * W, c_in)
            d = jnp.dot(patch, w_ref[kd, kh, kw], preferred_element_type=jnp.float32)
            part = d if part is None else part + d
    acc_ref[...] += part

    @pl.when(kd == pl.num_programs(2) - 1)
    def _finish():
        o_ref[...] = jnp.maximum(acc_ref[...] + b_ref[...], 0.0).astype(o_ref.dtype)


# ---------------------------- VMEM budgeting helpers ----------------------------

@functools.lru_cache(maxsize=None)
def _vmem_limit_bytes():
    cap = 64 * 1024 * 1024                      # conservative fallback (v7x physical)
    try:
        cap = int(pltpu.get_tpu_info().vmem_capacity_bytes)
    except Exception:
        pass
    return min((cap * 3) // 4, 100 * 1024 * 1024)


def _choose_row_tile(m, cin, cout, x_item, out_item, res_item, budget_bytes):
    """Largest row tile (<=512) whose double-buffered working set fits the VMEM budget."""
    fitting = []
    for tm in (512, 256, 128, 64, 32, 16, 8):
        if tm > max(m, 8):
            continue
        per = (2 * tm * cin * x_item                  # input tile, double-buffered
               + 2 * tm * cout * out_item             # output tile, double-buffered
               + 2 * tm * cout * res_item             # residual tile (0 if none)
               + 2 * cin * cout * 2                   # bf16 weights (resident)
               + 4 * cout)                            # bias
        if per <= budget_bytes:
            fitting.append(tm)
    if not fitting:
        return 8
    for tm in fitting:                                # prefer tiles that avoid masked edges
        if m % tm == 0:
            return tm
    return fitting[0]


# ---------------------------------- wrappers ----------------------------------

def _fold_bn(w, bn_params, eps=_BN_EPS):
    """Fold inference-mode BN scale into the conv weight; return (bf16 weight, f32 bias)."""
    gamma, beta, mean, var = bn_params
    scale = gamma / jnp.sqrt(var + eps)
    w_folded = (w.astype(jnp.float32) * scale).astype(jnp.bfloat16)
    bias = (beta - mean * scale).reshape(1, -1).astype(jnp.float32)
    return w_folded, bias


def pointwise_conv_bias_relu(x, w, b, residual=None, out_dtype=jnp.bfloat16):
    """1x1x1 conv (row-tiled matmul) + bias (+ residual) + ReLU.

    x: (N, D, H, W, Cin) bf16; w: (Cin, Cout) bf16 (BN scale folded); b: (1, Cout) f32.
    """
    lead, cin = x.shape[:-1], x.shape[-1]
    cout = w.shape[1]
    m = int(np.prod(lead))
    x2d = x.reshape(m, cin)
    vmem_limit = _vmem_limit_bytes()
    x_item = int(np.dtype(x.dtype).itemsize)
    out_item = int(np.dtype(out_dtype).itemsize)
    res_item = int(np.dtype(residual.dtype).itemsize) if residual is not None else 0
    tm = _choose_row_tile(m, cin, cout, x_item, out_item, res_item, vmem_limit // 2)

    args = [x2d, w, b]
    in_specs = [
        pl.BlockSpec((tm, cin), lambda i: (i, 0)),
        pl.BlockSpec((cin, cout), lambda i: (0, 0)),
        pl.BlockSpec((1, cout), lambda i: (0, 0)),
    ]
    if residual is not None:
        args.append(residual.reshape(m, cout))
        in_specs.append(pl.BlockSpec((tm, cout), lambda i: (i, 0)))
        kernel = _pw_bias_add_relu_kernel
    else:
        kernel = _pw_bias_relu_kernel

    bytes_accessed = int(m * cin * x_item
                         + w.size * 2 + b.size * 4
                         + m * cout * out_item
                         + (m * cout * res_item if residual is not None else 0))
    out = pl.pallas_call(
        kernel,
        out_shape=jax.ShapeDtypeStruct((m, cout), out_dtype),
        grid=(pl.cdiv(m, tm),),
        in_specs=in_specs,
        out_specs=pl.BlockSpec((tm, cout), lambda i: (i, 0)),
        compiler_params=pltpu.CompilerParams(
            dimension_semantics=("parallel",),
            vmem_limit_bytes=vmem_limit),
        cost_estimate=pl.CostEstimate(flops=2 * m * cin * cout,
                                      transcendentals=0,
                                      bytes_accessed=bytes_accessed),
    )(*args)
    return out.reshape(*lead, cout)


def conv3x3x3_bias_relu(h, w, b, dilation=1):
    """3x3x3 conv (stride 1, padding=dilation) + bias + ReLU.  h: (N, D, H, W, C) bf16."""
    n, d, hh, ww, c = h.shape
    p = dilation
    # TODO(synk): the zero halo is still materialized by one jnp.pad pass over the bf16
    # intermediate, and each padded depth row is DMA'd once per kd tap (3x); removing them
    # needs in-kernel halo masking and depth-tiling (TD-deep input blocks) respectively.
    hp = jnp.pad(h, ((0, 0), (p, p), (p, p), (p, p), (0, 0)))
    hpad, wpad = hh + 2 * p, ww + 2 * p
    kernel = functools.partial(_conv3x3x3_bias_relu_kernel, dil=dilation, H=hh, W=ww)
    # Resident weights/bias are fetched once; padded input rows are read once per kd tap.
    bytes_accessed = int(3 * hp.size * 2 + w.size * 2 + b.size * 4
                         + n * d * hh * ww * c * 2)

    out = pl.pallas_call(
        kernel,
        out_shape=jax.ShapeDtypeStruct((n, d, hh * ww, c), jnp.bfloat16),
        grid=(n, d, 3),
        in_specs=[
            # One padded depth row per kd tap (block size 1 along depth => element index).
            pl.BlockSpec((None, None, hpad, wpad, c),
                         lambda ni, di, kd: (ni, di + kd * dilation, 0, 0, 0)),
            # Full weight with constant index_map -> stays resident in VMEM across the grid.
            pl.BlockSpec((3, 3, 3, c, c), lambda ni, di, kd: (0, 0, 0, 0, 0)),
            pl.BlockSpec((1, c), lambda ni, di, kd: (0, 0)),
        ],
        out_specs=pl.BlockSpec((None, None, hh * ww, c),
                               lambda ni, di, kd: (ni, di, 0, 0)),
        scratch_shapes=[pltpu.VMEM((hh * ww, c), jnp.float32)],
        compiler_params=pltpu.CompilerParams(
            dimension_semantics=("parallel", "parallel", "arbitrary"),
            vmem_limit_bytes=_vmem_limit_bytes()),
        cost_estimate=pl.CostEstimate(flops=2 * 27 * n * d * hh * ww * c * c,
                                      transcendentals=0,
                                      bytes_accessed=bytes_accessed),
    )(hp, w, b)
    return out.reshape(n, d, hh, ww, c)


def bottleneck_forward(x_ncdhw, params, dilation=1):
    """Pallas Bottleneck.forward (eval-mode BN), NCDHW in / NCDHW out."""
    planes = params["w1"].shape[1]
    n, c0, d, hh, ww = x_ncdhw.shape
    # downsample=None (reference forward) => stride == 1 and inplanes == planes * expansion.
    assert c0 == 4 * planes, "residual add requires inplanes == planes * 4 (downsample=None)"
    # Fold the bf16 cast into the materialized transpose: conv1 input and conv3 residual
    # are read as bf16 (halves their HBM traffic); accumulation stays f32 on the MXU.
    x = jnp.transpose(x_ncdhw, (0, 2, 3, 4, 1)).astype(jnp.bfloat16)   # NCDHW -> NDHWC
    w1, b1 = _fold_bn(params["w1"], params["bn1"])
    w2, b2 = _fold_bn(params["w2"], params["bn2"])
    w3, b3 = _fold_bn(params["w3"], params["bn3"])
    h = pointwise_conv_bias_relu(x, w1, b1)                       # conv1 + bn1 + relu (bf16)
    h = conv3x3x3_bias_relu(h, w2, b2, dilation=dilation)         # conv2 + bn2 + relu (bf16)
    out = pointwise_conv_bias_relu(h, w3, b3, residual=x,
                                   out_dtype=jnp.float32)         # conv3 + bn3 + res + relu
    return jnp.transpose(out, (0, 4, 1, 2, 3))                    # NDHWC -> NCDHW


# ------------------------- params / reference / main --------------------------

def init_params(key, inplanes, planes):
    expansion = 4
    ks = jax.random.split(key, 6)

    def bn(k, c):
        k1, k2, k3, k4 = jax.random.split(k, 4)
        gamma = 1.0 + 0.1 * jax.random.normal(k1, (c,), jnp.float32)
        beta = 0.1 * jax.random.normal(k2, (c,), jnp.float32)
        mean = 0.1 * jax.random.normal(k3, (c,), jnp.float32)
        var = 1.0 + 0.1 * jax.random.uniform(k4, (c,), jnp.float32)
        return gamma, beta, mean, var

    return {
        # conv weights stored channels-last: (Cin, Cout) / (kd, kh, kw, Cin, Cout)
        "w1": 0.1 * jax.random.normal(ks[0], (inplanes, planes), jnp.float32),
        "w2": 0.1 * jax.random.normal(ks[1], (3, 3, 3, planes, planes), jnp.float32),
        "w3": 0.1 * jax.random.normal(ks[2], (planes, planes * expansion), jnp.float32),
        "bn1": bn(ks[3], planes),
        "bn2": bn(ks[4], planes),
        "bn3": bn(ks[5], planes * expansion),
    }


def bottleneck_reference(x_ncdhw, params, dilation=1):
    """Pure-JAX reference (lax.conv_general_dilated) mirroring the kernel's bf16 casts."""
    x = jnp.transpose(x_ncdhw, (0, 2, 3, 4, 1)).astype(jnp.bfloat16)
    w1, b1 = _fold_bn(params["w1"], params["bn1"])
    w2, b2 = _fold_bn(params["w2"], params["bn2"])
    w3, b3 = _fold_bn(params["w3"], params["bn3"])
    dn = ("NDHWC", "DHWIO", "NDHWC")

    def conv(inp, w, padding, rhs_dil):
        return lax.conv_general_dilated(
            inp.astype(jnp.bfloat16), w, (1, 1, 1), padding,
            rhs_dilation=rhs_dil, dimension_numbers=dn,
            preferred_element_type=jnp.float32)

    w1_5d = w1.reshape(1, 1, 1, *w1.shape)
    w3_5d = w3.reshape(1, 1, 1, *w3.shape)
    h = jnp.maximum(conv(x, w1_5d, "VALID", None) + b1, 0.0).astype(jnp.bfloat16)
    h = jnp.maximum(conv(h, w2, [(dilation, dilation)] * 3, (dilation,) * 3) + b2,
                    0.0).astype(jnp.bfloat16)
    out = jnp.maximum(conv(h, w3_5d, "VALID", None) + b3 + x.astype(jnp.float32), 0.0)
    return jnp.transpose(out, (0, 4, 1, 2, 3))


if __name__ == "__main__":
    key = jax.random.PRNGKey(0)
    kx, kp = jax.random.split(key)

    # Small shapes consistent with the module: inplanes == planes * expansion so the
    # residual add is valid with downsample=None, stride=1.
    N, inplanes, planes, D, H, W = 2, 16, 4, 8, 8, 8
    x = jax.random.normal(kx, (N, inplanes, D, H, W), jnp.float32)   # NCDHW (PyTorch)
    params = init_params(kp, inplanes, planes)

    fwd = jax.jit(functools.partial(bottleneck_forward, dilation=1))
    out = jax.block_until_ready(fwd(x, params))
    assert out.shape == (N, planes * 4, D, H, W)
    ref = bottleneck_reference(x, params, dilation=1)
    np.testing.assert_allclose(np.asarray(out), np.asarray(ref), atol=2e-2, rtol=2e-2)

    # Exercise the dilated 3x3x3 path as well (padding == dilation in the module).
    out2 = jax.block_until_ready(bottleneck_forward(x, params, dilation=2))
    ref2 = bottleneck_reference(x, params, dilation=2)
    np.testing.assert_allclose(np.asarray(out2), np.asarray(ref2), atol=2e-2, rtol=2e-2)

    print("KERNEL_OK")
</pallas_src>

<mosaic_0001>
module attributes {stable_mosaic.version = 11 : i64} {
  func.func @_pw_bias_relu_kernel(%arg0: i32, %arg1: memref<512x16xbf16, #tpu.memory_space<vmem>>, %arg2: memref<16x4xbf16, #tpu.memory_space<vmem>>, %arg3: memref<1x4xf32, #tpu.memory_space<vmem>>, %arg4: memref<512x4xbf16, #tpu.memory_space<vmem>>) attributes {dimension_semantics = [#tpu.dimension_semantics<parallel>], iteration_bounds = array<i64: 2>, scalar_prefetch = 0 : i64, scratch_operands = 0 : i64, tpu.core_type = #tpu.core_type<tc>, window_params = [{transform_indices = @transform_0, window_bounds = array<i64: 512, 16>}, {pipeline_mode = #tpu.pipeline_mode<synchronous>, transform_indices = @transform_1, window_bounds = array<i64: 16, 4>}, {pipeline_mode = #tpu.pipeline_mode<synchronous>, transform_indices = @transform_2, window_bounds = array<i64: 1, 4>}, {transform_indices = @transform_3, window_bounds = array<i64: 512, 4>}]} {
    %c0 = arith.constant 0 : index
    %c0_0 = arith.constant 0 : index
    %0 = vector.load %arg1[%c0, %c0_0] : memref<512x16xbf16, #tpu.memory_space<vmem>>, vector<512x16xbf16>
    %c0_1 = arith.constant 0 : index
    %c0_2 = arith.constant 0 : index
    %1 = vector.load %arg2[%c0_1, %c0_2] : memref<16x4xbf16, #tpu.memory_space<vmem>>, vector<16x4xbf16>
    %cst = arith.constant dense<0.000000e+00> : vector<512x4xf32>
    %2 = tpu.matmul %0, %1, %cst {dimension_numbers = #tpu.dot_dimension_numbers<[1], [0], [0], [1], [0, 0, 1, 1], [], []>} : vector<512x16xbf16>, vector<16x4xbf16>, vector<512x4xf32> -> vector<512x4xf32>
    %c0_3 = arith.constant 0 : index
    %c0_4 = arith.constant 0 : index
    %3 = vector.load %arg3[%c0_3, %c0_4] : memref<1x4xf32, #tpu.memory_space<vmem>>, vector<1x4xf32>
    %4 = vector.broadcast %3 : vector<1x4xf32> to vector<512x4xf32>
    %5 = arith.addf %2, %4 : vector<512x4xf32>
    %cst_5 = arith.constant 0.000000e+00 : f32
    %6 = vector.broadcast %cst_5 : f32 to vector<512x4xf32>
    %7 = arith.maximumf %5, %6 : vector<512x4xf32>
    %8 = arith.truncf %7 : vector<512x4xf32> to vector<512x4xbf16>
    %c0_6 = arith.constant 0 : index
    %c0_7 = arith.constant 0 : index
    %9 = vector.load %arg4[%c0_6, %c0_7] : memref<512x4xbf16, #tpu.memory_space<vmem>>, vector<512x4xbf16>
    tpu.vector_store %arg4[%c0_6, %c0_7], %8 {strides = array<i32>} : memref<512x4xbf16, #tpu.memory_space<vmem>>, vector<512x4xbf16>,
    return
  }
  func.func @transform_0(%arg0: i32) -> (i32, i32) {
    %c0_i32 = arith.constant 0 : i32
    %c0_i32_0 = arith.constant 0 : i32
    return %arg0, %c0_i32 : i32, i32
  }
  func.func @transform_1(%arg0: i32) -> (i32, i32) {
    %c0_i32 = arith.constant 0 : i32
    %c0_i32_0 = arith.constant 0 : i32
    %c0_i32_1 = arith.constant 0 : i32
    return %c0_i32, %c0_i32_0 : i32, i32
  }
  func.func @transform_2(%arg0: i32) -> (i32, i32) {
    %c0_i32 = arith.constant 0 : i32
    %c0_i32_0 = arith.constant 0 : i32
    %c0_i32_1 = arith.constant 0 : i32
    return %c0_i32, %c0_i32_0 : i32, i32
  }
  func.func @transform_3(%arg0: i32) -> (i32, i32) {
    %c0_i32 = arith.constant 0 : i32
    %c0_i32_0 = arith.constant 0 : i32
    return %arg0, %c0_i32 : i32, i32
  }
}

module attributes {stable_mosaic.version = 11 : i64} {
  func.func @_conv3x3x3_bias_relu_kernel(%arg0: i32, %arg1: i32, %arg2: i32, %arg3: memref<1x1x10x10x4xbf16, #tpu.memory_space<vmem>>, %arg4: memref<3x3x3x4x4xbf16, #tpu.memory_space<vmem>>, %arg5: memref<1x4xf32, #tpu.memory_space<vmem>>, %arg6: memref<1x1x64x4xbf16, #tpu.memory_space<vmem>>, %arg7: memref<64x4xf32, #tpu.memory_space<vmem>>) attributes {dimension_semantics = [#tpu.dimension_semantics<parallel>, #tpu.dimension_semantics<parallel>, #tpu.dimension_semantics<arbitrary>], iteration_bounds = array<i64: 2, 8, 3>, scalar_prefetch = 0 : i64, scratch_operands = 1 : i64, tpu.core_type = #tpu.core_type<tc>, window_params = [{transform_indices = @transform_0, window_bounds = array<i64: 1, 1, 10, 10, 4>}, {pipeline_mode = #tpu.pipeline_mode<synchronous>, transform_indices = @transform_1, window_bounds = array<i64: 3, 3, 3, 4, 4>}, {pipeline_mode = #tpu.pipeline_mode<synchronous>, transform_indices = @transform_2, window_bounds = array<i64: 1, 4>}, {transform_indices = @transform_3, window_bounds = array<i64: 1, 1, 64, 4>}]} {
    %c0_i32 = arith.constant 0 : i32
    %0 = arith.cmpi eq, %arg2, %c0_i32 : i32
    %1 = arith.extui %0 : i1 to i32
    %c0_i32_0 = arith.constant 0 : i32
    %2 = arith.cmpi ne, %1, %c0_i32_0 : i32
    scf.if %2 {
      %cst_92 = arith.constant 0.000000e+00 : f32
      %80 = vector.broadcast %cst_92 : f32 to vector<64x4xf32>
      %c0_93 = arith.constant 0 : index
      %c0_94 = arith.constant 0 : index
      %81 = vector.load %arg7[%c0_93, %c0_94] : memref<64x4xf32, #tpu.memory_space<vmem>>, vector<64x4xf32>
      tpu.vector_store %arg7[%c0_93, %c0_94], %80 {strides = array<i32>} : memref<64x4xf32, #tpu.memory_space<vmem>>, vector<64x4xf32>,
    } else {
    }
    %c0 = arith.constant 0 : index
    %c0_1 = arith.constant 0 : index
    %c0_2 = arith.constant 0 : index
    %c0_3 = arith.constant 0 : index
    %c0_4 = arith.constant 0 : index
    %3 = vector.load %arg3[%c0, %c0_1, %c0_2, %c0_3, %c0_4] : memref<1x1x10x10x4xbf16, #tpu.memory_space<vmem>>, vector<1x1x8x8x4xbf16>
    %4 = vector.shape_cast %3 : vector<1x1x8x8x4xbf16> to vector<8x8x4xbf16>
    %5 = vector.shape_cast %4 : vector<8x8x4xbf16> to vector<64x4xbf16>
    %6 = arith.index_cast %arg2 : i32 to index
    %c0_5 = arith.constant 0 : index
    %c0_6 = arith.constant 0 : index
    %c0_7 = arith.constant 0 : index
    %c0_8 = arith.constant 0 : index
    %7 = vector.load %arg4[%6, %c0_5, %c0_6, %c0_7, %c0_8] : memref<3x3x3x4x4xbf16, #tpu.memory_space<vmem>>, vector<1x1x1x4x4xbf16>
    %8 = vector.shape_cast %7 : vector<1x1x1x4x4xbf16> to vector<4x4xbf16>
    %cst = arith.constant dense<0.000000e+00> : vector<64x4xf32>
    %9 = tpu.matmul %5, %8, %cst {dimension_numbers = #tpu.dot_dimension_numbers<[1], [0], [0], [1], [0, 0, 1, 1], [], []>} : vector<64x4xbf16>, vector<4x4xbf16>, vector<64x4xf32> -> vector<64x4xf32>
    %c0_9 = arith.constant 0 : index
    %c0_10 = arith.constant 0 : index
    %c0_11 = arith.constant 0 : index
    %c1 = arith.constant 1 : index
    %c0_12 = arith.constant 0 : index
    %10 = vector.load %arg3[%c0_9, %c0_10, %c0_11, %c1, %c0_12] : memref<1x1x10x10x4xbf16, #tpu.memory_space<vmem>>, vector<1x1x8x8x4xbf16>
    %11 = vector.shape_cast %10 : vector<1x1x8x8x4xbf16> to vector<8x8x4xbf16>
    %12 = vector.shape_cast %11 : vector<8x8x4xbf16> to vector<64x4xbf16>
    %13 = arith.index_cast %arg2 : i32 to index
    %c0_13 = arith.constant 0 : index
    %c1_14 = arith.constant 1 : index
    %c0_15 = arith.constant 0 : index
    %c0_16 = arith.constant 0 : index
    %14 = vector.load %arg4[%13, %c0_13, %c1_14, %c0_15, %c0_16] : memref<3x3x3x4x4xbf16, #tpu.memory_space<vmem>>, vector<1x1x1x4x4xbf16>
    %15 = vector.shape_cast %14 : vector<1x1x1x4x4xbf16> to vector<4x4xbf16>
    %cst_17 = arith.constant dense<0.000000e+00> : vector<64x4xf32>
    %16 = tpu.matmul %12, %15, %cst_17 {dimension_numbers = #tpu.dot_dimension_numbers<[1], [0], [0], [1], [0, 0, 1, 1], [], []>} : vector<64x4xbf16>, vector<4x4xbf16>, vector<64x4xf32> -> vector<64x4xf32>
    %17 = arith.addf %9, %16 : vector<64x4xf32>
    %c0_18 = arith.constant 0 : index
    %c0_19 = arith.constant 0 : index
    %c0_20 = arith.constant 0 : index
    %c2 = arith.constant 2 : index
    %c0_21 = arith.constant 0 : index
    %18 = vector.load %arg3[%c0_18, %c0_19, %c0_20, %c2, %c0_21] : memref<1x1x10x10x4xbf16, #tpu.memory_space<vmem>>, vector<1x1x8x8x4xbf16>
    %19 = vector.shape_cast %18 : vector<1x1x8x8x4xbf16> to vector<8x8x4xbf16>
    %20 = vector.shape_cast %19 : vector<8x8x4xbf16> to vector<64x4xbf16>
    %21 = arith.index_cast %arg2 : i32 to index
    %c0_22 = arith.constant 0 : index
    %c2_23 = arith.constant 2 : index
    %c0_24 = arith.constant 0 : index
    %c0_25 = arith.constant 0 : index
    %22 = vector.load %arg4[%21, %c0_22, %c2_23, %c0_24, %c0_25] : memref<3x3x3x4x4xbf16, #tpu.memory_space<vmem>>, vector<1x1x1x4x4xbf16>
    %23 = vector.shape_cast %22 : vector<1x1x1x4x4xbf16> to vector<4x4xbf16>
    %cst_26 = arith.constant dense<0.000000e+00> : vector<64x4xf32>
    %24 = tpu.matmul %20, %23, %cst_26 {dimension_numbers = #tpu.dot_dimension_numbers<[1], [0], [0], [1], [0, 0, 1, 1], [], []>} : vector<64x4xbf16>, vector<4x4xbf16>, vector<64x4xf32> -> vector<64x4xf32>
    %25 = arith.addf %17, %24 : vector<64x4xf32>
    %c0_27 = arith.constant 0 : index
    %c0_28 = arith.constant 0 : index
    %c1_29 = arith.constant 1 : index
    %c0_30 = arith.constant 0 : index
    %c0_31 = arith.constant 0 : index
    %26 = vector.load %arg3[%c0_27, %c0_28, %c1_29, %c0_30, %c0_31] : memref<1x1x10x10x4xbf16, #tpu.memory_space<vmem>>, vector<1x1x8x8x4xbf16>
    %27 = vector.shape_cast %26 : vector<1x1x8x8x4xbf16> to vector<8x8x4xbf16>
    %28 = vector.shape_cast %27 : vector<8x8x4xbf16> to vector<64x4xbf16>
    %29 = arith.index_cast %arg2 : i32 to index
    %c1_32 = arith.constant 1 : index
    %c0_33 = arith.constant 0 : index
    %c0_34 = arith.constant 0 : index
    %c0_35 = arith.constant 0 : index
    %30 = vector.load %arg4[%29, %c1_32, %c0_33, %c0_34, %c0_35] : memref<3x3x3x4x4xbf16, #tpu.memory_space<vmem>>, vector<1x1x1x4x4xbf16>
    %31 = vector.shape_cast %30 : vector<1x1x1x4x4xbf16> to vector<4x4xbf16>
    %cst_36 = arith.constant dense<0.000000e+00> : vector<64x4xf32>
    %32 = tpu.matmul %28, %31, %cst_36 {dimension_numbers = #tpu.dot_dimension_numbers<[1], [0], [0], [1], [0, 0, 1, 1], [], []>} : vector<64x4xbf16>, vector<4x4xbf16>, vector<64x4xf32> -> vector<64x4xf32>
    %33 = arith.addf %25, %32 : vector<64x4xf32>
    %c0_37 = arith.constant 0 : index
    %c0_38 = arith.constant 0 : index
    %c1_39 = arith.constant 1 : index
    %c1_40 = arith.constant 1 : index
    %c0_41 = arith.constant 0 : index
    %34 = vector.load %arg3[%c0_37, %c0_38, %c1_39, %c1_40, %c0_41] : memref<1x1x10x10x4xbf16, #tpu.memory_space<vmem>>, vector<1x1x8x8x4xbf16>
    %35 = vector.shape_cast %34 : vector<1x1x8x8x4xbf16> to vector<8x8x4xbf16>
    %36 = vector.shape_cast %35 : vector<8x8x4xbf16> to vector<64x4xbf16>
    %37 = arith.index_cast %arg2 : i32 to index
    %c1_42 = arith.constant 1 : index
    %c1_43 = arith.constant 1 : index
    %c0_44 = arith.constant 0 : index
    %c0_45 = arith.constant 0 : index
    %38 = vector.load %arg4[%37, %c1_42, %c1_43, %c0_44, %c0_45] : memref<3x3x3x4x4xbf16, #tpu.memory_space<vmem>>, vector<1x1x1x4x4xbf16>
    %39 = vector.shape_cast %38 : vector<1x1x1x4x4xbf16> to vector<4x4xbf16>
    %cst_46 = arith.constant dense<0.000000e+00> : vector<64x4xf32>
    %40 = tpu.matmul %36, %39, %cst_46 {dimension_numbers = #tpu.dot_dimension_numbers<[1], [0], [0], [1], [0, 0, 1, 1], [], []>} : vector<64x4xbf16>, vector<4x4xbf16>, vector<64x4xf32> -> vector<64x4xf32>
    %41 = arith.addf %33, %40 : vector<64x4xf32>
    %c0_47 = arith.constant 0 : index
    %c0_48 = arith.constant 0 : index
    %c1_49 = arith.constant 1 : index
    %c2_50 = arith.constant 2 : index
    %c0_51 = arith.constant 0 : index
    %42 = vector.load %arg3[%c0_47, %c0_48, %c1_49, %c2_50, %c0_51] : memref<1x1x10x10x4xbf16, #tpu.memory_space<vmem>>, vector<1x1x8x8x4xbf16>
    %43 = vector.shape_cast %42 : vector<1x1x8x8x4xbf16> to vector<8x8x4xbf16>
    %44 = vector.shape_cast %43 : vector<8x8x4xbf16> to vector<64x4xbf16>
    %45 = arith.index_cast %arg2 : i32 to index
    %c1_52 = arith.constant 1 : index
    %c2_53 = arith.constant 2 : index
    %c0_54 = arith.constant 0 : index
    %c0_55 = arith.constant 0 : index
    %46 = vector.load %arg4[%45, %c1_52, %c2_53, %c0_54, %c0_55] : memref<3x3x3x4x4xbf16, #tpu.memory_space<vmem>>, vector<1x1x1x4x4xbf16>
    %47 = vector.shape_cast %46 : vector<1x1x1x4x4xbf16> to vector<4x4xbf16>
    %cst_56 = arith.constant dense<0.000000e+00> : vector<64x4xf32>
    %48 = tpu.matmul %44, %47, %cst_56 {dimension_numbers = #tpu.dot_dimension_numbers<[1], [0], [0], [1], [0, 0, 1, 1], [], []>} : vector<64x4xbf16>, vector<4x4xbf16>, vector<64x4xf32> -> vector<64x4xf32>
    %49 = arith.addf %41, %48 : vector<64x4xf32>
    %c0_57 = arith.constant 0 : index
    %c0_58 = arith.constant 0 : index
    %c2_59 = arith.constant 2 : index
    %c0_60 = arith.constant 0 : index
    %c0_61 = arith.constant 0 : index
    %50 = vector.load %arg3[%c0_57, %c0_58, %c2_59, %c0_60, %c0_61] : memref<1x1x10x10x4xbf16, #tpu.memory_space<vmem>>, vector<1x1x8x8x4xbf16>
    %51 = vector.shape_cast %50 : vector<1x1x8x8x4xbf16> to vector<8x8x4xbf16>
    %52 = vector.shape_cast %51 : vector<8x8x4xbf16> to vector<64x4xbf16>
    %53 = arith.index_cast %arg2 : i32 to index
    %c2_62 = arith.constant 2 : index
    %c0_63 = arith.constant 0 : index
    %c0_64 = arith.constant 0 : index
    %c0_65 = arith.constant 0 : index
    %54 = vector.load %arg4[%53, %c2_62, %c0_63, %c0_64, %c0_65] : memref<3x3x3x4x4xbf16, #tpu.memory_space<vmem>>, vector<1x1x1x4x4xbf16>
    %55 = vector.shape_cast %54 : vector<1x1x1x4x4xbf16> to vector<4x4xbf16>
    %cst_66 = arith.constant dense<0.000000e+00> : vector<64x4xf32>
    %56 = tpu.matmul %52, %55, %cst_66 {dimension_numbers = #tpu.dot_dimension_numbers<[1], [0], [0], [1], [0, 0, 1, 1], [], []>} : vector<64x4xbf16>, vector<4x4xbf16>, vector<64x4xf32> -> vector<64x4xf32>
    %57 = arith.addf %49, %56 : vector<64x4xf32>
    %c0_67 = arith.constant 0 : index
    %c0_68 = arith.constant 0 : index
    %c2_69 = arith.constant 2 : index
    %c1_70 = arith.constant 1 : index
    %c0_71 = arith.constant 0 : index
    %58 = vector.load %arg3[%c0_67, %c0_68, %c2_69, %c1_70, %c0_71] : memref<1x1x10x10x4xbf16, #tpu.memory_space<vmem>>, vector<1x1x8x8x4xbf16>
    %59 = vector.shape_cast %58 : vector<1x1x8x8x4xbf16> to vector<8x8x4xbf16>
    %60 = vector.shape_cast %59 : vector<8x8x4xbf16> to vector<64x4xbf16>
    %61 = arith.index_cast %arg2 : i32 to index
    %c2_72 = arith.constant 2 : index
    %c1_73 = arith.constant 1 : index
    %c0_74 = arith.constant 0 : index
    %c0_75 = arith.constant 0 : index
    %62 = vector.load %arg4[%61, %c2_72, %c1_73, %c0_74, %c0_75] : memref<3x3x3x4x4xbf16, #tpu.memory_space<vmem>>, vector<1x1x1x4x4xbf16>
    %63 = vector.shape_cast %62 : vector<1x1x1x4x4xbf16> to vector<4x4xbf16>
    %cst_76 = arith.constant dense<0.000000e+00> : vector<64x4xf32>
    %64 = tpu.matmul %60, %63, %cst_76 {dimension_numbers = #tpu.dot_dimension_numbers<[1], [0], [0], [1], [0, 0, 1, 1], [], []>} : vector<64x4xbf16>, vector<4x4xbf16>, vector<64x4xf32> -> vector<64x4xf32>
    %65 = arith.addf %57, %64 : vector<64x4xf32>
    %c0_77 = arith.constant 0 : index
    %c0_78 = arith.constant 0 : index
    %c2_79 = arith.constant 2 : index
    %c2_80 = arith.constant 2 : index
    %c0_81 = arith.constant 0 : index
    %66 = vector.load %arg3[%c0_77, %c0_78, %c2_79, %c2_80, %c0_81] : memref<1x1x10x10x4xbf16, #tpu.memory_space<vmem>>, vector<1x1x8x8x4xbf16>
    %67 = vector.shape_cast %66 : vector<1x1x8x8x4xbf16> to vector<8x8x4xbf16>
    %68 = vector.shape_cast %67 : vector<8x8x4xbf16> to vector<64x4xbf16>
    %69 = arith.index_cast %arg2 : i32 to index
    %c2_82 = arith.constant 2 : index
    %c2_83 = arith.constant 2 : index
    %c0_84 = arith.constant 0 : index
    %c0_85 = arith.constant 0 : index
    %70 = vector.load %arg4[%69, %c2_82, %c2_83, %c0_84, %c0_85] : memref<3x3x3x4x4xbf16, #tpu.memory_space<vmem>>, vector<1x1x1x4x4xbf16>
    %71 = vector.shape_cast %70 : vector<1x1x1x4x4xbf16> to vector<4x4xbf16>
    %cst_86 = arith.constant dense<0.000000e+00> : vector<64x4xf32>
    %72 = tpu.matmul %68, %71, %cst_86 {dimension_numbers = #tpu.dot_dimension_numbers<[1], [0], [0], [1], [0, 0, 1, 1], [], []>} : vector<64x4xbf16>, vector<4x4xbf16>, vector<64x4xf32> -> vector<64x4xf32>
    %73 = arith.addf %65, %72 : vector<64x4xf32>
    %c0_87 = arith.constant 0 : index
    %c0_88 = arith.constant 0 : index
    %74 = vector.load %arg7[%c0_87, %c0_88] : memref<64x4xf32, #tpu.memory_space<vmem>>, vector<64x4xf32>
    %75 = arith.addf %74, %73 : vector<64x4xf32>
    %c0_89 = arith.constant 0 : index
    %c0_90 = arith.constant 0 : index
    %76 = vector.load %arg7[%c0_89, %c0_90] : memref<64x4xf32, #tpu.memory_space<vmem>>, vector<64x4xf32>
    tpu.vector_store %arg7[%c0_89, %c0_90], %75 {strides = array<i32>} : memref<64x4xf32, #tpu.memory_space<vmem>>, vector<64x4xf32>,
    %c2_i32 = arith.constant 2 : i32
    %77 = arith.cmpi eq, %arg2, %c2_i32 : i32
    %78 = arith.extui %77 : i1 to i32
    %c0_i32_91 = arith.constant 0 : i32
    %79 = arith.cmpi ne, %78, %c0_i32_91 : i32
    scf.if %79 {
      %c0_92 = arith.constant 0 : index
      %c0_93 = arith.constant 0 : index
      %80 = vector.load %arg7[%c0_92, %c0_93] : memref<64x4xf32, #tpu.memory_space<vmem>>, vector<64x4xf32>
      %c0_94 = arith.constant 0 : index
      %c0_95 = arith.constant 0 : index
      %81 = vector.load %arg5[%c0_94, %c0_95] : memref<1x4xf32, #tpu.memory_space<vmem>>, vector<1x4xf32>
      %82 = vector.broadcast %81 : vector<1x4xf32> to vector<64x4xf32>
      %83 = arith.addf %80, %82 : vector<64x4xf32>
      %cst_96 = arith.constant 0.000000e+00 : f32
      %84 = vector.broadcast %cst_96 : f32 to vector<64x4xf32>
      %85 = arith.maximumf %83, %84 : vector<64x4xf32>
      %86 = arith.truncf %85 : vector<64x4xf32> to vector<64x4xbf16>
      %c0_97 = arith.constant 0 : index
      %c0_98 = arith.constant 0 : index
      %c0_99 = arith.constant 0 : index
      %c0_100 = arith.constant 0 : index
      %87 = vector.load %arg6[%c0_97, %c0_98, %c0_99, %c0_100] : memref<1x1x64x4xbf16, #tpu.memory_space<vmem>>, vector<1x1x64x4xbf16>
      %88 = vector.shape_cast %87 : vector<1x1x64x4xbf16> to vector<64x4xbf16>
      %89 = vector.shape_cast %86 : vector<64x4xbf16> to vector<1x1x64x4xbf16>
      tpu.vector_store %arg6[%c0_97, %c0_98, %c0_99, %c0_100], %89 {strides = array<i32>} : memref<1x1x64x4xbf16, #tpu.memory_space<vmem>>, vector<1x1x64x4xbf16>,
    } else {
    }
    return
  }
  func.func @transform_0(%arg0: i32, %arg1: i32, %arg2: i32) -> (i32, i32, i32, i32, i32) {
    %c1_i32 = arith.constant 1 : i32
    %0 = arith.muli %arg2, %c1_i32 : i32
    %1 = arith.addi %arg1, %0 : i32
    %c0_i32 = arith.constant 0 : i32
    %c0_i32_0 = arith.constant 0 : i32
    %c0_i32_1 = arith.constant 0 : i32
    %c0_i32_2 = arith.constant 0 : i32
    return %arg0, %1, %c0_i32, %c0_i32_0, %c0_i32_1 : i32, i32, i32, i32, i32
  }
  func.func @transform_1(%arg0: i32, %arg1: i32, %arg2: i32) -> (i32, i32, i32, i32, i32) {
    %c0_i32 = arith.constant 0 : i32
    %c0_i32_0 = arith.constant 0 : i32
    %c0_i32_1 = arith.constant 0 : i32
    %c0_i32_2 = arith.constant 0 : i32
    %c0_i32_3 = arith.constant 0 : i32
    %c0_i32_4 = arith.constant 0 : i32
    return %c0_i32, %c0_i32_0, %c0_i32_1, %c0_i32_2, %c0_i32_3 : i32, i32, i32, i32, i32
  }
  func.func @transform_2(%arg0: i32, %arg1: i32, %arg2: i32) -> (i32, i32) {
    %c0_i32 = arith.constant 0 : i32
    %c0_i32_0 = arith.constant 0 : i32
    %c0_i32_1 = arith.constant 0 : i32
    return %c0_i32, %c0_i32_0 : i32, i32
  }
  func.func @transform_3(%arg0: i32, %arg1: i32, %arg2: i32) -> (i32, i32, i32, i32) {
    %c0_i32 = arith.constant 0 : i32
    %c0_i32_0 = arith.constant 0 : i32
    %c0_i32_1 = arith.constant 0 : i32
    return %arg0, %arg1, %c0_i32, %c0_i32_0 : i32, i32, i32, i32
  }
}

module attributes {stable_mosaic.version = 11 : i64} {
  func.func @_pw_bias_add_relu_kernel(%arg0: i32, %arg1: memref<512x4xbf16, #tpu.memory_space<vmem>>, %arg2: memref<4x16xbf16, #tpu.memory_space<vmem>>, %arg3: memref<1x16xf32, #tpu.memory_space<vmem>>, %arg4: memref<512x16xbf16, #tpu.memory_space<vmem>>, %arg5: memref<512x16xf32, #tpu.memory_space<vmem>>) attributes {dimension_semantics = [#tpu.dimension_semantics<parallel>], iteration_bounds = array<i64: 2>, scalar_prefetch = 0 : i64, scratch_operands = 0 : i64, tpu.core_type = #tpu.core_type<tc>, window_params = [{transform_indices = @transform_0, window_bounds = array<i64: 512, 4>}, {pipeline_mode = #tpu.pipeline_mode<synchronous>, transform_indices = @transform_1, window_bounds = array<i64: 4, 16>}, {pipeline_mode = #tpu.pipeline_mode<synchronous>, transform_indices = @transform_2, window_bounds = array<i64: 1, 16>}, {transform_indices = @transform_3, window_bounds = array<i64: 512, 16>}, {transform_indices = @transform_4, window_bounds = array<i64: 512, 16>}]} {
    %c0 = arith.constant 0 : index
    %c0_0 = arith.constant 0 : index
    %0 = vector.load %arg1[%c0, %c0_0] : memref<512x4xbf16, #tpu.memory_space<vmem>>, vector<512x4xbf16>
    %c0_1 = arith.constant 0 : index
    %c0_2 = arith.constant 0 : index
    %1 = vector.load %arg2[%c0_1, %c0_2] : memref<4x16xbf16, #tpu.memory_space<vmem>>, vector<4x16xbf16>
    %cst = arith.constant dense<0.000000e+00> : vector<512x16xf32>
    %2 = tpu.matmul %0, %1, %cst {dimension_numbers = #tpu.dot_dimension_numbers<[1], [0], [0], [1], [0, 0, 1, 1], [], []>} : vector<512x4xbf16>, vector<4x16xbf16>, vector<512x16xf32> -> vector<512x16xf32>
    %c0_3 = arith.constant 0 : index
    %c0_4 = arith.constant 0 : index
    %3 = vector.load %arg3[%c0_3, %c0_4] : memref<1x16xf32, #tpu.memory_space<vmem>>, vector<1x16xf32>
    %4 = vector.broadcast %3 : vector<1x16xf32> to vector<512x16xf32>
    %5 = arith.addf %2, %4 : vector<512x16xf32>
    %c0_5 = arith.constant 0 : index
    %c0_6 = arith.constant 0 : index
    %6 = vector.load %arg4[%c0_5, %c0_6] : memref<512x16xbf16, #tpu.memory_space<vmem>>, vector<512x16xbf16>
    %7 = arith.extf %6 : vector<512x16xbf16> to vector<512x16xf32>
    %8 = arith.addf %5, %7 : vector<512x16xf32>
    %cst_7 = arith.constant 0.000000e+00 : f32
    %9 = vector.broadcast %cst_7 : f32 to vector<512x16xf32>
    %10 = arith.maximumf %8, %9 : vector<512x16xf32>
    %c0_8 = arith.constant 0 : index
    %c0_9 = arith.constant 0 : index
    %11 = vector.load %arg5[%c0_8, %c0_9] : memref<512x16xf32, #tpu.memory_space<vmem>>, vector<512x16xf32>
    tpu.vector_store %arg5[%c0_8, %c0_9], %10 {strides = array<i32>} : memref<512x16xf32, #tpu.memory_space<vmem>>, vector<512x16xf32>,
    return
  }
  func.func @transform_0(%arg0: i32) -> (i32, i32) {
    %c0_i32 = arith.constant 0 : i32
    %c0_i32_0 = arith.constant 0 : i32
    return %arg0, %c0_i32 : i32, i32
  }
  func.func @transform_1(%arg0: i32) -> (i32, i32) {
    %c0_i32 = arith.constant 0 : i32
    %c0_i32_0 = arith.constant 0 : i32
    %c0_i32_1 = arith.constant 0 : i32
    return %c0_i32, %c0_i32_0 : i32, i32
  }
  func.func @transform_2(%arg0: i32) -> (i32, i32) {
    %c0_i32 = arith.constant 0 : i32
    %c0_i32_0 = arith.constant 0 : i32
    %c0_i32_1 = arith.constant 0 : i32
    return %c0_i32, %c0_i32_0 : i32, i32
  }
  func.func @transform_3(%arg0: i32) -> (i32, i32) {
    %c0_i32 = arith.constant 0 : i32
    %c0_i32_0 = arith.constant 0 : i32
    return %arg0, %c0_i32 : i32, i32
  }
  func.func @transform_4(%arg0: i32) -> (i32, i32) {
    %c0_i32 = arith.constant 0 : i32
    %c0_i32_0 = arith.constant 0 : i32
    return %arg0, %c0_i32 : i32, i32
  }
}

</mosaic_0001>

<llo_original>
// kernel: bottleneck_forward.3
$region0: #{bottleneck_forward.3}
  #allocation0 [shape = 'u32[]', space=smem, size = 0x4, offset = 0x4, fixed_abs, tag = 'smem constant byte address 0x4 - core index']
  #allocation1 [shape = 'u32[144,128]{1,0:T(1,128)}', space=vmem, size = 0x12000, scoped, tag = 'internal scratch']
  %s0 = inlined_call_operand.vmem [shape: bf16[1024,16], index: 0, kind: input, shape index: {}]
  %s1 = inlined_call_operand.vmem [shape: bf16[16,4], index: 1, kind: input, shape index: {}]
  %s2 = inlined_call_operand.vmem [shape: f32[1,4], index: 2, kind: input, shape index: {}]
  %s3 = inlined_call_operand.vmem [shape: bf16[1024,4], index: 3, kind: output, shape index: {}]
  %s4 = sld [smem:[#allocation0]]
  $region45: #{bottleneck_forward.3} parent=0
    _
  %s6 = ssub.s32 1, %s4
  %s7 = scalar_select 0, %s6, %s4
  loop: start=0, step=1, limit=4
  $region2: #{bottleneck_forward.3} parent=0 // loop_pre_header
    _
  $region3: #{bottleneck_forward.3} parent=0 // loop_header
    %s9 = sphi 0, %s13
    %p10 = scmp.ge.s32.totalorder %s9, 4
    %s19 = sphi 0, %s21
    %s22 = sphi 0, %s19
    %s23 = sphi 0, %s22
    %s39 = sphi 0, %s23
    %s43 = sphi 0, %s43
    %s45 = sphi 0, %s43
    %s46 = sphi 0, %s45
    %s60 = sphi 0, %s46
    %s64 = sphi 0, %s64
    %s66 = sphi 0, %s64
    %s67 = sphi 0, %s66
    %s81 = sphi 0, %s67
    %s87 = sphi 0, %s89
    %s90 = sphi 0, %s87
    %s91 = sphi 0, %s90
    %s107 = sphi 0, %s91
  $region4: #{bottleneck_forward.3} parent=0 // loop_header_branch
    %12 = sbr.rel (%p10) target = $region8
  $region5: #{bottleneck_forward.3} parent=0 // loop_body
    %s14 = ssub.s32 %s9, 1
    %s15 = ssub.s32 %s9, 2
    %s16 = sadd.s32 %s9, 1
    %s17 = ssub.s32 %s9, %s16
    %p18 = scmp.eq.s32.totalorder %s17, 0
    %s20 = sadd.s32 %s19, 1
    %s21 = scalar_select %p18, %s19, %s20
    %p24 = pneg %p18
    %p25 = scmp.eq.s32.totalorder %s9, 1
    %p26 = por %p24, %p25
    %p27 = scmp.ne.s32.totalorder %s19, %s22
    %p28 = scmp.eq.s32.totalorder %s9, 0
    %p29 = por %p27, %p28
    %p30 = scmp.ne.s32.totalorder %s19, %s22
    %p31 = scmp.eq.s32.totalorder %s14, 1
    %p32 = por %p30, %p31
    %p33 = scmp.ne.s32.totalorder %s22, %s23
    %p34 = scmp.eq.s32.totalorder %s14, 0
    %p35 = por %p33, %p34
    %p36 = scmp.ne.s32.totalorder %s22, %s23
    %p37 = scmp.eq.s32.totalorder %s15, 1
    %p38 = por %p36, %p37
    %p40 = scmp.ne.s32.totalorder %s23, %s39
    %p41 = scmp.eq.s32.totalorder %s15, 0
    %p42 = por %p40, %p41
    %s44 = sadd.s32 %s43, 1
    %p47 = scmp.eq.s32.totalorder %s9, 1
    %p48 = scmp.ne.s32.totalorder %s43, %s45
    %p49 = scmp.eq.s32.totalorder %s9, 0
    %p50 = por %p48, %p49
    %p51 = scmp.ne.s32.totalorder %s43, %s45
    %p52 = scmp.eq.s32.totalorder %s14, 1
    %p53 = por %p51, %p52
    %p54 = scmp.ne.s32.totalorder %s45, %s46
    %p55 = scmp.eq.s32.totalorder %s14, 0
    %p56 = por %p54, %p55
    %p57 = scmp.ne.s32.totalorder %s45, %s46
    %p58 = scmp.eq.s32.totalorder %s15, 1
    %p59 = por %p57, %p58
    %p61 = scmp.ne.s32.totalorder %s46, %s60
    %p62 = scmp.eq.s32.totalorder %s15, 0
    %p63 = por %p61, %p62
    %s65 = sadd.s32 %s64, 1
    %p68 = scmp.eq.s32.totalorder %s9, 1
    %p69 = scmp.ne.s32.totalorder %s64, %s66
    %p70 = scmp.eq.s32.totalorder %s9, 0
    %p71 = por %p69, %p70
    %p72 = scmp.ne.s32.totalorder %s64, %s66
    %p73 = scmp.eq.s32.totalorder %s14, 1
    %p74 = por %p72, %p73
    %p75 = scmp.ne.s32.totalorder %s66, %s67
    %p76 = scmp.eq.s32.totalorder %s14, 0
    %p77 = por %p75, %p76
    %p78 = scmp.ne.s32.totalorder %s66, %s67
    %p79 = scmp.eq.s32.totalorder %s15, 1
    %p80 = por %p78, %p79
    %p82 = scmp.ne.s32.totalorder %s67, %s81
    %p83 = scmp.eq.s32.totalorder %s15, 0
    %p84 = por %p82, %p83
    %s85 = ssub.s32 %s9, %s16
    %p86 = scmp.eq.s32.totalorder %s85, 0
    %s88 = sadd.s32 %s87, 1
    %s89 = scalar_select %p86, %s87, %s88
    %p92 = pneg %p86
    %p93 = scmp.eq.s32.totalorder %s9, 1
    %p94 = por %p92, %p93
    %p95 = scmp.ne.s32.totalorder %s87, %s90
    %p96 = scmp.eq.s32.totalorder %s9, 0
    %p97 = por %p95, %p96
    %p98 = scmp.ne.s32.totalorder %s87, %s90
    %p99 = scmp.eq.s32.totalorder %s14, 1
    %p100 = por %p98, %p99
    %p101 = scmp.ne.s32.totalorder %s90, %s91
    %p102 = scmp.eq.s32.totalorder %s14, 0
    %p103 = por %p101, %p102
    %p104 = scmp.ne.s32.totalorder %s90, %s91
    %p105 = scmp.eq.s32.totalorder %s15, 1
    %p106 = por %p104, %p105
    %p108 = scmp.ne.s32.totalorder %s91, %s107
    %p109 = scmp.eq.s32.totalorder %s15, 0
    %p110 = por %p108, %p109
    %p111 = scmp.le.s32.totalorder 1, %s9
    %p112 = scmp.lt.s32.totalorder %s9, 3
    %p113 = pnand %p111, %p112
    %p114 = pneg %p113
    // Predicated region
    $region9: #{bottleneck_forward.3} parent=5 // pred_check
      _
    $region10: #{bottleneck_forward.3} parent=5 // pred_check_branch
      %116 = sbr.rel (%p113) target = $region12
    $region11: #{bottleneck_forward.3} parent=5 // pred_region
      %s117 = ssub.s32 %s9, 1
      // Predicated region
      $region13: #{bottleneck_forward.3} parent=11 // pred_check
        %p118 = pneg %p56
      $region14: #{bottleneck_forward.3} parent=11 // pred_check_branch
        %120 = sbr.rel (%p118) target = $region16
      $region15: #{bottleneck_forward.3} parent=11 // pred_region
        _
      $region16: #{bottleneck_forward.3} parent=11 // pred_fallthru
        _
      // Predicated region
      $region17: #{bottleneck_forward.3} parent=11 // pred_check
        %p121 = pneg %p77
      $region18: #{bottleneck_forward.3} parent=11 // pred_check_branch
        %123 = sbr.rel (%p121) target = $region20
      $region19: #{bottleneck_forward.3} parent=11 // pred_region
        _
      $region20: #{bottleneck_forward.3} parent=11 // pred_fallthru
        _
    $region12: #{bottleneck_forward.3} parent=5 // pred_fallthru
      _
    %p124 = scmp.lt.s32.totalorder %s9, 2
    // Predicated region
    $region21: #{bottleneck_forward.3} parent=5 // pred_check
      %p125 = pneg %p124
    $region22: #{bottleneck_forward.3} parent=5 // pred_check_branch
      %127 = sbr.rel (%p125) target = $region24
    $region23: #{bottleneck_forward.3} parent=5 // pred_region
      // Predicated region
      $region25: #{bottleneck_forward.3} parent=23 // pred_check
        %p128 = pneg %p29
      $region26: #{bottleneck_forward.3} parent=23 // pred_check_branch
        %130 = sbr.rel (%p128) target = $region28
      $region27: #{bottleneck_forward.3} parent=23 // pred_region
        %s131 = smul.u32 64, %s9
        %p132 = scmp.lt.s32.totalorder %s131, 127
        %s133 = scalar_select %p132, %s131, 127
        %s134 = smul.addr %s133, 4
        %s135 = scalar_lea.vmem %s0, %s134
        %s136 = smul.u32 64, %s9
      $region28: #{bottleneck_forward.3} parent=23 // pred_fallthru
        _
    $region24: #{bottleneck_forward.3} parent=5 // pred_fallthru
      _
    %p137 = scmp.le.s32.totalorder 1, %s9
    %p138 = scmp.lt.s32.totalorder %s9, 3
    %p139 = pnand %p137, %p138
    %p140 = pneg %p139
    // Predicated region
    $region29: #{bottleneck_forward.3} parent=5 // pred_check
      _
    $region30: #{bottleneck_forward.3} parent=5 // pred_check_branch
      %142 = sbr.rel (%p139) target = $region32
    $region31: #{bottleneck_forward.3} parent=5 // pred_region
      %s143 = ssub.s32 %s9, 1
      %s144 = smul.u32 64, %s14
      %p145 = scmp.lt.s32.totalorder %s144, 127
      %s146 = scalar_select %p145, %s144, 127
      %s147 = smul.addr %s146, 4
      %s148 = scalar_lea.vmem %s0, %s147
      %p149 = pneg %p35
      %p150 = pneg %p32
      %p151 = pneg %p56
      %p152 = pneg %p53
      %p153 = pneg %p77
      %p154 = pneg %p74
      %p155 = pneg %p103
      %p156 = pneg %p100
      %s157 = smul.u32 64, %s14
      %p158 = scmp.lt.s32.totalorder %s157, 127
      %s159 = scalar_select %p158, %s157, 127
      %s160 = smul.addr %s159, 4
      %s161 = scalar_lea.vmem %s3, %s160
      %s162 = smul.u32 64, %s14
      %p163 = scmp.lt.s32.totalorder %s162, 127
      %s164 = scalar_select %p163, %s162, 127
      %s165 = smul.addr %s164, 4
      %s166 = scalar_lea.vmem %s0, %s165
      %s167 = smul.u32 64, %s14
      %s168 = smul.u32 64, %s14
      %p169 = scmp.lt.s32.totalorder %s168, 127
      %s170 = scalar_select %p169, %s168, 127
      %s171 = smul.addr %s170, 4
      %s172 = scalar_lea.vmem %s3, %s171
      %s173 = smul.u32 64, %s14
      %v175 = vld [vmem:[%s166] sm:$0xf]
      %v176 = vld [vmem:[%s166 + $0x4] sm:$0xf]
      %v177 = vld [vmem:[%s166 + $0x8] sm:$0xf]
      %v178 = vld [vmem:[%s166 + $0xc] sm:$0xf]
      %v179 = vld [vmem:[%s166 + $0x10] sm:$0xf]
      %v180 = vld [vmem:[%s166 + $0x14] sm:$0xf]
      %v181 = vld [vmem:[%s166 + $0x18] sm:$0xf]
      %v182 = vld [vmem:[%s166 + $0x1c] sm:$0xf]
      %v183 = vld [vmem:[%s166 + $0x20] sm:$0xf]
      %v184 = vld [vmem:[%s166 + $0x24] sm:$0xf]
      %v185 = vld [vmem:[%s166 + $0x28] sm:$0xf]
      %v186 = vld [vmem:[%s166 + $0x2c] sm:$0xf]
      %v187 = vld [vmem:[%s166 + $0x30] sm:$0xf]
      %v188 = vld [vmem:[%s166 + $0x34] sm:$0xf]
      %v189 = vld [vmem:[%s166 + $0x38] sm:$0xf]
      %v190 = vld [vmem:[%s166 + $0x3c] sm:$0xf]
      %v191 = vld [vmem:[%s166 + $0x40] sm:$0xf]
      %v192 = vld [vmem:[%s166 + $0x44] sm:$0xf]
      %v193 = vld [vmem:[%s166 + $0x48] sm:$0xf]
      %v194 = vld [vmem:[%s166 + $0x4c] sm:$0xf]
      %v195 = vld [vmem:[%s166 + $0x50] sm:$0xf]
      %v196 = vld [vmem:[%s166 + $0x54] sm:$0xf]
      %v197 = vld [vmem:[%s166 + $0x58] sm:$0xf]
      %v198 = vld [vmem:[%s166 + $0x5c] sm:$0xf]
      %v199 = vld [vmem:[%s166 + $0x60] sm:$0xf]
      %v200 = vld [vmem:[%s166 + $0x64] sm:$0xf]
      %v201 = vld [vmem:[%s166 + $0x68] sm:$0xf]
      %v202 = vld [vmem:[%s166 + $0x6c] sm:$0xf]
      %v203 = vld [vmem:[%s166 + $0x70] sm:$0xf]
      %v204 = vld [vmem:[%s166 + $0x74] sm:$0xf]
      %v205 = vld [vmem:[%s166 + $0x78] sm:$0xf]
      %v206 = vld [vmem:[%s166 + $0x7c] sm:$0xf]
      %v207 = vld [vmem:[%s166 + $0x80] sm:$0xf]
      %v208 = vld [vmem:[%s166 + $0x84] sm:$0xf]
      %v209 = vld [vmem:[%s166 + $0x88] sm:$0xf]
      %v210 = vld [vmem:[%s166 + $0x8c] sm:$0xf]
      %v211 = vld [vmem:[%s166 + $0x90] sm:$0xf]
      %v212 = vld [vmem:[%s166 + $0x94] sm:$0xf]
      %v213 = vld [vmem:[%s166 + $0x98] sm:$0xf]
      %v214 = vld [vmem:[%s166 + $0x9c] sm:$0xf]
      %v215 = vld [vmem:[%s166 + $0xa0] sm:$0xf]
      %v216 = vld [vmem:[%s166 + $0xa4] sm:$0xf]
      %v217 = vld [vmem:[%s166 + $0xa8] sm:$0xf]
      %v218 = vld [vmem:[%s166 + $0xac] sm:$0xf]
      %v219 = vld [vmem:[%s166 + $0xb0] sm:$0xf]
      %v220 = vld [vmem:[%s166 + $0xb4] sm:$0xf]
      %v221 = vld [vmem:[%s166 + $0xb8] sm:$0xf]
      %v222 = vld [vmem:[%s166 + $0xbc] sm:$0xf]
      %v223 = vld [vmem:[%s166 + $0xc0] sm:$0xf]
      %v224 = vld [vmem:[%s166 + $0xc4] sm:$0xf]
      %v225 = vld [vmem:[%s166 + $0xc8] sm:$0xf]
      %v226 = vld [vmem:[%s166 + $0xcc] sm:$0xf]
      %v227 = vld [vmem:[%s166 + $0xd0] sm:$0xf]
      %v228 = vld [vmem:[%s166 + $0xd4] sm:$0xf]
      %v229 = vld [vmem:[%s166 + $0xd8] sm:$0xf]
      %v230 = vld [vmem:[%s166 + $0xdc] sm:$0xf]
      %v231 = vld [vmem:[%s166 + $0xe0] sm:$0xf]
      %v232 = vld [vmem:[%s166 + $0xe4] sm:$0xf]
      %v233 = vld [vmem:[%s166 + $0xe8] sm:$0xf]
      %v234 = vld [vmem:[%s166 + $0xec] sm:$0xf]
      %v235 = vld [vmem:[%s166 + $0xf0] sm:$0xf]
      %v236 = vld [vmem:[%s166 + $0xf4] sm:$0xf]
      %v237 = vld [vmem:[%s166 + $0xf8] sm:$0xf]
      %v238 = vld [vmem:[%s166 + $0xfc] sm:$0xf]
      %v239 = vld [vmem:[%s1] sm:$0xf]
      %v240 = vld [vmem:[%s1 + $0x4] sm:$0xf]
      %v241 = vld [vmem:[%s2] sm:$0x1]
      %v243 = vlaneseq
      %v244 = vshrl.u32 %v243, 7
      %v245 = vsub.s32 0, %v244
      %v246 = vrot.slane %v241, %v245
      %v312 = vunpack.c.l.b16 %v175
      %v313 = vunpack.c.l.b16 %v176
      %v314 = vunpack.c.l.b16 %v177
      %v315 = vunpack.c.l.b16 %v178
      %v316 = vunpack.c.l.b16 %v179
      %v317 = vunpack.c.l.b16 %v180
      %v318 = vunpack.c.l.b16 %v181
      %v319 = vunpack.c.l.b16 %v182
      %v320 = vunpack.c.l.b16 %v183
      %v321 = vunpack.c.l.b16 %v184
      %v322 = vunpack.c.l.b16 %v185
      %v323 = vunpack.c.l.b16 %v186
      %v324 = vunpack.c.l.b16 %v187
      %v325 = vunpack.c.l.b16 %v188
      %v326 = vunpack.c.l.b16 %v189
      %v327 = vunpack.c.l.b16 %v190
      %v328 = vunpack.c.l.b16 %v191
      %v329 = vunpack.c.l.b16 %v192
      %v330 = vunpack.c.l.b16 %v193
      %v331 = vunpack.c.l.b16 %v194
      %v332 = vunpack.c.l.b16 %v195
      %v333 = vunpack.c.l.b16 %v196
      %v334 = vunpack.c.l.b16 %v197
      %v335 = vunpack.c.l.b16 %v198
      %v336 = vunpack.c.l.b16 %v199
      %v337 = vunpack.c.l.b16 %v200
      %v338 = vunpack.c.l.b16 %v201
      %v339 = vunpack.c.l.b16 %v202
      %v340 = vunpack.c.l.b16 %v203
      %v341 = vunpack.c.l.b16 %v204
      %v342 = vunpack.c.l.b16 %v205
      %v343 = vunpack.c.l.b16 %v206
      %v344 = vunpack.c.l.b16 %v207
      %v345 = vunpack.c.l.b16 %v208
      %v346 = vunpack.c.l.b16 %v209
      %v347 = vunpack.c.l.b16 %v210
      %v348 = vunpack.c.l.b16 %v211
      %v349 = vunpack.c.l.b16 %v212
      %v350 = vunpack.c.l.b16 %v213
      %v351 = vunpack.c.l.b16 %v214
      %v352 = vunpack.c.l.b16 %v215
      %v353 = vunpack.c.l.b16 %v216
      %v354 = vunpack.c.l.b16 %v217
      %v355 = vunpack.c.l.b16 %v218
      %v356 = vunpack.c.l.b16 %v219
      %v357 = vunpack.c.l.b16 %v220
      %v358 = vunpack.c.l.b16 %v221
      %v359 = vunpack.c.l.b16 %v222
      %v360 = vunpack.c.l.b16 %v223
      %v361 = vunpack.c.l.b16 %v224
      %v362 = vunpack.c.l.b16 %v225
      %v363 = vunpack.c.l.b16 %v226
      %v364 = vunpack.c.l.b16 %v227
      %v365 = vunpack.c.l.b16 %v228
      %v366 = vunpack.c.l.b16 %v229
      %v367 = vunpack.c.l.b16 %v230
      %v368 = vunpack.c.l.b16 %v231
      %v369 = vunpack.c.l.b16 %v232
      %v370 = vunpack.c.l.b16 %v233
      %v371 = vunpack.c.l.b16 %v234
      %v372 = vunpack.c.l.b16 %v235
      %v373 = vunpack.c.l.b16 %v236
      %v374 = vunpack.c.l.b16 %v237
      %v375 = vunpack.c.l.b16 %v238
      %v376 = vpack.c.b16 %v313, %v312
      %v377 = vpack.c.b16 %v315, %v314
      %v378 = vpack.c.b16 %v317, %v316
      %v379 = vpack.c.b16 %v319, %v318
      %v380 = vpack.c.b16 %v321, %v320
      %v381 = vpack.c.b16 %v323, %v322
      %v382 = vpack.c.b16 %v325, %v324
      %v383 = vpack.c.b16 %v327, %v326
      %v384 = vpack.c.b16 %v329, %v328
      %v385 = vpack.c.b16 %v331, %v330
      %v386 = vpack.c.b16 %v333, %v332
      %v387 = vpack.c.b16 %v335, %v334
      %v388 = vpack.c.b16 %v337, %v336
      %v389 = vpack.c.b16 %v339, %v338
      %v390 = vpack.c.b16 %v341, %v340
      %v391 = vpack.c.b16 %v343, %v342
      %v392 = vpack.c.b16 %v345, %v344
      %v393 = vpack.c.b16 %v347, %v346
      %v394 = vpack.c.b16 %v349, %v348
      %v395 = vpack.c.b16 %v351, %v350
      %v396 = vpack.c.b16 %v353, %v352
      %v397 = vpack.c.b16 %v355, %v354
      %v398 = vpack.c.b16 %v357, %v356
      %v399 = vpack.c.b16 %v359, %v358
      %v400 = vpack.c.b16 %v361, %v360
      %v401 = vpack.c.b16 %v363, %v362
      %v402 = vpack.c.b16 %v365, %v364
      %v403 = vpack.c.b16 %v367, %v366
      %v404 = vpack.c.b16 %v369, %v368
      %v405 = vpack.c.b16 %v371, %v370
      %v406 = vpack.c.b16 %v373, %v372
      %v407 = vpack.c.b16 %v375, %v374
      %v410 = vunpack.c.l.b16 %v239
      %v411 = vunpack.c.l.b16 %v240
      %v412 = vpack.c.b16 %v411, %v410
      %vm414 = vcmask 130048
      %v416 = vsel %vm414, %v376, 0
      %v419 = vsel %vm414, %v377, 0
      %v422 = vsel %vm414, %v378, 0
      %v425 = vsel %vm414, %v379, 0
      %v428 = vsel %vm414, %v380, 0
      %v431 = vsel %vm414, %v381, 0
      %v434 = vsel %vm414, %v382, 0
      %v437 = vsel %vm414, %v383, 0
      %v440 = vsel %vm414, %v384, 0
      %v443 = vsel %vm414, %v385, 0
      %v446 = vsel %vm414, %v386, 0
      %v449 = vsel %vm414, %v387, 0
      %v452 = vsel %vm414, %v388, 0
      %v455 = vsel %vm414, %v389, 0
      %v458 = vsel %vm414, %v390, 0
      %v461 = vsel %vm414, %v391, 0
      %v464 = vsel %vm414, %v392, 0
      %v467 = vsel %vm414, %v393, 0
      %v470 = vsel %vm414, %v394, 0
      %v473 = vsel %vm414, %v395, 0
      %v476 = vsel %vm414, %v396, 0
      %v479 = vsel %vm414, %v397, 0
      %v482 = vsel %vm414, %v398, 0
      %v485 = vsel %vm414, %v399, 0
      %v488 = vsel %vm414, %v400, 0
      %v491 = vsel %vm414, %v401, 0
      %v494 = vsel %vm414, %v402, 0
      %v497 = vsel %vm414, %v403, 0
      %v500 = vsel %vm414, %v404, 0
      %v503 = vsel %vm414, %v405, 0
      %v506 = vsel %vm414, %v406, 0
      %v509 = vsel %vm414, %v407, 0
      %511 = vmatprep.subr.bf16.mxu0 0
      %512 = vmatpush1.bf16.msra.mxu0 %v412
      %513 = vmatprep.subr.bf16.mxu0 0
      %514 = vmatpush1.bf16.msra.mxu0 0
      %515 = vmatprep.subr.bf16.mxu0 0
      %516 = vmatpush1.bf16.msra.mxu0 0
      %517 = vmatprep.subr.bf16.mxu0 0
      %518 = vmatpush1.bf16.msra.mxu0 0
      %519 = vmatprep.subr.bf16.mxu0 0
      %520 = vmatpush1.bf16.msra.mxu0 0
      %521 = vmatprep.subr.bf16.mxu0 0
      %522 = vmatpush1.bf16.msra.mxu0 0
      %523 = vmatprep.subr.bf16.mxu0 0
      %524 = vmatpush1.bf16.msra.mxu0 0
      %525 = vmatprep.subr.bf16.mxu0 0
      %526 = vmatpush1.bf16.msra.mxu0 0
      %527 = vmatprep.subr.bf16.mxu0 0
      %528 = vmatpush1.bf16.msra.mxu0 0
      %529 = vmatprep.subr.bf16.mxu0 0
      %530 = vmatpush1.bf16.msra.mxu0 0
      %531 = vmatprep.subr.bf16.mxu0 0
      %532 = vmatpush1.bf16.msra.mxu0 0
      %533 = vmatprep.subr.bf16.mxu0 0
      %534 = vmatpush1.bf16.msra.mxu0 0
      %535 = vmatprep.subr.bf16.mxu0 0
      %536 = vmatpush1.bf16.msra.mxu0 0
      %537 = vmatprep.subr.bf16.mxu0 0
      %538 = vmatpush1.bf16.msra.mxu0 0
      %539 = vmatprep.subr.bf16.mxu0 0
      %540 = vmatpush1.bf16.msra.mxu0 0
      %541 = vmatprep.subr.bf16.mxu0 0
      %542 = vmatpush1.bf16.msra.mxu0 0
      %543 = vmatprep.mubr.bf16.mxu0 0
      %544 = vmatmul.mubr.bf16.gmra.mrb[0].mxu0 %v416
      %v545 = vpop.f32.mrb[0].mxu0
      %v546 = vadd.f32 %v246, %v545
      %v547 = vpop.f32.mrb[0].mxu0
      %v548 = vpop.f32.mrb[0].mxu0
      %v549 = vadd.f32 %v246, %v548
      %v550 = vpop.f32.mrb[0].mxu0
      %551 = vmatprep.mubr.bf16.mxu0 0
      %552 = vmatmul.mubr.bf16.gmra.mrb[0].mxu0 %v419
      %v553 = vpop.f32.mrb[0].mxu0
      %v554 = vadd.f32 %v246, %v553
      %v555 = vpop.f32.mrb[0].mxu0
      %v556 = vpop.f32.mrb[0].mxu0
      %v557 = vadd.f32 %v246, %v556
      %v558 = vpop.f32.mrb[0].mxu0
      %559 = vmatprep.mubr.bf16.mxu0 0
      %560 = vmatmul.mubr.bf16.gmra.mrb[0].mxu0 %v422
      %v561 = vpop.f32.mrb[0].mxu0
      %v562 = vadd.f32 %v246, %v561
      %v563 = vpop.f32.mrb[0].mxu0
      %v564 = vpop.f32.mrb[0].mxu0
      %v565 = vadd.f32 %v246, %v564
      %v566 = vpop.f32.mrb[0].mxu0
      %567 = vmatprep.mubr.bf16.mxu0 0
      %568 = vmatmul.mubr.bf16.gmra.mrb[0].mxu0 %v425
      %v569 = vpop.f32.mrb[0].mxu0
      %v570 = vadd.f32 %v246, %v569
      %v571 = vpop.f32.mrb[0].mxu0
      %v572 = vpop.f32.mrb[0].mxu0
      %v573 = vadd.f32 %v246, %v572
      %v574 = vpop.f32.mrb[0].mxu0
      %575 = vmatprep.mubr.bf16.mxu0 0
      %576 = vmatmul.mubr.bf16.gmra.mrb[0].mxu0 %v428
      %v577 = vpop.f32.mrb[0].mxu0
      %v578 = vadd.f32 %v246, %v577
      %v579 = vpop.f32.mrb[0].mxu0
      %v580 = vpop.f32.mrb[0].mxu0
      %v581 = vadd.f32 %v246, %v580
      %v582 = vpop.f32.mrb[0].mxu0
      %583 = vmatprep.mubr.bf16.mxu0 0
      %584 = vmatmul.mubr.bf16.gmra.mrb[0].mxu0 %v431
      %v585 = vpop.f32.mrb[0].mxu0
      %v586 = vadd.f32 %v246, %v585
      %v587 = vpop.f32.mrb[0].mxu0
      %v588 = vpop.f32.mrb[0].mxu0
      %v589 = vadd.f32 %v246, %v588
      %v590 = vpop.f32.mrb[0].mxu0
      %591 = vmatprep.mubr.bf16.mxu0 0
      %592 = vmatmul.mubr.bf16.gmra.mrb[0].mxu0 %v434
      %v593 = vpop.f32.mrb[0].mxu0
      %v594 = vadd.f32 %v246, %v593
      %v595 = vpop.f32.mrb[0].mxu0
      %v596 = vpop.f32.mrb[0].mxu0
      %v597 = vadd.f32 %v246, %v596
      %v598 = vpop.f32.mrb[0].mxu0
      %599 = vmatprep.mubr.bf16.mxu0 0
      %600 = vmatmul.mubr.bf16.gmra.mrb[0].mxu0 %v437
      %v601 = vpop.f32.mrb[0].mxu0
      %v602 = vadd.f32 %v246, %v601
      %v603 = vpop.f32.mrb[0].mxu0
      %v604 = vpop.f32.mrb[0].mxu0
      %v605 = vadd.f32 %v246, %v604
      %v606 = vpop.f32.mrb[0].mxu0
      %607 = vmatprep.mubr.bf16.mxu0 0
      %608 = vmatmul.mubr.bf16.gmra.mrb[0].mxu0 %v440
      %v609 = vpop.f32.mrb[0].mxu0
      %v610 = vadd.f32 %v246, %v609
      %v611 = vpop.f32.mrb[0].mxu0
      %v612 = vpop.f32.mrb[0].mxu0
      %v613 = vadd.f32 %v246, %v612
      %v614 = vpop.f32.mrb[0].mxu0
      %615 = vmatprep.mubr.bf16.mxu0 0
      %616 = vmatmul.mubr.bf16.gmra.mrb[0].mxu0 %v443
      %v617 = vpop.f32.mrb[0].mxu0
      %v618 = vadd.f32 %v246, %v617
      %v619 = vpop.f32.mrb[0].mxu0
      %v620 = vpop.f32.mrb[0].mxu0
      %v621 = vadd.f32 %v246, %v620
      %v622 = vpop.f32.mrb[0].mxu0
      %623 = vmatprep.mubr.bf16.mxu0 0
      %624 = vmatmul.mubr.bf16.gmra.mrb[0].mxu0 %v446
      %v625 = vpop.f32.mrb[0].mxu0
      %v626 = vadd.f32 %v246, %v625
      %v627 = vpop.f32.mrb[0].mxu0
      %v628 = vpop.f32.mrb[0].mxu0
      %v629 = vadd.f32 %v246, %v628
      %v630 = vpop.f32.mrb[0].mxu0
      %631 = vmatprep.mubr.bf16.mxu0 0
      %632 = vmatmul.mubr.bf16.gmra.mrb[0].mxu0 %v449
      %v633 = vpop.f32.mrb[0].mxu0
      %v634 = vadd.f32 %v246, %v633
      %v635 = vpop.f32.mrb[0].mxu0
      %v636 = vpop.f32.mrb[0].mxu0
      %v637 = vadd.f32 %v246, %v636
      %v638 = vpop.f32.mrb[0].mxu0
      %639 = vmatprep.mubr.bf16.mxu0 0
      %640 = vmatmul.mubr.bf16.gmra.mrb[0].mxu0 %v452
      %v641 = vpop.f32.mrb[0].mxu0
      %v642 = vadd.f32 %v246, %v641
      %v643 = vpop.f32.mrb[0].mxu0
      %v644 = vpop.f32.mrb[0].mxu0
      %v645 = vadd.f32 %v246, %v644
      %v646 = vpop.f32.mrb[0].mxu0
      %647 = vmatprep.mubr.bf16.mxu0 0
      %648 = vmatmul.mubr.bf16.gmra.mrb[0].mxu0 %v455
      %v649 = vpop.f32.mrb[0].mxu0
      %v650 = vadd.f32 %v246, %v649
      %v651 = vpop.f32.mrb[0].mxu0
      %v652 = vpop.f32.mrb[0].mxu0
      %v653 = vadd.f32 %v246, %v652
      %v654 = vpop.f32.mrb[0].mxu0
      %655 = vmatprep.mubr.bf16.mxu0 0
      %656 = vmatmul.mubr.bf16.gmra.mrb[0].mxu0 %v458
      %v657 = vpop.f32.mrb[0].mxu0
      %v658 = vadd.f32 %v246, %v657
      %v659 = vpop.f32.mrb[0].mxu0
      %v660 = vpop.f32.mrb[0].mxu0
      %v661 = vadd.f32 %v246, %v660
      %v662 = vpop.f32.mrb[0].mxu0
      %663 = vmatprep.mubr.bf16.mxu0 0
      %664 = vmatmul.mubr.bf16.gmra.mrb[0].mxu0 %v461
      %v665 = vpop.f32.mrb[0].mxu0
      %v666 = vadd.f32 %v246, %v665
      %v667 = vpop.f32.mrb[0].mxu0
      %v668 = vpop.f32.mrb[0].mxu0
      %v669 = vadd.f32 %v246, %v668
      %v670 = vpop.f32.mrb[0].mxu0
      %671 = vmatprep.mubr.bf16.mxu0 0
      %672 = vmatmul.mubr.bf16.gmra.mrb[0].mxu0 %v464
      %v673 = vpop.f32.mrb[0].mxu0
      %v674 = vadd.f32 %v246, %v673
      %v675 = vpop.f32.mrb[0].mxu0
      %v676 = vpop.f32.mrb[0].mxu0
      %v677 = vadd.f32 %v246, %v676
      %v678 = vpop.f32.mrb[0].mxu0
      %679 = vmatprep.mubr.bf16.mxu0 0
      %680 = vmatmul.mubr.bf16.gmra.mrb[0].mxu0 %v467
      %v681 = vpop.f32.mrb[0].mxu0
      %v682 = vadd.f32 %v246, %v681
      %v683 = vpop.f32.mrb[0].mxu0
      %v684 = vpop.f32.mrb[0].mxu0
      %v685 = vadd.f32 %v246, %v684
      %v686 = vpop.f32.mrb[0].mxu0
      %687 = vmatprep.mubr.bf16.mxu0 0
      %688 = vmatmul.mubr.bf16.gmra.mrb[0].mxu0 %v470
      %v689 = vpop.f32.mrb[0].mxu0
      %v690 = vadd.f32 %v246, %v689
      %v691 = vpop.f32.mrb[0].mxu0
      %v692 = vpop.f32.mrb[0].mxu0
      %v693 = vadd.f32 %v246, %v692
      %v694 = vpop.f32.mrb[0].mxu0
      %695 = vmatprep.mubr.bf16.mxu0 0
      %696 = vmatmul.mubr.bf16.gmra.mrb[0].mxu0 %v473
      %v697 = vpop.f32.mrb[0].mxu0
      %v698 = vadd.f32 %v246, %v697
      %v699 = vpop.f32.mrb[0].mxu0
      %v700 = vpop.f32.mrb[0].mxu0
      %v701 = vadd.f32 %v246, %v700
      %v702 = vpop.f32.mrb[0].mxu0
      %703 = vmatprep.mubr.bf16.mxu0 0
      %704 = vmatmul.mubr.bf16.gmra.mrb[0].mxu0 %v476
      %v705 = vpop.f32.mrb[0].mxu0
      %v706 = vadd.f32 %v246, %v705
      %v707 = vpop.f32.mrb[0].mxu0
      %v708 = vpop.f32.mrb[0].mxu0
      %v709 = vadd.f32 %v246, %v708
      %v710 = vpop.f32.mrb[0].mxu0
      %711 = vmatprep.mubr.bf16.mxu0 0
      %712 = vmatmul.mubr.bf16.gmra.mrb[0].mxu0 %v479
      %v713 = vpop.f32.mrb[0].mxu0
      %v714 = vadd.f32 %v246, %v713
      %v715 = vpop.f32.mrb[0].mxu0
      %v716 = vpop.f32.mrb[0].mxu0
      %v717 = vadd.f32 %v246, %v716
      %v718 = vpop.f32.mrb[0].mxu0
      %719 = vmatprep.mubr.bf16.mxu0 0
      %720 = vmatmul.mubr.bf16.gmra.mrb[0].mxu0 %v482
      %v721 = vpop.f32.mrb[0].mxu0
      %v722 = vadd.f32 %v246, %v721
      %v723 = vpop.f32.mrb[0].mxu0
      %v724 = vpop.f32.mrb[0].mxu0
      %v725 = vadd.f32 %v246, %v724
      %v726 = vpop.f32.mrb[0].mxu0
      %727 = vmatprep.mubr.bf16.mxu0 0
      %728 = vmatmul.mubr.bf16.gmra.mrb[0].mxu0 %v485
      %v729 = vpop.f32.mrb[0].mxu0
      %v730 = vadd.f32 %v246, %v729
      %v731 = vpop.f32.mrb[0].mxu0
      %v732 = vpop.f32.mrb[0].mxu0
      %v733 = vadd.f32 %v246, %v732
      %v734 = vpop.f32.mrb[0].mxu0
      %735 = vmatprep.mubr.bf16.mxu0 0
      %736 = vmatmul.mubr.bf16.gmra.mrb[0].mxu0 %v488
      %v737 = vpop.f32.mrb[0].mxu0
      %v738 = vadd.f32 %v246, %v737
      %v739 = vpop.f32.mrb[0].mxu0
      %v740 = vpop.f32.mrb[0].mxu0
      %v741 = vadd.f32 %v246, %v740
      %v742 = vpop.f32.mrb[0].mxu0
      %743 = vmatprep.mubr.bf16.mxu0 0
      %744 = vmatmul.mubr.bf16.gmra.mrb[0].mxu0 %v491
      %v745 = vpop.f32.mrb[0].mxu0
      %v746 = vadd.f32 %v246, %v745
      %v747 = vpop.f32.mrb[0].mxu0
      %v748 = vpop.f32.mrb[0].mxu0
      %v749 = vadd.f32 %v246, %v748
      %v750 = vpop.f32.mrb[0].mxu0
      %751 = vmatprep.mubr.bf16.mxu0 0
      %752 = vmatmul.mubr.bf16.gmra.mrb[0].mxu0 %v494
      %v753 = vpop.f32.mrb[0].mxu0
      %v754 = vadd.f32 %v246, %v753
      %v755 = vpop.f32.mrb[0].mxu0
      %v756 = vpop.f32.mrb[0].mxu0
      %v757 = vadd.f32 %v246, %v756
      %v758 = vpop.f32.mrb[0].mxu0
      %759 = vmatprep.mubr.bf16.mxu0 0
      %760 = vmatmul.mubr.bf16.gmra.mrb[0].mxu0 %v497
      %v761 = vpop.f32.mrb[0].mxu0
      %v762 = vadd.f32 %v246, %v761
      %v763 = vpop.f32.mrb[0].mxu0
      %v764 = vpop.f32.mrb[0].mxu0
      %v765 = vadd.f32 %v246, %v764
      %v766 = vpop.f32.mrb[0].mxu0
      %767 = vmatprep.mubr.bf16.mxu0 0
      %768 = vmatmul.mubr.bf16.gmra.mrb[0].mxu0 %v500
      %v769 = vpop.f32.mrb[0].mxu0
      %v770 = vadd.f32 %v246, %v769
      %v771 = vpop.f32.mrb[0].mxu0
      %v772 = vpop.f32.mrb[0].mxu0
      %v773 = vadd.f32 %v246, %v772
      %v774 = vpop.f32.mrb[0].mxu0
      %775 = vmatprep.mubr.bf16.mxu0 0
      %776 = vmatmul.mubr.bf16.gmra.mrb[0].mxu0 %v503
      %v777 = vpop.f32.mrb[0].mxu0
      %v778 = vadd.f32 %v246, %v777
      %v779 = vpop.f32.mrb[0].mxu0
      %v780 = vpop.f32.mrb[0].mxu0
      %v781 = vadd.f32 %v246, %v780
      %v782 = vpop.f32.mrb[0].mxu0
      %783 = vmatprep.mubr.bf16.mxu0 0
      %784 = vmatmul.mubr.bf16.gmra.mrb[0].mxu0 %v506
      %v785 = vpop.f32.mrb[0].mxu0
      %v786 = vadd.f32 %v246, %v785
      %v787 = vpop.f32.mrb[0].mxu0
      %v788 = vpop.f32.mrb[0].mxu0
      %v789 = vadd.f32 %v246, %v788
      %v790 = vpop.f32.mrb[0].mxu0
      %791 = vmatprep.mubr.bf16.mxu0 0
      %792 = vmatmul.mubr.bf16.gmra.mrb[0].mxu0 %v509
      %v793 = vpop.f32.mrb[0].mxu0
      %v794 = vadd.f32 %v246, %v793
      %v795 = vpop.f32.mrb[0].mxu0
      %v796 = vpop.f32.mrb[0].mxu0
      %v797 = vadd.f32 %v246, %v796
      %v798 = vpop.f32.mrb[0].mxu0
      %799 = vdwg.mxu0
      %v800 = vmax.f32 %v546, 0.0
      %v801 = vmax.f32 %v549, 0.0
      %v802 = vmax.f32 %v554, 0.0
      %v803 = vmax.f32 %v557, 0.0
      %v804 = vmax.f32 %v562, 0.0
      %v805 = vmax.f32 %v565, 0.0
      %v806 = vmax.f32 %v570, 0.0
      %v807 = vmax.f32 %v573, 0.0
      %v808 = vmax.f32 %v578, 0.0
      %v809 = vmax.f32 %v581, 0.0
      %v810 = vmax.f32 %v586, 0.0
      %v811 = vmax.f32 %v589, 0.0
      %v812 = vmax.f32 %v594, 0.0
      %v813 = vmax.f32 %v597, 0.0
      %v814 = vmax.f32 %v602, 0.0
      %v815 = vmax.f32 %v605, 0.0
      %v816 = vmax.f32 %v610, 0.0
      %v817 = vmax.f32 %v613, 0.0
      %v818 = vmax.f32 %v618, 0.0
      %v819 = vmax.f32 %v621, 0.0
      %v820 = vmax.f32 %v626, 0.0
      %v821 = vmax.f32 %v629, 0.0
      %v822 = vmax.f32 %v634, 0.0
      %v823 = vmax.f32 %v637, 0.0
      %v824 = vmax.f32 %v642, 0.0
      %v825 = vmax.f32 %v645, 0.0
      %v826 = vmax.f32 %v650, 0.0
      %v827 = vmax.f32 %v653, 0.0
      %v828 = vmax.f32 %v658, 0.0
      %v829 = vmax.f32 %v661, 0.0
      %v830 = vmax.f32 %v666, 0.0
      %v831 = vmax.f32 %v669, 0.0
      %v832 = vmax.f32 %v674, 0.0
      %v833 = vmax.f32 %v677, 0.0
      %v834 = vmax.f32 %v682, 0.0
      %v835 = vmax.f32 %v685, 0.0
      %v836 = vmax.f32 %v690, 0.0
      %v837 = vmax.f32 %v693, 0.0
      %v838 = vmax.f32 %v698, 0.0
      %v839 = vmax.f32 %v701, 0.0
      %v840 = vmax.f32 %v706, 0.0
      %v841 = vmax.f32 %v709, 0.0
      %v842 = vmax.f32 %v714, 0.0
      %v843 = vmax.f32 %v717, 0.0
      %v844 = vmax.f32 %v722, 0.0
      %v845 = vmax.f32 %v725, 0.0
      %v846 = vmax.f32 %v730, 0.0
      %v847 = vmax.f32 %v733, 0.0
      %v848 = vmax.f32 %v738, 0.0
      %v849 = vmax.f32 %v741, 0.0
      %v850 = vmax.f32 %v746, 0.0
      %v851 = vmax.f32 %v749, 0.0
      %v852 = vmax.f32 %v754, 0.0
      %v853 = vmax.f32 %v757, 0.0
      %v854 = vmax.f32 %v762, 0.0
      %v855 = vmax.f32 %v765, 0.0
      %v856 = vmax.f32 %v770, 0.0
      %v857 = vmax.f32 %v773, 0.0
      %v858 = vmax.f32 %v778, 0.0
      %v859 = vmax.f32 %v781, 0.0
      %v860 = vmax.f32 %v786, 0.0
      %v861 = vmax.f32 %v789, 0.0
      %v862 = vmax.f32 %v794, 0.0
      %v863 = vmax.f32 %v797, 0.0
      %v864 = vpack.c.bf16 %v801, %v800
      %v865 = vpack.c.bf16 %v803, %v802
      %v866 = vpack.c.bf16 %v805, %v804
      %v867 = vpack.c.bf16 %v807, %v806
      %v868 = vpack.c.bf16 %v809, %v808
      %v869 = vpack.c.bf16 %v811, %v810
      %v870 = vpack.c.bf16 %v813, %v812
      %v871 = vpack.c.bf16 %v815, %v814
      %v872 = vpack.c.bf16 %v817, %v816
      %v873 = vpack.c.bf16 %v819, %v818
      %v874 = vpack.c.bf16 %v821, %v820
      %v875 = vpack.c.bf16 %v823, %v822
      %v876 = vpack.c.bf16 %v825, %v824
      %v877 = vpack.c.bf16 %v827, %v826
      %v878 = vpack.c.bf16 %v829, %v828
      %v879 = vpack.c.bf16 %v831, %v830
      %v880 = vpack.c.bf16 %v833, %v832
      %v881 = vpack.c.bf16 %v835, %v834
      %v882 = vpack.c.bf16 %v837, %v836
      %v883 = vpack.c.bf16 %v839, %v838
      %v884 = vpack.c.bf16 %v841, %v840
      %v885 = vpack.c.bf16 %v843, %v842
      %v886 = vpack.c.bf16 %v845, %v844
      %v887 = vpack.c.bf16 %v847, %v846
      %v888 = vpack.c.bf16 %v849, %v848
      %v889 = vpack.c.bf16 %v851, %v850
      %v890 = vpack.c.bf16 %v853, %v852
      %v891 = vpack.c.bf16 %v855, %v854
      %v892 = vpack.c.bf16 %v857, %v856
      %v893 = vpack.c.bf16 %v859, %v858
      %v894 = vpack.c.bf16 %v861, %v860
      %v895 = vpack.c.bf16 %v863, %v862
      %v928 = vunpack.c.l.b16 %v864
      %v929 = vunpack.c.h.b16 %v864
      %v930 = vunpack.c.l.b16 %v865
      %v931 = vunpack.c.h.b16 %v865
      %v932 = vunpack.c.l.b16 %v866
      %v933 = vunpack.c.h.b16 %v866
      %v934 = vunpack.c.l.b16 %v867
      %v935 = vunpack.c.h.b16 %v867
      %v936 = vunpack.c.l.b16 %v868
      %v937 = vunpack.c.h.b16 %v868
      %v938 = vunpack.c.l.b16 %v869
      %v939 = vunpack.c.h.b16 %v869
      %v940 = vunpack.c.l.b16 %v870
      %v941 = vunpack.c.h.b16 %v870
      %v942 = vunpack.c.l.b16 %v871
      %v943 = vunpack.c.h.b16 %v871
      %v944 = vunpack.c.l.b16 %v872
      %v945 = vunpack.c.h.b16 %v872
      %v946 = vunpack.c.l.b16 %v873
      %v947 = vunpack.c.h.b16 %v873
      %v948 = vunpack.c.l.b16 %v874
      %v949 = vunpack.c.h.b16 %v874
      %v950 = vunpack.c.l.b16 %v875
      %v951 = vunpack.c.h.b16 %v875
      %v952 = vunpack.c.l.b16 %v876
      %v953 = vunpack.c.h.b16 %v876
      %v954 = vunpack.c.l.b16 %v877
      %v955 = vunpack.c.h.b16 %v877
      %v956 = vunpack.c.l.b16 %v878
      %v957 = vunpack.c.h.b16 %v878
      %v958 = vunpack.c.l.b16 %v879
      %v959 = vunpack.c.h.b16 %v879
      %v960 = vunpack.c.l.b16 %v880
      %v961 = vunpack.c.h.b16 %v880
      %v962 = vunpack.c.l.b16 %v881
      %v963 = vunpack.c.h.b16 %v881
      %v964 = vunpack.c.l.b16 %v882
      %v965 = vunpack.c.h.b16 %v882
      %v966 = vunpack.c.l.b16 %v883
      %v967 = vunpack.c.h.b16 %v883
      %v968 = vunpack.c.l.b16 %v884
      %v969 = vunpack.c.h.b16 %v884
      %v970 = vunpack.c.l.b16 %v885
      %v971 = vunpack.c.h.b16 %v885
      %v972 = vunpack.c.l.b16 %v886
      %v973 = vunpack.c.h.b16 %v886
      %v974 = vunpack.c.l.b16 %v887
      %v975 = vunpack.c.h.b16 %v887
      %v976 = vunpack.c.l.b16 %v888
      %v977 = vunpack.c.h.b16 %v888
      %v978 = vunpack.c.l.b16 %v889
      %v979 = vunpack.c.h.b16 %v889
      %v980 = vunpack.c.l.b16 %v890
      %v981 = vunpack.c.h.b16 %v890
      %v982 = vunpack.c.l.b16 %v891
      %v983 = vunpack.c.h.b16 %v891
      %v984 = vunpack.c.l.b16 %v892
      %v985 = vunpack.c.h.b16 %v892
      %v986 = vunpack.c.l.b16 %v893
      %v987 = vunpack.c.h.b16 %v893
      %v988 = vunpack.c.l.b16 %v894
      %v989 = vunpack.c.h.b16 %v894
      %v990 = vunpack.c.l.b16 %v895
      %v991 = vunpack.c.h.b16 %v895
      %v992 = vpack.c.b16 %v928, %v928
      %v993 = vpack.c.b16 %v929, %v929
      %v994 = vpack.c.b16 %v930, %v930
      %v995 = vpack.c.b16 %v931, %v931
      %v996 = vpack.c.b16 %v932, %v932
      %v997 = vpack.c.b16 %v933, %v933
      %v998 = vpack.c.b16 %v934, %v934
      %v999 = vpack.c.b16 %v935, %v935
      %v1000 = vpack.c.b16 %v936, %v936
      %v1001 = vpack.c.b16 %v937, %v937
      %v1002 = vpack.c.b16 %v938, %v938
      %v1003 = vpack.c.b16 %v939, %v939
      %v1004 = vpack.c.b16 %v940, %v940
      %v1005 = vpack.c.b16 %v941, %v941
      %v1006 = vpack.c.b16 %v942, %v942
      %v1007 = vpack.c.b16 %v943, %v943
      %v1008 = vpack.c.b16 %v944, %v944
      %v1009 = vpack.c.b16 %v945, %v945
      %v1010 = vpack.c.b16 %v946, %v946
      %v1011 = vpack.c.b16 %v947, %v947
      %v1012 = vpack.c.b16 %v948, %v948
      %v1013 = vpack.c.b16 %v949, %v949
      %v1014 = vpack.c.b16 %v950, %v950
      %v1015 = vpack.c.b16 %v951, %v951
      %v1016 = vpack.c.b16 %v952, %v952
      %v1017 = vpack.c.b16 %v953, %v953
      %v1018 = vpack.c.b16 %v954, %v954
      %v1019 = vpack.c.b16 %v955, %v955
      %v1020 = vpack.c.b16 %v956, %v956
      %v1021 = vpack.c.b16 %v957, %v957
      %v1022 = vpack.c.b16 %v958, %v958
      %v1023 = vpack.c.b16 %v959, %v959
      %v1024 = vpack.c.b16 %v960, %v960
      %v1025 = vpack.c.b16 %v961, %v961
      %v1026 = vpack.c.b16 %v962, %v962
      %v1027 = vpack.c.b16 %v963, %v963
      %v1028 = vpack.c.b16 %v964, %v964
      %v1029 = vpack.c.b16 %v965, %v965
      %v1030 = vpack.c.b16 %v966, %v966
      %v1031 = vpack.c.b16 %v967, %v967
      %v1032 = vpack.c.b16 %v968, %v968
      %v1033 = vpack.c.b16 %v969, %v969
      %v1034 = vpack.c.b16 %v970, %v970
      %v1035 = vpack.c.b16 %v971, %v971
      %v1036 = vpack.c.b16 %v972, %v972
      %v1037 = vpack.c.b16 %v973, %v973
      %v1038 = vpack.c.b16 %v974, %v974
      %v1039 = vpack.c.b16 %v975, %v975
      %v1040 = vpack.c.b16 %v976, %v976
      %v1041 = vpack.c.b16 %v977, %v977
      %v1042 = vpack.c.b16 %v978, %v978
      %v1043 = vpack.c.b16 %v979, %v979
      %v1044 = vpack.c.b16 %v980, %v980
      %v1045 = vpack.c.b16 %v981, %v981
      %v1046 = vpack.c.b16 %v982, %v982
      %v1047 = vpack.c.b16 %v983, %v983
      %v1048 = vpack.c.b16 %v984, %v984
      %v1049 = vpack.c.b16 %v985, %v985
      %v1050 = vpack.c.b16 %v986, %v986
      %v1051 = vpack.c.b16 %v987, %v987
      %v1052 = vpack.c.b16 %v988, %v988
      %v1053 = vpack.c.b16 %v989, %v989
      %v1054 = vpack.c.b16 %v990, %v990
      %v1055 = vpack.c.b16 %v991, %v991
      %vm1120 = vcmask 27648
      %1121 = vst.msk [vmem:[%s172] sm:$0xf] %vm1120, %v992
      %1122 = vst.msk [vmem:[%s172 + $0x4] sm:$0xf] %vm1120, %v993
      %1123 = vst.msk [vmem:[%s172 + $0x8] sm:$0xf] %vm1120, %v994
      %1124 = vst.msk [vmem:[%s172 + $0xc] sm:$0xf] %vm1120, %v995
      %1125 = vst.msk [vmem:[%s172 + $0x10] sm:$0xf] %vm1120, %v996
      %1126 = vst.msk [vmem:[%s172 + $0x14] sm:$0xf] %vm1120, %v997
      %1127 = vst.msk [vmem:[%s172 + $0x18] sm:$0xf] %vm1120, %v998
      %1128 = vst.msk [vmem:[%s172 + $0x1c] sm:$0xf] %vm1120, %v999
      %1129 = vst.msk [vmem:[%s172 + $0x20] sm:$0xf] %vm1120, %v1000
      %1130 = vst.msk [vmem:[%s172 + $0x24] sm:$0xf] %vm1120, %v1001
      %1131 = vst.msk [vmem:[%s172 + $0x28] sm:$0xf] %vm1120, %v1002
      %1132 = vst.msk [vmem:[%s172 + $0x2c] sm:$0xf] %vm1120, %v1003
      %1133 = vst.msk [vmem:[%s172 + $0x30] sm:$0xf] %vm1120, %v1004
      %1134 = vst.msk [vmem:[%s172 + $0x34] sm:$0xf] %vm1120, %v1005
      %1135 = vst.msk [vmem:[%s172 + $0x38] sm:$0xf] %vm1120, %v1006
      %1136 = vst.msk [vmem:[%s172 + $0x3c] sm:$0xf] %vm1120, %v1007
      %1137 = vst.msk [vmem:[%s172 + $0x40] sm:$0xf] %vm1120, %v1008
      %1138 = vst.msk [vmem:[%s172 + $0x44] sm:$0xf] %vm1120, %v1009
      %1139 = vst.msk [vmem:[%s172 + $0x48] sm:$0xf] %vm1120, %v1010
      %1140 = vst.msk [vmem:[%s172 + $0x4c] sm:$0xf] %vm1120, %v1011
      %1141 = vst.msk [vmem:[%s172 + $0x50] sm:$0xf] %vm1120, %v1012
      %1142 = vst.msk [vmem:[%s172 + $0x54] sm:$0xf] %vm1120, %v1013
      %1143 = vst.msk [vmem:[%s172 + $0x58] sm:$0xf] %vm1120, %v1014
      %1144 = vst.msk [vmem:[%s172 + $0x5c] sm:$0xf] %vm1120, %v1015
      %1145 = vst.msk [vmem:[%s172 + $0x60] sm:$0xf] %vm1120, %v1016
      %1146 = vst.msk [vmem:[%s172 + $0x64] sm:$0xf] %vm1120, %v1017
      %1147 = vst.msk [vmem:[%s172 + $0x68] sm:$0xf] %vm1120, %v1018
      %1148 = vst.msk [vmem:[%s172 + $0x6c] sm:$0xf] %vm1120, %v1019
      %1149 = vst.msk [vmem:[%s172 + $0x70] sm:$0xf] %vm1120, %v1020
      %1150 = vst.msk [vmem:[%s172 + $0x74] sm:$0xf] %vm1120, %v1021
      %1151 = vst.msk [vmem:[%s172 + $0x78] sm:$0xf] %vm1120, %v1022
      %1152 = vst.msk [vmem:[%s172 + $0x7c] sm:$0xf] %vm1120, %v1023
      %1153 = vst.msk [vmem:[%s172 + $0x80] sm:$0xf] %vm1120, %v1024
      %1154 = vst.msk [vmem:[%s172 + $0x84] sm:$0xf] %vm1120, %v1025
      %1155 = vst.msk [vmem:[%s172 + $0x88] sm:$0xf] %vm1120, %v1026
      %1156 = vst.msk [vmem:[%s172 + $0x8c] sm:$0xf] %vm1120, %v1027
      %1157 = vst.msk [vmem:[%s172 + $0x90] sm:$0xf] %vm1120, %v1028
      %1158 = vst.msk [vmem:[%s172 + $0x94] sm:$0xf] %vm1120, %v1029
      %1159 = vst.msk [vmem:[%s172 + $0x98] sm:$0xf] %vm1120, %v1030
      %1160 = vst.msk [vmem:[%s172 + $0x9c] sm:$0xf] %vm1120, %v1031
      %1161 = vst.msk [vmem:[%s172 + $0xa0] sm:$0xf] %vm1120, %v1032
      %1162 = vst.msk [vmem:[%s172 + $0xa4] sm:$0xf] %vm1120, %v1033
      %1163 = vst.msk [vmem:[%s172 + $0xa8] sm:$0xf] %vm1120, %v1034
      %1164 = vst.msk [vmem:[%s172 + $0xac] sm:$0xf] %vm1120, %v1035
      %1165 = vst.msk [vmem:[%s172 + $0xb0] sm:$0xf] %vm1120, %v1036
      %1166 = vst.msk [vmem:[%s172 + $0xb4] sm:$0xf] %vm1120, %v1037
      %1167 = vst.msk [vmem:[%s172 + $0xb8] sm:$0xf] %vm1120, %v1038
      %1168 = vst.msk [vmem:[%s172 + $0xbc] sm:$0xf] %vm1120, %v1039
      %1169 = vst.msk [vmem:[%s172 + $0xc0] sm:$0xf] %vm1120, %v1040
      %1170 = vst.msk [vmem:[%s172 + $0xc4] sm:$0xf] %vm1120, %v1041
      %1171 = vst.msk [vmem:[%s172 + $0xc8] sm:$0xf] %vm1120, %v1042
      %1172 = vst.msk [vmem:[%s172 + $0xcc] sm:$0xf] %vm1120, %v1043
      %1173 = vst.msk [vmem:[%s172 + $0xd0] sm:$0xf] %vm1120, %v1044
      %1174 = vst.msk [vmem:[%s172 + $0xd4] sm:$0xf] %vm1120, %v1045
      %1175 = vst.msk [vmem:[%s172 + $0xd8] sm:$0xf] %vm1120, %v1046
      %1176 = vst.msk [vmem:[%s172 + $0xdc] sm:$0xf] %vm1120, %v1047
      %1177 = vst.msk [vmem:[%s172 + $0xe0] sm:$0xf] %vm1120, %v1048
      %1178 = vst.msk [vmem:[%s172 + $0xe4] sm:$0xf] %vm1120, %v1049
      %1179 = vst.msk [vmem:[%s172 + $0xe8] sm:$0xf] %vm1120, %v1050
      %1180 = vst.msk [vmem:[%s172 + $0xec] sm:$0xf] %vm1120, %v1051
      %1181 = vst.msk [vmem:[%s172 + $0xf0] sm:$0xf] %vm1120, %v1052
      %1182 = vst.msk [vmem:[%s172 + $0xf4] sm:$0xf] %vm1120, %v1053
      %1183 = vst.msk [vmem:[%s172 + $0xf8] sm:$0xf] %vm1120, %v1054
      %1184 = vst.msk [vmem:[%s172 + $0xfc] sm:$0xf] %vm1120, %v1055
      %s1185 = smul.u32 64, %s14
      %p1186 = scmp.lt.s32.totalorder %s1185, 127
      %s1187 = scalar_select %p1186, %s1185, 127
      %s1188 = smul.addr %s1187, 4
      %s1189 = scalar_lea.vmem %s3, %s1188
      // Predicated region
      $region33: #{bottleneck_forward.3} parent=31 // pred_check
        %p1190 = pneg %p100
      $region34: #{bottleneck_forward.3} parent=31 // pred_check_branch
        %1192 = sbr.rel (%p1190) target = $region36
      $region35: #{bottleneck_forward.3} parent=31 // pred_region
        %s1193 = smul.u32 64, %s14
      $region36: #{bottleneck_forward.3} parent=31 // pred_fallthru
        _
    $region32: #{bottleneck_forward.3} parent=5 // pred_fallthru
      _
    %p1194 = scmp.le.s32.totalorder 2, %s9
    // Predicated region
    $region37: #{bottleneck_forward.3} parent=5 // pred_check
      %p1195 = pneg %p1194
    $region38: #{bottleneck_forward.3} parent=5 // pred_check_branch
      %1197 = sbr.rel (%p1195) target = $region40
    $region39: #{bottleneck_forward.3} parent=5 // pred_region
      %s1198 = ssub.s32 %s9, 2
      // Predicated region
      $region41: #{bottleneck_forward.3} parent=39 // pred_check
        %p1199 = pneg %p106
      $region42: #{bottleneck_forward.3} parent=39 // pred_check_branch
        %1201 = sbr.rel (%p1199) target = $region44
      $region43: #{bottleneck_forward.3} parent=39 // pred_region
        %s1202 = smul.u32 64, %s15
        %p1203 = scmp.lt.s32.totalorder %s1202, 127
        %s1204 = scalar_select %p1203, %s1202, 127
        %s1205 = smul.addr %s1204, 4
        %s1206 = scalar_lea.vmem %s3, %s1205
      $region44: #{bottleneck_forward.3} parent=39 // pred_fallthru
        _
    $region40: #{bottleneck_forward.3} parent=5 // pred_fallthru
      _
  $region6: #{bottleneck_forward.3} parent=0 // loop_footer
    %s13 = sadd.s32 1, %s9
  $region7: #{bottleneck_forward.3} parent=0 // loop_footer_branch
    %8 = sbr.rel target = $region3
  $region8: #{bottleneck_forward.3} parent=0 // loop_exit
    _

// kernel: bottleneck_forward.5
$region0: #{bottleneck_forward.5}
  #allocation0 [shape = 'u32[]', space=smem, size = 0x4, offset = 0x4, fixed_abs, tag = 'smem constant byte address 0x4 - core index']
  #allocation1 [shape = 'u32[144,128]{1,0:T(1,128)}', space=vmem, size = 0x12000, scoped, tag = 'internal scratch']
  %s0 = inlined_call_operand.vmem [shape: bf16[1024,4], index: 0, kind: input, shape index: {}]
  %s1 = inlined_call_operand.vmem [shape: bf16[4,16], index: 1, kind: input, shape index: {}]
  %s2 = inlined_call_operand.vmem [shape: f32[1,16], index: 2, kind: input, shape index: {}]
  %s3 = inlined_call_operand.vmem [shape: bf16[1024,16], index: 3, kind: input, shape index: {}]
  %s4 = inlined_call_operand.hbm [shape: f32[1024,16], index: 4, kind: output, shape index: {}]
  %s5 = sld [smem:[#allocation0]]
  $region49: #{bottleneck_forward.5} parent=0
    _
  %s7 = ssub.s32 1, %s5
  %s8 = scalar_select 0, %s7, %s5
  $region1: #{bottleneck_forward.5} parent=0
    #allocation2 [shape = 'u8[524288]{0}', space=vmem, size = 0x80000, scoped, tag = 'output window, operand 0']
    #allocation3 [shape = 's32[2]{0}', space=sflag, size = 0x8, scoped, tag = 'scoped memory for bottleneck_forward.5']
    %9 = vsyncpa [#allocation3], 0
    %s10 = scalar_lea.sflag [#allocation3], 1
    %11 = vsyncpa %s10, 0
    loop: start=0, step=1, limit=4
    $region2: #{bottleneck_forward.5} parent=1 // loop_pre_header
      _
    $region3: #{bottleneck_forward.5} parent=1 // loop_header
      %s13 = sphi 0, %s17
      %p14 = scmp.ge.s32.totalorder %s13, 4
      %s23 = sphi 0, %s25
      %s26 = sphi 0, %s23
      %s27 = sphi 0, %s26
      %s43 = sphi 0, %s27
      %s47 = sphi 0, %s47
      %s49 = sphi 0, %s47
      %s50 = sphi 0, %s49
      %s64 = sphi 0, %s50
      %s68 = sphi 0, %s68
      %s70 = sphi 0, %s68
      %s71 = sphi 0, %s70
      %s85 = sphi 0, %s71
      %s91 = sphi 0, %s93
      %s94 = sphi 0, %s91
      %s95 = sphi 0, %s94
      %s111 = sphi 0, %s95
      %s117 = sphi 0, %s119
      %s120 = sphi 0, %s117
      %s121 = sphi 0, %s120
      %s137 = sphi 0, %s121
    $region4: #{bottleneck_forward.5} parent=1 // loop_header_branch
      %16 = sbr.rel (%p14) target = $region8
    $region5: #{bottleneck_forward.5} parent=1 // loop_body
      %s18 = ssub.s32 %s13, 1
      %s19 = ssub.s32 %s13, 2
      %s20 = sadd.s32 %s13, 1
      %s21 = ssub.s32 %s13, %s20
      %p22 = scmp.eq.s32.totalorder %s21, 0
      %s24 = sadd.s32 %s23, 1
      %s25 = scalar_select %p22, %s23, %s24
      %p28 = pneg %p22
      %p29 = scmp.eq.s32.totalorder %s13, 1
      %p30 = por %p28, %p29
      %p31 = scmp.ne.s32.totalorder %s23, %s26
      %p32 = scmp.eq.s32.totalorder %s13, 0
      %p33 = por %p31, %p32
      %p34 = scmp.ne.s32.totalorder %s23, %s26
      %p35 = scmp.eq.s32.totalorder %s18, 1
      %p36 = por %p34, %p35
      %p37 = scmp.ne.s32.totalorder %s26, %s27
      %p38 = scmp.eq.s32.totalorder %s18, 0
      %p39 = por %p37, %p38
      %p40 = scmp.ne.s32.totalorder %s26, %s27
      %p41 = scmp.eq.s32.totalorder %s19, 1
      %p42 = por %p40, %p41
      %p44 = scmp.ne.s32.totalorder %s27, %s43
      %p45 = scmp.eq.s32.totalorder %s19, 0
      %p46 = por %p44, %p45
      %s48 = sadd.s32 %s47, 1
      %p51 = scmp.eq.s32.totalorder %s13, 1
      %p52 = scmp.ne.s32.totalorder %s47, %s49
      %p53 = scmp.eq.s32.totalorder %s13, 0
      %p54 = por %p52, %p53
      %p55 = scmp.ne.s32.totalorder %s47, %s49
      %p56 = scmp.eq.s32.totalorder %s18, 1
      %p57 = por %p55, %p56
      %p58 = scmp.ne.s32.totalorder %s49, %s50
      %p59 = scmp.eq.s32.totalorder %s18, 0
      %p60 = por %p58, %p59
      %p61 = scmp.ne.s32.totalorder %s49, %s50
      %p62 = scmp.eq.s32.totalorder %s19, 1
      %p63 = por %p61, %p62
      %p65 = scmp.ne.s32.totalorder %s50, %s64
      %p66 = scmp.eq.s32.totalorder %s19, 0
      %p67 = por %p65, %p66
      %s69 = sadd.s32 %s68, 1
      %p72 = scmp.eq.s32.totalorder %s13, 1
      %p73 = scmp.ne.s32.totalorder %s68, %s70
      %p74 = scmp.eq.s32.totalorder %s13, 0
      %p75 = por %p73, %p74
      %p76 = scmp.ne.s32.totalorder %s68, %s70
      %p77 = scmp.eq.s32.totalorder %s18, 1
      %p78 = por %p76, %p77
      %p79 = scmp.ne.s32.totalorder %s70, %s71
      %p80 = scmp.eq.s32.totalorder %s18, 0
      %p81 = por %p79, %p80
      %p82 = scmp.ne.s32.totalorder %s70, %s71
      %p83 = scmp.eq.s32.totalorder %s19, 1
      %p84 = por %p82, %p83
      %p86 = scmp.ne.s32.totalorder %s71, %s85
      %p87 = scmp.eq.s32.totalorder %s19, 0
      %p88 = por %p86, %p87
      %s89 = ssub.s32 %s13, %s20
      %p90 = scmp.eq.s32.totalorder %s89, 0
      %s92 = sadd.s32 %s91, 1
      %s93 = scalar_select %p90, %s91, %s92
      %p96 = pneg %p90
      %p97 = scmp.eq.s32.totalorder %s13, 1
      %p98 = por %p96, %p97
      %p99 = scmp.ne.s32.totalorder %s91, %s94
      %p100 = scmp.eq.s32.totalorder %s13, 0
      %p101 = por %p99, %p100
      %p102 = scmp.ne.s32.totalorder %s91, %s94
      %p103 = scmp.eq.s32.totalorder %s18, 1
      %p104 = por %p102, %p103
      %p105 = scmp.ne.s32.totalorder %s94, %s95
      %p106 = scmp.eq.s32.totalorder %s18, 0
      %p107 = por %p105, %p106
      %p108 = scmp.ne.s32.totalorder %s94, %s95
      %p109 = scmp.eq.s32.totalorder %s19, 1
      %p110 = por %p108, %p109
      %p112 = scmp.ne.s32.totalorder %s95, %s111
      %p113 = scmp.eq.s32.totalorder %s19, 0
      %p114 = por %p112, %p113
      %s115 = ssub.s32 %s13, %s20
      %p116 = scmp.eq.s32.totalorder %s115, 0
      %s118 = sadd.s32 %s117, 1
      %s119 = scalar_select %p116, %s117, %s118
      %p122 = pneg %p116
      %p123 = scmp.eq.s32.totalorder %s13, 1
      %p124 = por %p122, %p123
      %p125 = scmp.ne.s32.totalorder %s117, %s120
      %p126 = scmp.eq.s32.totalorder %s13, 0
      %p127 = por %p125, %p126
      %p128 = scmp.ne.s32.totalorder %s117, %s120
      %p129 = scmp.eq.s32.totalorder %s18, 1
      %p130 = por %p128, %p129
      %p131 = scmp.ne.s32.totalorder %s120, %s121
      %p132 = scmp.eq.s32.totalorder %s18, 0
      %p133 = por %p131, %p132
      %p134 = scmp.ne.s32.totalorder %s120, %s121
      %p135 = scmp.eq.s32.totalorder %s19, 1
      %p136 = por %p134, %p135
      %p138 = scmp.ne.s32.totalorder %s121, %s137
      %p139 = scmp.eq.s32.totalorder %s19, 0
      %p140 = por %p138, %p139
      %p141 = scmp.le.s32.totalorder 1, %s13
      %p142 = scmp.lt.s32.totalorder %s13, 3
      %p143 = pnand %p141, %p142
      %p144 = pneg %p143
      // Predicated region
      $region9: #{bottleneck_forward.5} parent=5 // pred_check
        _
      $region10: #{bottleneck_forward.5} parent=5 // pred_check_branch
        %146 = sbr.rel (%p143) target = $region12
      $region11: #{bottleneck_forward.5} parent=5 // pred_region
        %s147 = ssub.s32 %s13, 1
        // Predicated region
        $region13: #{bottleneck_forward.5} parent=11 // pred_check
          %p148 = pneg %p60
        $region14: #{bottleneck_forward.5} parent=11 // pred_check_branch
          %150 = sbr.rel (%p148) target = $region16
        $region15: #{bottleneck_forward.5} parent=11 // pred_region
          _
        $region16: #{bottleneck_forward.5} parent=11 // pred_fallthru
          _
        // Predicated region
        $region17: #{bottleneck_forward.5} parent=11 // pred_check
          %p151 = pneg %p81
        $region18: #{bottleneck_forward.5} parent=11 // pred_check_branch
          %153 = sbr.rel (%p151) target = $region20
        $region19: #{bottleneck_forward.5} parent=11 // pred_region
          _
        $region20: #{bottleneck_forward.5} parent=11 // pred_fallthru
          _
      $region12: #{bottleneck_forward.5} parent=5 // pred_fallthru
        _
      %p154 = scmp.lt.s32.totalorder %s13, 2
      // Predicated region
      $region21: #{bottleneck_forward.5} parent=5 // pred_check
        %p155 = pneg %p154
      $region22: #{bottleneck_forward.5} parent=5 // pred_check_branch
        %157 = sbr.rel (%p155) target = $region24
      $region23: #{bottleneck_forward.5} parent=5 // pred_region
        // Predicated region
        $region25: #{bottleneck_forward.5} parent=23 // pred_check
          %p158 = pneg %p33
        $region26: #{bottleneck_forward.5} parent=23 // pred_check_branch
          %160 = sbr.rel (%p158) target = $region28
        $region27: #{bottleneck_forward.5} parent=23 // pred_region
          %s161 = smul.u32 64, %s13
          %p162 = scmp.lt.s32.totalorder %s161, 127
          %s163 = scalar_select %p162, %s161, 127
          %s164 = smul.addr %s163, 4
          %s165 = scalar_lea.vmem %s0, %s164
          %s166 = smul.u32 64, %s13
        $region28: #{bottleneck_forward.5} parent=23 // pred_fallthru
          _
        // Predicated region
        $region29: #{bottleneck_forward.5} parent=23 // pred_check
          %p167 = pneg %p101
        $region30: #{bottleneck_forward.5} parent=23 // pred_check_branch
          %169 = sbr.rel (%p167) target = $region32
        $region31: #{bottleneck_forward.5} parent=23 // pred_region
          %s170 = smul.u32 64, %s13
          %p171 = scmp.lt.s32.totalorder %s170, 127
          %s172 = scalar_select %p171, %s170, 127
          %s173 = smul.addr %s172, 4
          %s174 = scalar_lea.vmem %s3, %s173
          %s175 = smul.u32 64, %s13
        $region32: #{bottleneck_forward.5} parent=23 // pred_fallthru
          _
      $region24: #{bottleneck_forward.5} parent=5 // pred_fallthru
        _
      %p176 = scmp.le.s32.totalorder 1, %s13
      %p177 = scmp.lt.s32.totalorder %s13, 3
      %p178 = pnand %p176, %p177
      %p179 = pneg %p178
      // Predicated region
      $region33: #{bottleneck_forward.5} parent=5 // pred_check
        _
      $region34: #{bottleneck_forward.5} parent=5 // pred_check_branch
        %181 = sbr.rel (%p178) target = $region36
      $region35: #{bottleneck_forward.5} parent=5 // pred_region
        %s182 = ssub.s32 %s13, 1
        %s183 = smul.u32 64, %s18
        %p184 = scmp.lt.s32.totalorder %s183, 127
        %s185 = scalar_select %p184, %s183, 127
        %s186 = smul.addr %s185, 4
        %s187 = scalar_lea.vmem %s0, %s186
        %p188 = pneg %p39
        %p189 = pneg %p36
        %p190 = pneg %p60
        %p191 = pneg %p57
        %p192 = pneg %p81
        %p193 = pneg %p78
        %s194 = smul.u32 64, %s18
        %p195 = scmp.lt.s32.totalorder %s194, 127
        %s196 = scalar_select %p195, %s194, 127
        %s197 = smul.addr %s196, 4
        %s198 = scalar_lea.vmem %s3, %s197
        %p199 = pneg %p107
        %p200 = pneg %p104
        %p201 = pneg %p133
        %p202 = pneg %p130
        %s203 = sand.u32 %s120, 1
        %s204 = scalar_lea.sflag [#allocation3], %s203
        %s205 = sand.u32 %s120, 1
        %s206 = smul.addr %s205, 512
        %s207 = scalar_lea.vmem [#allocation2], %s206
        %s208 = smul.u32 64, %s18
        %p209 = scmp.lt.s32.totalorder %s208, 127
        %s210 = scalar_select %p209, %s208, 127
        %s211 = smul.addr %s210, 4
        %s212 = scalar_lea.vmem %s0, %s211
        %s213 = smul.u32 64, %s18
        %s214 = smul.u32 64, %s18
        %p215 = scmp.lt.s32.totalorder %s214, 127
        %s216 = scalar_select %p215, %s214, 127
        %s217 = smul.addr %s216, 4
        %s218 = scalar_lea.vmem %s3, %s217
        %s219 = smul.u32 64, %s18
        %s220 = smul.u32 64, %s18
        %v222 = vld [vmem:[%s212] sm:$0xf]
        %v223 = vld [vmem:[%s212 + $0x4] sm:$0xf]
        %v224 = vld [vmem:[%s212 + $0x8] sm:$0xf]
        %v225 = vld [vmem:[%s212 + $0xc] sm:$0xf]
        %v226 = vld [vmem:[%s212 + $0x10] sm:$0xf]
        %v227 = vld [vmem:[%s212 + $0x14] sm:$0xf]
        %v228 = vld [vmem:[%s212 + $0x18] sm:$0xf]
        %v229 = vld [vmem:[%s212 + $0x1c] sm:$0xf]
        %v230 = vld [vmem:[%s212 + $0x20] sm:$0xf]
        %v231 = vld [vmem:[%s212 + $0x24] sm:$0xf]
        %v232 = vld [vmem:[%s212 + $0x28] sm:$0xf]
        %v233 = vld [vmem:[%s212 + $0x2c] sm:$0xf]
        %v234 = vld [vmem:[%s212 + $0x30] sm:$0xf]
        %v235 = vld [vmem:[%s212 + $0x34] sm:$0xf]
        %v236 = vld [vmem:[%s212 + $0x38] sm:$0xf]
        %v237 = vld [vmem:[%s212 + $0x3c] sm:$0xf]
        %v238 = vld [vmem:[%s212 + $0x40] sm:$0xf]
        %v239 = vld [vmem:[%s212 + $0x44] sm:$0xf]
        %v240 = vld [vmem:[%s212 + $0x48] sm:$0xf]
        %v241 = vld [vmem:[%s212 + $0x4c] sm:$0xf]
        %v242 = vld [vmem:[%s212 + $0x50] sm:$0xf]
        %v243 = vld [vmem:[%s212 + $0x54] sm:$0xf]
        %v244 = vld [vmem:[%s212 + $0x58] sm:$0xf]
        %v245 = vld [vmem:[%s212 + $0x5c] sm:$0xf]
        %v246 = vld [vmem:[%s212 + $0x60] sm:$0xf]
        %v247 = vld [vmem:[%s212 + $0x64] sm:$0xf]
        %v248 = vld [vmem:[%s212 + $0x68] sm:$0xf]
        %v249 = vld [vmem:[%s212 + $0x6c] sm:$0xf]
        %v250 = vld [vmem:[%s212 + $0x70] sm:$0xf]
        %v251 = vld [vmem:[%s212 + $0x74] sm:$0xf]
        %v252 = vld [vmem:[%s212 + $0x78] sm:$0xf]
        %v253 = vld [vmem:[%s212 + $0x7c] sm:$0xf]
        %v254 = vld [vmem:[%s212 + $0x80] sm:$0xf]
        %v255 = vld [vmem:[%s212 + $0x84] sm:$0xf]
        %v256 = vld [vmem:[%s212 + $0x88] sm:$0xf]
        %v257 = vld [vmem:[%s212 + $0x8c] sm:$0xf]
        %v258 = vld [vmem:[%s212 + $0x90] sm:$0xf]
        %v259 = vld [vmem:[%s212 + $0x94] sm:$0xf]
        %v260 = vld [vmem:[%s212 + $0x98] sm:$0xf]
        %v261 = vld [vmem:[%s212 + $0x9c] sm:$0xf]
        %v262 = vld [vmem:[%s212 + $0xa0] sm:$0xf]
        %v263 = vld [vmem:[%s212 + $0xa4] sm:$0xf]
        %v264 = vld [vmem:[%s212 + $0xa8] sm:$0xf]
        %v265 = vld [vmem:[%s212 + $0xac] sm:$0xf]
        %v266 = vld [vmem:[%s212 + $0xb0] sm:$0xf]
        %v267 = vld [vmem:[%s212 + $0xb4] sm:$0xf]
        %v268 = vld [vmem:[%s212 + $0xb8] sm:$0xf]
        %v269 = vld [vmem:[%s212 + $0xbc] sm:$0xf]
        %v270 = vld [vmem:[%s212 + $0xc0] sm:$0xf]
        %v271 = vld [vmem:[%s212 + $0xc4] sm:$0xf]
        %v272 = vld [vmem:[%s212 + $0xc8] sm:$0xf]
        %v273 = vld [vmem:[%s212 + $0xcc] sm:$0xf]
        %v274 = vld [vmem:[%s212 + $0xd0] sm:$0xf]
        %v275 = vld [vmem:[%s212 + $0xd4] sm:$0xf]
        %v276 = vld [vmem:[%s212 + $0xd8] sm:$0xf]
        %v277 = vld [vmem:[%s212 + $0xdc] sm:$0xf]
        %v278 = vld [vmem:[%s212 + $0xe0] sm:$0xf]
        %v279 = vld [vmem:[%s212 + $0xe4] sm:$0xf]
        %v280 = vld [vmem:[%s212 + $0xe8] sm:$0xf]
        %v281 = vld [vmem:[%s212 + $0xec] sm:$0xf]
        %v282 = vld [vmem:[%s212 + $0xf0] sm:$0xf]
        %v283 = vld [vmem:[%s212 + $0xf4] sm:$0xf]
        %v284 = vld [vmem:[%s212 + $0xf8] sm:$0xf]
        %v285 = vld [vmem:[%s212 + $0xfc] sm:$0xf]
        %v286 = vld [vmem:[%s1] sm:$0x3]
        %v287 = vld [vmem:[%s2] sm:$0x1]
        %v289 = vlaneseq
        %v290 = vshrl.u32 %v289, 7
        %v291 = vsub.s32 0, %v290
        %v292 = vrot.slane %v287, %v291
        %v358 = vunpack.c.l.b16 %v222
        %v359 = vunpack.c.l.b16 %v223
        %v360 = vunpack.c.l.b16 %v224
        %v361 = vunpack.c.l.b16 %v225
        %v362 = vunpack.c.l.b16 %v226
        %v363 = vunpack.c.l.b16 %v227
        %v364 = vunpack.c.l.b16 %v228
        %v365 = vunpack.c.l.b16 %v229
        %v366 = vunpack.c.l.b16 %v230
        %v367 = vunpack.c.l.b16 %v231
        %v368 = vunpack.c.l.b16 %v232
        %v369 = vunpack.c.l.b16 %v233
        %v370 = vunpack.c.l.b16 %v234
        %v371 = vunpack.c.l.b16 %v235
        %v372 = vunpack.c.l.b16 %v236
        %v373 = vunpack.c.l.b16 %v237
        %v374 = vunpack.c.l.b16 %v238
        %v375 = vunpack.c.l.b16 %v239
        %v376 = vunpack.c.l.b16 %v240
        %v377 = vunpack.c.l.b16 %v241
        %v378 = vunpack.c.l.b16 %v242
        %v379 = vunpack.c.l.b16 %v243
        %v380 = vunpack.c.l.b16 %v244
        %v381 = vunpack.c.l.b16 %v245
        %v382 = vunpack.c.l.b16 %v246
        %v383 = vunpack.c.l.b16 %v247
        %v384 = vunpack.c.l.b16 %v248
        %v385 = vunpack.c.l.b16 %v249
        %v386 = vunpack.c.l.b16 %v250
        %v387 = vunpack.c.l.b16 %v251
        %v388 = vunpack.c.l.b16 %v252
        %v389 = vunpack.c.l.b16 %v253
        %v390 = vunpack.c.l.b16 %v254
        %v391 = vunpack.c.l.b16 %v255
        %v392 = vunpack.c.l.b16 %v256
        %v393 = vunpack.c.l.b16 %v257
        %v394 = vunpack.c.l.b16 %v258
        %v395 = vunpack.c.l.b16 %v259
        %v396 = vunpack.c.l.b16 %v260
        %v397 = vunpack.c.l.b16 %v261
        %v398 = vunpack.c.l.b16 %v262
        %v399 = vunpack.c.l.b16 %v263
        %v400 = vunpack.c.l.b16 %v264
        %v401 = vunpack.c.l.b16 %v265
        %v402 = vunpack.c.l.b16 %v266
        %v403 = vunpack.c.l.b16 %v267
        %v404 = vunpack.c.l.b16 %v268
        %v405 = vunpack.c.l.b16 %v269
        %v406 = vunpack.c.l.b16 %v270
        %v407 = vunpack.c.l.b16 %v271
        %v408 = vunpack.c.l.b16 %v272
        %v409 = vunpack.c.l.b16 %v273
        %v410 = vunpack.c.l.b16 %v274
        %v411 = vunpack.c.l.b16 %v275
        %v412 = vunpack.c.l.b16 %v276
        %v413 = vunpack.c.l.b16 %v277
        %v414 = vunpack.c.l.b16 %v278
        %v415 = vunpack.c.l.b16 %v279
        %v416 = vunpack.c.l.b16 %v280
        %v417 = vunpack.c.l.b16 %v281
        %v418 = vunpack.c.l.b16 %v282
        %v419 = vunpack.c.l.b16 %v283
        %v420 = vunpack.c.l.b16 %v284
        %v421 = vunpack.c.l.b16 %v285
        %v422 = vpack.c.b16 %v359, %v358
        %v423 = vpack.c.b16 %v361, %v360
        %v424 = vpack.c.b16 %v363, %v362
        %v425 = vpack.c.b16 %v365, %v364
        %v426 = vpack.c.b16 %v367, %v366
        %v427 = vpack.c.b16 %v369, %v368
        %v428 = vpack.c.b16 %v371, %v370
        %v429 = vpack.c.b16 %v373, %v372
        %v430 = vpack.c.b16 %v375, %v374
        %v431 = vpack.c.b16 %v377, %v376
        %v432 = vpack.c.b16 %v379, %v378
        %v433 = vpack.c.b16 %v381, %v380
        %v434 = vpack.c.b16 %v383, %v382
        %v435 = vpack.c.b16 %v385, %v384
        %v436 = vpack.c.b16 %v387, %v386
        %v437 = vpack.c.b16 %v389, %v388
        %v438 = vpack.c.b16 %v391, %v390
        %v439 = vpack.c.b16 %v393, %v392
        %v440 = vpack.c.b16 %v395, %v394
        %v441 = vpack.c.b16 %v397, %v396
        %v442 = vpack.c.b16 %v399, %v398
        %v443 = vpack.c.b16 %v401, %v400
        %v444 = vpack.c.b16 %v403, %v402
        %v445 = vpack.c.b16 %v405, %v404
        %v446 = vpack.c.b16 %v407, %v406
        %v447 = vpack.c.b16 %v409, %v408
        %v448 = vpack.c.b16 %v411, %v410
        %v449 = vpack.c.b16 %v413, %v412
        %v450 = vpack.c.b16 %v415, %v414
        %v451 = vpack.c.b16 %v417, %v416
        %v452 = vpack.c.b16 %v419, %v418
        %v453 = vpack.c.b16 %v421, %v420
        %vm454 = vcmask 31744
        %v456 = vsel %vm454, %v422, 0
        %v459 = vsel %vm454, %v423, 0
        %v462 = vsel %vm454, %v424, 0
        %v465 = vsel %vm454, %v425, 0
        %v468 = vsel %vm454, %v426, 0
        %v471 = vsel %vm454, %v427, 0
        %v474 = vsel %vm454, %v428, 0
        %v477 = vsel %vm454, %v429, 0
        %v480 = vsel %vm454, %v430, 0
        %v483 = vsel %vm454, %v431, 0
        %v486 = vsel %vm454, %v432, 0
        %v489 = vsel %vm454, %v433, 0
        %v492 = vsel %vm454, %v434, 0
        %v495 = vsel %vm454, %v435, 0
        %v498 = vsel %vm454, %v436, 0
        %v501 = vsel %vm454, %v437, 0
        %v504 = vsel %vm454, %v438, 0
        %v507 = vsel %vm454, %v439, 0
        %v510 = vsel %vm454, %v440, 0
        %v513 = vsel %vm454, %v441, 0
        %v516 = vsel %vm454, %v442, 0
        %v519 = vsel %vm454, %v443, 0
        %v522 = vsel %vm454, %v444, 0
        %v525 = vsel %vm454, %v445, 0
        %v528 = vsel %vm454, %v446, 0
        %v531 = vsel %vm454, %v447, 0
        %v534 = vsel %vm454, %v448, 0
        %v537 = vsel %vm454, %v449, 0
        %v540 = vsel %vm454, %v450, 0
        %v543 = vsel %vm454, %v451, 0
        %v546 = vsel %vm454, %v452, 0
        %v549 = vsel %vm454, %v453, 0
        %vm551 = vcmask 1041408
        %v553 = vsel %vm551, %v286, 0
        %555 = vmatprep.subr.bf16.mxu0 0
        %556 = vmatpush1.bf16.msra.mxu0 %v553
        %557 = vmatprep.subr.bf16.mxu0 0
        %558 = vmatpush1.bf16.msra.mxu0 0
        %559 = vmatprep.subr.bf16.mxu0 0
        %560 = vmatpush1.bf16.msra.mxu0 0
        %561 = vmatprep.subr.bf16.mxu0 0
        %562 = vmatpush1.bf16.msra.mxu0 0
        %563 = vmatprep.subr.bf16.mxu0 0
        %564 = vmatpush1.bf16.msra.mxu0 0
        %565 = vmatprep.subr.bf16.mxu0 0
        %566 = vmatpush1.bf16.msra.mxu0 0
        %567 = vmatprep.subr.bf16.mxu0 0
        %568 = vmatpush1.bf16.msra.mxu0 0
        %569 = vmatprep.subr.bf16.mxu0 0
        %570 = vmatpush1.bf16.msra.mxu0 0
        %571 = vmatprep.subr.bf16.mxu0 0
        %572 = vmatpush1.bf16.msra.mxu0 0
        %573 = vmatprep.subr.bf16.mxu0 0
        %574 = vmatpush1.bf16.msra.mxu0 0
        %575 = vmatprep.subr.bf16.mxu0 0
        %576 = vmatpush1.bf16.msra.mxu0 0
        %577 = vmatprep.subr.bf16.mxu0 0
        %578 = vmatpush1.bf16.msra.mxu0 0
        %579 = vmatprep.subr.bf16.mxu0 0
        %580 = vmatpush1.bf16.msra.mxu0 0
        %581 = vmatprep.subr.bf16.mxu0 0
        %582 = vmatpush1.bf16.msra.mxu0 0
        %583 = vmatprep.subr.bf16.mxu0 0
        %584 = vmatpush1.bf16.msra.mxu0 0
        %585 = vmatprep.subr.bf16.mxu0 0
        %586 = vmatpush1.bf16.msra.mxu0 0
        %587 = vmatprep.mubr.bf16.mxu0 0
        %588 = vmatmul.mubr.bf16.gmra.mrb[0].mxu0 %v456
        %v589 = vpop.f32.mrb[0].mxu0
        %v590 = vadd.f32 %v292, %v589
        %v591 = vpop.f32.mrb[0].mxu0
        %v592 = vpop.f32.mrb[0].mxu0
        %v593 = vadd.f32 %v292, %v592
        %v594 = vpop.f32.mrb[0].mxu0
        %595 = vmatprep.mubr.bf16.mxu0 0
        %596 = vmatmul.mubr.bf16.gmra.mrb[0].mxu0 %v459
        %v597 = vpop.f32.mrb[0].mxu0
        %v598 = vadd.f32 %v292, %v597
        %v599 = vpop.f32.mrb[0].mxu0
        %v600 = vpop.f32.mrb[0].mxu0
        %v601 = vadd.f32 %v292, %v600
        %v602 = vpop.f32.mrb[0].mxu0
        %603 = vmatprep.mubr.bf16.mxu0 0
        %604 = vmatmul.mubr.bf16.gmra.mrb[0].mxu0 %v462
        %v605 = vpop.f32.mrb[0].mxu0
        %v606 = vadd.f32 %v292, %v605
        %v607 = vpop.f32.mrb[0].mxu0
        %v608 = vpop.f32.mrb[0].mxu0
        %v609 = vadd.f32 %v292, %v608
        %v610 = vpop.f32.mrb[0].mxu0
        %611 = vmatprep.mubr.bf16.mxu0 0
        %612 = vmatmul.mubr.bf16.gmra.mrb[0].mxu0 %v465
        %v613 = vpop.f32.mrb[0].mxu0
        %v614 = vadd.f32 %v292, %v613
        %v615 = vpop.f32.mrb[0].mxu0
        %v616 = vpop.f32.mrb[0].mxu0
        %v617 = vadd.f32 %v292, %v616
        %v618 = vpop.f32.mrb[0].mxu0
        %619 = vmatprep.mubr.bf16.mxu0 0
        %620 = vmatmul.mubr.bf16.gmra.mrb[0].mxu0 %v468
        %v621 = vpop.f32.mrb[0].mxu0
        %v622 = vadd.f32 %v292, %v621
        %v623 = vpop.f32.mrb[0].mxu0
        %v624 = vpop.f32.mrb[0].mxu0
        %v625 = vadd.f32 %v292, %v624
        %v626 = vpop.f32.mrb[0].mxu0
        %627 = vmatprep.mubr.bf16.mxu0 0
        %628 = vmatmul.mubr.bf16.gmra.mrb[0].mxu0 %v471
        %v629 = vpop.f32.mrb[0].mxu0
        %v630 = vadd.f32 %v292, %v629
        %v631 = vpop.f32.mrb[0].mxu0
        %v632 = vpop.f32.mrb[0].mxu0
        %v633 = vadd.f32 %v292, %v632
        %v634 = vpop.f32.mrb[0].mxu0
        %635 = vmatprep.mubr.bf16.mxu0 0
        %636 = vmatmul.mubr.bf16.gmra.mrb[0].mxu0 %v474
        %v637 = vpop.f32.mrb[0].mxu0
        %v638 = vadd.f32 %v292, %v637
        %v639 = vpop.f32.mrb[0].mxu0
        %v640 = vpop.f32.mrb[0].mxu0
        %v641 = vadd.f32 %v292, %v640
        %v642 = vpop.f32.mrb[0].mxu0
        %643 = vmatprep.mubr.bf16.mxu0 0
        %644 = vmatmul.mubr.bf16.gmra.mrb[0].mxu0 %v477
        %v645 = vpop.f32.mrb[0].mxu0
        %v646 = vadd.f32 %v292, %v645
        %v647 = vpop.f32.mrb[0].mxu0
        %v648 = vpop.f32.mrb[0].mxu0
        %v649 = vadd.f32 %v292, %v648
        %v650 = vpop.f32.mrb[0].mxu0
        %651 = vmatprep.mubr.bf16.mxu0 0
        %652 = vmatmul.mubr.bf16.gmra.mrb[0].mxu0 %v480
        %v653 = vpop.f32.mrb[0].mxu0
        %v654 = vadd.f32 %v292, %v653
        %v655 = vpop.f32.mrb[0].mxu0
        %v656 = vpop.f32.mrb[0].mxu0
        %v657 = vadd.f32 %v292, %v656
        %v658 = vpop.f32.mrb[0].mxu0
        %659 = vmatprep.mubr.bf16.mxu0 0
        %660 = vmatmul.mubr.bf16.gmra.mrb[0].mxu0 %v483
        %v661 = vpop.f32.mrb[0].mxu0
        %v662 = vadd.f32 %v292, %v661
        %v663 = vpop.f32.mrb[0].mxu0
        %v664 = vpop.f32.mrb[0].mxu0
        %v665 = vadd.f32 %v292, %v664
        %v666 = vpop.f32.mrb[0].mxu0
        %667 = vmatprep.mubr.bf16.mxu0 0
        %668 = vmatmul.mubr.bf16.gmra.mrb[0].mxu0 %v486
        %v669 = vpop.f32.mrb[0].mxu0
        %v670 = vadd.f32 %v292, %v669
        %v671 = vpop.f32.mrb[0].mxu0
        %v672 = vpop.f32.mrb[0].mxu0
        %v673 = vadd.f32 %v292, %v672
        %v674 = vpop.f32.mrb[0].mxu0
        %675 = vmatprep.mubr.bf16.mxu0 0
        %676 = vmatmul.mubr.bf16.gmra.mrb[0].mxu0 %v489
        %v677 = vpop.f32.mrb[0].mxu0
        %v678 = vadd.f32 %v292, %v677
        %v679 = vpop.f32.mrb[0].mxu0
        %v680 = vpop.f32.mrb[0].mxu0
        %v681 = vadd.f32 %v292, %v680
        %v682 = vpop.f32.mrb[0].mxu0
        %683 = vmatprep.mubr.bf16.mxu0 0
        %684 = vmatmul.mubr.bf16.gmra.mrb[0].mxu0 %v492
        %v685 = vpop.f32.mrb[0].mxu0
        %v686 = vadd.f32 %v292, %v685
        %v687 = vpop.f32.mrb[0].mxu0
        %v688 = vpop.f32.mrb[0].mxu0
        %v689 = vadd.f32 %v292, %v688
        %v690 = vpop.f32.mrb[0].mxu0
        %691 = vmatprep.mubr.bf16.mxu0 0
        %692 = vmatmul.mubr.bf16.gmra.mrb[0].mxu0 %v495
        %v693 = vpop.f32.mrb[0].mxu0
        %v694 = vadd.f32 %v292, %v693
        %v695 = vpop.f32.mrb[0].mxu0
        %v696 = vpop.f32.mrb[0].mxu0
        %v697 = vadd.f32 %v292, %v696
        %v698 = vpop.f32.mrb[0].mxu0
        %699 = vmatprep.mubr.bf16.mxu0 0
        %700 = vmatmul.mubr.bf16.gmra.mrb[0].mxu0 %v498
        %v701 = vpop.f32.mrb[0].mxu0
        %v702 = vadd.f32 %v292, %v701
        %v703 = vpop.f32.mrb[0].mxu0
        %v704 = vpop.f32.mrb[0].mxu0
        %v705 = vadd.f32 %v292, %v704
        %v706 = vpop.f32.mrb[0].mxu0
        %707 = vmatprep.mubr.bf16.mxu0 0
        %708 = vmatmul.mubr.bf16.gmra.mrb[0].mxu0 %v501
        %v709 = vpop.f32.mrb[0].mxu0
        %v710 = vadd.f32 %v292, %v709
        %v711 = vpop.f32.mrb[0].mxu0
        %v712 = vpop.f32.mrb[0].mxu0
        %v713 = vadd.f32 %v292, %v712
        %v714 = vpop.f32.mrb[0].mxu0
        %715 = vmatprep.mubr.bf16.mxu0 0
        %716 = vmatmul.mubr.bf16.gmra.mrb[0].mxu0 %v504
        %v717 = vpop.f32.mrb[0].mxu0
        %v718 = vadd.f32 %v292, %v717
        %v719 = vpop.f32.mrb[0].mxu0
        %v720 = vpop.f32.mrb[0].mxu0
        %v721 = vadd.f32 %v292, %v720
        %v722 = vpop.f32.mrb[0].mxu0
        %723 = vmatprep.mubr.bf16.mxu0 0
        %724 = vmatmul.mubr.bf16.gmra.mrb[0].mxu0 %v507
        %v725 = vpop.f32.mrb[0].mxu0
        %v726 = vadd.f32 %v292, %v725
        %v727 = vpop.f32.mrb[0].mxu0
        %v728 = vpop.f32.mrb[0].mxu0
        %v729 = vadd.f32 %v292, %v728
        %v730 = vpop.f32.mrb[0].mxu0
        %731 = vmatprep.mubr.bf16.mxu0 0
        %732 = vmatmul.mubr.bf16.gmra.mrb[0].mxu0 %v510
        %v733 = vpop.f32.mrb[0].mxu0
        %v734 = vadd.f32 %v292, %v733
        %v735 = vpop.f32.mrb[0].mxu0
        %v736 = vpop.f32.mrb[0].mxu0
        %v737 = vadd.f32 %v292, %v736
        %v738 = vpop.f32.mrb[0].mxu0
        %739 = vmatprep.mubr.bf16.mxu0 0
        %740 = vmatmul.mubr.bf16.gmra.mrb[0].mxu0 %v513
        %v741 = vpop.f32.mrb[0].mxu0
        %v742 = vadd.f32 %v292, %v741
        %v743 = vpop.f32.mrb[0].mxu0
        %v744 = vpop.f32.mrb[0].mxu0
        %v745 = vadd.f32 %v292, %v744
        %v746 = vpop.f32.mrb[0].mxu0
        %747 = vmatprep.mubr.bf16.mxu0 0
        %748 = vmatmul.mubr.bf16.gmra.mrb[0].mxu0 %v516
        %v749 = vpop.f32.mrb[0].mxu0
        %v750 = vadd.f32 %v292, %v749
        %v751 = vpop.f32.mrb[0].mxu0
        %v752 = vpop.f32.mrb[0].mxu0
        %v753 = vadd.f32 %v292, %v752
        %v754 = vpop.f32.mrb[0].mxu0
        %755 = vmatprep.mubr.bf16.mxu0 0
        %756 = vmatmul.mubr.bf16.gmra.mrb[0].mxu0 %v519
        %v757 = vpop.f32.mrb[0].mxu0
        %v758 = vadd.f32 %v292, %v757
        %v759 = vpop.f32.mrb[0].mxu0
        %v760 = vpop.f32.mrb[0].mxu0
        %v761 = vadd.f32 %v292, %v760
        %v762 = vpop.f32.mrb[0].mxu0
        %763 = vmatprep.mubr.bf16.mxu0 0
        %764 = vmatmul.mubr.bf16.gmra.mrb[0].mxu0 %v522
        %v765 = vpop.f32.mrb[0].mxu0
        %v766 = vadd.f32 %v292, %v765
        %v767 = vpop.f32.mrb[0].mxu0
        %v768 = vpop.f32.mrb[0].mxu0
        %v769 = vadd.f32 %v292, %v768
        %v770 = vpop.f32.mrb[0].mxu0
        %771 = vmatprep.mubr.bf16.mxu0 0
        %772 = vmatmul.mubr.bf16.gmra.mrb[0].mxu0 %v525
        %v773 = vpop.f32.mrb[0].mxu0
        %v774 = vadd.f32 %v292, %v773
        %v775 = vpop.f32.mrb[0].mxu0
        %v776 = vpop.f32.mrb[0].mxu0
        %v777 = vadd.f32 %v292, %v776
        %v778 = vpop.f32.mrb[0].mxu0
        %779 = vmatprep.mubr.bf16.mxu0 0
        %780 = vmatmul.mubr.bf16.gmra.mrb[0].mxu0 %v528
        %v781 = vpop.f32.mrb[0].mxu0
        %v782 = vadd.f32 %v292, %v781
        %v783 = vpop.f32.mrb[0].mxu0
        %v784 = vpop.f32.mrb[0].mxu0
        %v785 = vadd.f32 %v292, %v784
        %v786 = vpop.f32.mrb[0].mxu0
        %787 = vmatprep.mubr.bf16.mxu0 0
        %788 = vmatmul.mubr.bf16.gmra.mrb[0].mxu0 %v531
        %v789 = vpop.f32.mrb[0].mxu0
        %v790 = vadd.f32 %v292, %v789
        %v791 = vpop.f32.mrb[0].mxu0
        %v792 = vpop.f32.mrb[0].mxu0
        %v793 = vadd.f32 %v292, %v792
        %v794 = vpop.f32.mrb[0].mxu0
        %795 = vmatprep.mubr.bf16.mxu0 0
        %796 = vmatmul.mubr.bf16.gmra.mrb[0].mxu0 %v534
        %v797 = vpop.f32.mrb[0].mxu0
        %v798 = vadd.f32 %v292, %v797
        %v799 = vpop.f32.mrb[0].mxu0
        %v800 = vpop.f32.mrb[0].mxu0
        %v801 = vadd.f32 %v292, %v800
        %v802 = vpop.f32.mrb[0].mxu0
        %803 = vmatprep.mubr.bf16.mxu0 0
        %804 = vmatmul.mubr.bf16.gmra.mrb[0].mxu0 %v537
        %v805 = vpop.f32.mrb[0].mxu0
        %v806 = vadd.f32 %v292, %v805
        %v807 = vpop.f32.mrb[0].mxu0
        %v808 = vpop.f32.mrb[0].mxu0
        %v809 = vadd.f32 %v292, %v808
        %v810 = vpop.f32.mrb[0].mxu0
        %811 = vmatprep.mubr.bf16.mxu0 0
        %812 = vmatmul.mubr.bf16.gmra.mrb[0].mxu0 %v540
        %v813 = vpop.f32.mrb[0].mxu0
        %v814 = vadd.f32 %v292, %v813
        %v815 = vpop.f32.mrb[0].mxu0
        %v816 = vpop.f32.mrb[0].mxu0
        %v817 = vadd.f32 %v292, %v816
        %v818 = vpop.f32.mrb[0].mxu0
        %819 = vmatprep.mubr.bf16.mxu0 0
        %820 = vmatmul.mubr.bf16.gmra.mrb[0].mxu0 %v543
        %v821 = vpop.f32.mrb[0].mxu0
        %v822 = vadd.f32 %v292, %v821
        %v823 = vpop.f32.mrb[0].mxu0
        %v824 = vpop.f32.mrb[0].mxu0
        %v825 = vadd.f32 %v292, %v824
        %v826 = vpop.f32.mrb[0].mxu0
        %827 = vmatprep.mubr.bf16.mxu0 0
        %828 = vmatmul.mubr.bf16.gmra.mrb[0].mxu0 %v546
        %v829 = vpop.f32.mrb[0].mxu0
        %v830 = vadd.f32 %v292, %v829
        %v831 = vpop.f32.mrb[0].mxu0
        %v832 = vpop.f32.mrb[0].mxu0
        %v833 = vadd.f32 %v292, %v832
        %v834 = vpop.f32.mrb[0].mxu0
        %835 = vmatprep.mubr.bf16.mxu0 0
        %836 = vmatmul.mubr.bf16.gmra.mrb[0].mxu0 %v549
        %v837 = vpop.f32.mrb[0].mxu0
        %v838 = vadd.f32 %v292, %v837
        %v839 = vpop.f32.mrb[0].mxu0
        %v840 = vpop.f32.mrb[0].mxu0
        %v841 = vadd.f32 %v292, %v840
        %v842 = vpop.f32.mrb[0].mxu0
        %843 = vdwg.mxu0
        %v844 = vld [vmem:[%s218] sm:$0xf]
        %v845 = vld [vmem:[%s218 + $0x4] sm:$0xf]
        %v846 = vld [vmem:[%s218 + $0x8] sm:$0xf]
        %v847 = vld [vmem:[%s218 + $0xc] sm:$0xf]
        %v848 = vld [vmem:[%s218 + $0x10] sm:$0xf]
        %v849 = vld [vmem:[%s218 + $0x14] sm:$0xf]
        %v850 = vld [vmem:[%s218 + $0x18] sm:$0xf]
        %v851 = vld [vmem:[%s218 + $0x1c] sm:$0xf]
        %v852 = vld [vmem:[%s218 + $0x20] sm:$0xf]
        %v853 = vld [vmem:[%s218 + $0x24] sm:$0xf]
        %v854 = vld [vmem:[%s218 + $0x28] sm:$0xf]
        %v855 = vld [vmem:[%s218 + $0x2c] sm:$0xf]
        %v856 = vld [vmem:[%s218 + $0x30] sm:$0xf]
        %v857 = vld [vmem:[%s218 + $0x34] sm:$0xf]
        %v858 = vld [vmem:[%s218 + $0x38] sm:$0xf]
        %v859 = vld [vmem:[%s218 + $0x3c] sm:$0xf]
        %v860 = vld [vmem:[%s218 + $0x40] sm:$0xf]
        %v861 = vld [vmem:[%s218 + $0x44] sm:$0xf]
        %v862 = vld [vmem:[%s218 + $0x48] sm:$0xf]
        %v863 = vld [vmem:[%s218 + $0x4c] sm:$0xf]
        %v864 = vld [vmem:[%s218 + $0x50] sm:$0xf]
        %v865 = vld [vmem:[%s218 + $0x54] sm:$0xf]
        %v866 = vld [vmem:[%s218 + $0x58] sm:$0xf]
        %v867 = vld [vmem:[%s218 + $0x5c] sm:$0xf]
        %v868 = vld [vmem:[%s218 + $0x60] sm:$0xf]
        %v869 = vld [vmem:[%s218 + $0x64] sm:$0xf]
        %v870 = vld [vmem:[%s218 + $0x68] sm:$0xf]
        %v871 = vld [vmem:[%s218 + $0x6c] sm:$0xf]
        %v872 = vld [vmem:[%s218 + $0x70] sm:$0xf]
        %v873 = vld [vmem:[%s218 + $0x74] sm:$0xf]
        %v874 = vld [vmem:[%s218 + $0x78] sm:$0xf]
        %v875 = vld [vmem:[%s218 + $0x7c] sm:$0xf]
        %v876 = vld [vmem:[%s218 + $0x80] sm:$0xf]
        %v877 = vld [vmem:[%s218 + $0x84] sm:$0xf]
        %v878 = vld [vmem:[%s218 + $0x88] sm:$0xf]
        %v879 = vld [vmem:[%s218 + $0x8c] sm:$0xf]
        %v880 = vld [vmem:[%s218 + $0x90] sm:$0xf]
        %v881 = vld [vmem:[%s218 + $0x94] sm:$0xf]
        %v882 = vld [vmem:[%s218 + $0x98] sm:$0xf]
        %v883 = vld [vmem:[%s218 + $0x9c] sm:$0xf]
        %v884 = vld [vmem:[%s218 + $0xa0] sm:$0xf]
        %v885 = vld [vmem:[%s218 + $0xa4] sm:$0xf]
        %v886 = vld [vmem:[%s218 + $0xa8] sm:$0xf]
        %v887 = vld [vmem:[%s218 + $0xac] sm:$0xf]
        %v888 = vld [vmem:[%s218 + $0xb0] sm:$0xf]
        %v889 = vld [vmem:[%s218 + $0xb4] sm:$0xf]
        %v890 = vld [vmem:[%s218 + $0xb8] sm:$0xf]
        %v891 = vld [vmem:[%s218 + $0xbc] sm:$0xf]
        %v892 = vld [vmem:[%s218 + $0xc0] sm:$0xf]
        %v893 = vld [vmem:[%s218 + $0xc4] sm:$0xf]
        %v894 = vld [vmem:[%s218 + $0xc8] sm:$0xf]
        %v895 = vld [vmem:[%s218 + $0xcc] sm:$0xf]
        %v896 = vld [vmem:[%s218 + $0xd0] sm:$0xf]
        %v897 = vld [vmem:[%s218 + $0xd4] sm:$0xf]
        %v898 = vld [vmem:[%s218 + $0xd8] sm:$0xf]
        %v899 = vld [vmem:[%s218 + $0xdc] sm:$0xf]
        %v900 = vld [vmem:[%s218 + $0xe0] sm:$0xf]
        %v901 = vld [vmem:[%s218 + $0xe4] sm:$0xf]
        %v902 = vld [vmem:[%s218 + $0xe8] sm:$0xf]
        %v903 = vld [vmem:[%s218 + $0xec] sm:$0xf]
        %v904 = vld [vmem:[%s218 + $0xf0] sm:$0xf]
        %v905 = vld [vmem:[%s218 + $0xf4] sm:$0xf]
        %v906 = vld [vmem:[%s218 + $0xf8] sm:$0xf]
        %v907 = vld [vmem:[%s218 + $0xfc] sm:$0xf]
        %v908 = vunpack.c.l.bf16 %v844
        %v909 = vunpack.c.l.bf16 %v845
        %v910 = vunpack.c.l.bf16 %v846
        %v911 = vunpack.c.l.bf16 %v847
        %v912 = vunpack.c.l.bf16 %v848
        %v913 = vunpack.c.l.bf16 %v849
        %v914 = vunpack.c.l.bf16 %v850
        %v915 = vunpack.c.l.bf16 %v851
        %v916 = vunpack.c.l.bf16 %v852
        %v917 = vunpack.c.l.bf16 %v853
        %v918 = vunpack.c.l.bf16 %v854
        %v919 = vunpack.c.l.bf16 %v855
        %v920 = vunpack.c.l.bf16 %v856
        %v921 = vunpack.c.l.bf16 %v857
        %v922 = vunpack.c.l.bf16 %v858
        %v923 = vunpack.c.l.bf16 %v859
        %v924 = vunpack.c.l.bf16 %v860
        %v925 = vunpack.c.l.bf16 %v861
        %v926 = vunpack.c.l.bf16 %v862
        %v927 = vunpack.c.l.bf16 %v863
        %v928 = vunpack.c.l.bf16 %v864
        %v929 = vunpack.c.l.bf16 %v865
        %v930 = vunpack.c.l.bf16 %v866
        %v931 = vunpack.c.l.bf16 %v867
        %v932 = vunpack.c.l.bf16 %v868
        %v933 = vunpack.c.l.bf16 %v869
        %v934 = vunpack.c.l.bf16 %v870
        %v935 = vunpack.c.l.bf16 %v871
        %v936 = vunpack.c.l.bf16 %v872
        %v937 = vunpack.c.l.bf16 %v873
        %v938 = vunpack.c.l.bf16 %v874
        %v939 = vunpack.c.l.bf16 %v875
        %v940 = vunpack.c.l.bf16 %v876
        %v941 = vunpack.c.l.bf16 %v877
        %v942 = vunpack.c.l.bf16 %v878
        %v943 = vunpack.c.l.bf16 %v879
        %v944 = vunpack.c.l.bf16 %v880
        %v945 = vunpack.c.l.bf16 %v881
        %v946 = vunpack.c.l.bf16 %v882
        %v947 = vunpack.c.l.bf16 %v883
        %v948 = vunpack.c.l.bf16 %v884
        %v949 = vunpack.c.l.bf16 %v885
        %v950 = vunpack.c.l.bf16 %v886
        %v951 = vunpack.c.l.bf16 %v887
        %v952 = vunpack.c.l.bf16 %v888
        %v953 = vunpack.c.l.bf16 %v889
        %v954 = vunpack.c.l.bf16 %v890
        %v955 = vunpack.c.l.bf16 %v891
        %v956 = vunpack.c.l.bf16 %v892
        %v957 = vunpack.c.l.bf16 %v893
        %v958 = vunpack.c.l.bf16 %v894
        %v959 = vunpack.c.l.bf16 %v895
        %v960 = vunpack.c.l.bf16 %v896
        %v961 = vunpack.c.l.bf16 %v897
        %v962 = vunpack.c.l.bf16 %v898
        %v963 = vunpack.c.l.bf16 %v899
        %v964 = vunpack.c.l.bf16 %v900
        %v965 = vunpack.c.l.bf16 %v901
        %v966 = vunpack.c.l.bf16 %v902
        %v967 = vunpack.c.l.bf16 %v903
        %v968 = vunpack.c.l.bf16 %v904
        %v969 = vunpack.c.l.bf16 %v905
        %v970 = vunpack.c.l.bf16 %v906
        %v971 = vunpack.c.l.bf16 %v907
        %v972 = vadd.f32 %v590, %v908
        %v973 = vadd.f32 %v593, %v909
        %v974 = vadd.f32 %v598, %v910
        %v975 = vadd.f32 %v601, %v911
        %v976 = vadd.f32 %v606, %v912
        %v977 = vadd.f32 %v609, %v913
        %v978 = vadd.f32 %v614, %v914
        %v979 = vadd.f32 %v617, %v915
        %v980 = vadd.f32 %v622, %v916
        %v981 = vadd.f32 %v625, %v917
        %v982 = vadd.f32 %v630, %v918
        %v983 = vadd.f32 %v633, %v919
        %v984 = vadd.f32 %v638, %v920
        %v985 = vadd.f32 %v641, %v921
        %v986 = vadd.f32 %v646, %v922
        %v987 = vadd.f32 %v649, %v923
        %v988 = vadd.f32 %v654, %v924
        %v989 = vadd.f32 %v657, %v925
        %v990 = vadd.f32 %v662, %v926
        %v991 = vadd.f32 %v665, %v927
        %v992 = vadd.f32 %v670, %v928
        %v993 = vadd.f32 %v673, %v929
        %v994 = vadd.f32 %v678, %v930
        %v995 = vadd.f32 %v681, %v931
        %v996 = vadd.f32 %v686, %v932
        %v997 = vadd.f32 %v689, %v933
        %v998 = vadd.f32 %v694, %v934
        %v999 = vadd.f32 %v697, %v935
        %v1000 = vadd.f32 %v702, %v936
        %v1001 = vadd.f32 %v705, %v937
        %v1002 = vadd.f32 %v710, %v938
        %v1003 = vadd.f32 %v713, %v939
        %v1004 = vadd.f32 %v718, %v940
        %v1005 = vadd.f32 %v721, %v941
        %v1006 = vadd.f32 %v726, %v942
        %v1007 = vadd.f32 %v729, %v943
        %v1008 = vadd.f32 %v734, %v944
        %v1009 = vadd.f32 %v737, %v945
        %v1010 = vadd.f32 %v742, %v946
        %v1011 = vadd.f32 %v745, %v947
        %v1012 = vadd.f32 %v750, %v948
        %v1013 = vadd.f32 %v753, %v949
        %v1014 = vadd.f32 %v758, %v950
        %v1015 = vadd.f32 %v761, %v951
        %v1016 = vadd.f32 %v766, %v952
        %v1017 = vadd.f32 %v769, %v953
        %v1018 = vadd.f32 %v774, %v954
        %v1019 = vadd.f32 %v777, %v955
        %v1020 = vadd.f32 %v782, %v956
        %v1021 = vadd.f32 %v785, %v957
        %v1022 = vadd.f32 %v790, %v958
        %v1023 = vadd.f32 %v793, %v959
        %v1024 = vadd.f32 %v798, %v960
        %v1025 = vadd.f32 %v801, %v961
        %v1026 = vadd.f32 %v806, %v962
        %v1027 = vadd.f32 %v809, %v963
        %v1028 = vadd.f32 %v814, %v964
        %v1029 = vadd.f32 %v817, %v965
        %v1030 = vadd.f32 %v822, %v966
        %v1031 = vadd.f32 %v825, %v967
        %v1032 = vadd.f32 %v830, %v968
        %v1033 = vadd.f32 %v833, %v969
        %v1034 = vadd.f32 %v838, %v970
        %v1035 = vadd.f32 %v841, %v971
        %v1036 = vmax.f32 %v972, 0.0
        %v1037 = vmax.f32 %v973, 0.0
        %v1038 = vmax.f32 %v974, 0.0
        %v1039 = vmax.f32 %v975, 0.0
        %v1040 = vmax.f32 %v976, 0.0
        %v1041 = vmax.f32 %v977, 0.0
        %v1042 = vmax.f32 %v978, 0.0
        %v1043 = vmax.f32 %v979, 0.0
        %v1044 = vmax.f32 %v980, 0.0
        %v1045 = vmax.f32 %v981, 0.0
        %v1046 = vmax.f32 %v982, 0.0
        %v1047 = vmax.f32 %v983, 0.0
        %v1048 = vmax.f32 %v984, 0.0
        %v1049 = vmax.f32 %v985, 0.0
        %v1050 = vmax.f32 %v986, 0.0
        %v1051 = vmax.f32 %v987, 0.0
        %v1052 = vmax.f32 %v988, 0.0
        %v1053 = vmax.f32 %v989, 0.0
        %v1054 = vmax.f32 %v990, 0.0
        %v1055 = vmax.f32 %v991, 0.0
        %v1056 = vmax.f32 %v992, 0.0
        %v1057 = vmax.f32 %v993, 0.0
        %v1058 = vmax.f32 %v994, 0.0
        %v1059 = vmax.f32 %v995, 0.0
        %v1060 = vmax.f32 %v996, 0.0
        %v1061 = vmax.f32 %v997, 0.0
        %v1062 = vmax.f32 %v998, 0.0
        %v1063 = vmax.f32 %v999, 0.0
        %v1064 = vmax.f32 %v1000, 0.0
        %v1065 = vmax.f32 %v1001, 0.0
        %v1066 = vmax.f32 %v1002, 0.0
        %v1067 = vmax.f32 %v1003, 0.0
        %v1068 = vmax.f32 %v1004, 0.0
        %v1069 = vmax.f32 %v1005, 0.0
        %v1070 = vmax.f32 %v1006, 0.0
        %v1071 = vmax.f32 %v1007, 0.0
        %v1072 = vmax.f32 %v1008, 0.0
        %v1073 = vmax.f32 %v1009, 0.0
        %v1074 = vmax.f32 %v1010, 0.0
        %v1075 = vmax.f32 %v1011, 0.0
        %v1076 = vmax.f32 %v1012, 0.0
        %v1077 = vmax.f32 %v1013, 0.0
        %v1078 = vmax.f32 %v1014, 0.0
        %v1079 = vmax.f32 %v1015, 0.0
        %v1080 = vmax.f32 %v1016, 0.0
        %v1081 = vmax.f32 %v1017, 0.0
        %v1082 = vmax.f32 %v1018, 0.0
        %v1083 = vmax.f32 %v1019, 0.0
        %v1084 = vmax.f32 %v1020, 0.0
        %v1085 = vmax.f32 %v1021, 0.0
        %v1086 = vmax.f32 %v1022, 0.0
        %v1087 = vmax.f32 %v1023, 0.0
        %v1088 = vmax.f32 %v1024, 0.0
        %v1089 = vmax.f32 %v1025, 0.0
        %v1090 = vmax.f32 %v1026, 0.0
        %v1091 = vmax.f32 %v1027, 0.0
        %v1092 = vmax.f32 %v1028, 0.0
        %v1093 = vmax.f32 %v1029, 0.0
        %v1094 = vmax.f32 %v1030, 0.0
        %v1095 = vmax.f32 %v1031, 0.0
        %v1096 = vmax.f32 %v1032, 0.0
        %v1097 = vmax.f32 %v1033, 0.0
        %v1098 = vmax.f32 %v1034, 0.0
        %v1099 = vmax.f32 %v1035, 0.0
        %vm1100 = vcmask 130048
        %1101 = vst.msk [vmem:[%s207] sm:$0xff] %vm1100, %v1036
        %1102 = vst.msk [vmem:[%s207 + $0x8] sm:$0xff] %vm1100, %v1037
        %1103 = vst.msk [vmem:[%s207 + $0x10] sm:$0xff] %vm1100, %v1038
        %1104 = vst.msk [vmem:[%s207 + $0x18] sm:$0xff] %vm1100, %v1039
        %1105 = vst.msk [vmem:[%s207 + $0x20] sm:$0xff] %vm1100, %v1040
        %1106 = vst.msk [vmem:[%s207 + $0x28] sm:$0xff] %vm1100, %v1041
        %1107 = vst.msk [vmem:[%s207 + $0x30] sm:$0xff] %vm1100, %v1042
        %1108 = vst.msk [vmem:[%s207 + $0x38] sm:$0xff] %vm1100, %v1043
        %1109 = vst.msk [vmem:[%s207 + $0x40] sm:$0xff] %vm1100, %v1044
        %1110 = vst.msk [vmem:[%s207 + $0x48] sm:$0xff] %vm1100, %v1045
        %1111 = vst.msk [vmem:[%s207 + $0x50] sm:$0xff] %vm1100, %v1046
        %1112 = vst.msk [vmem:[%s207 + $0x58] sm:$0xff] %vm1100, %v1047
        %1113 = vst.msk [vmem:[%s207 + $0x60] sm:$0xff] %vm1100, %v1048
        %1114 = vst.msk [vmem:[%s207 + $0x68] sm:$0xff] %vm1100, %v1049
        %1115 = vst.msk [vmem:[%s207 + $0x70] sm:$0xff] %vm1100, %v1050
        %1116 = vst.msk [vmem:[%s207 + $0x78] sm:$0xff] %vm1100, %v1051
        %1117 = vst.msk [vmem:[%s207 + $0x80] sm:$0xff] %vm1100, %v1052
        %1118 = vst.msk [vmem:[%s207 + $0x88] sm:$0xff] %vm1100, %v1053
        %1119 = vst.msk [vmem:[%s207 + $0x90] sm:$0xff] %vm1100, %v1054
        %1120 = vst.msk [vmem:[%s207 + $0x98] sm:$0xff] %vm1100, %v1055
        %1121 = vst.msk [vmem:[%s207 + $0xa0] sm:$0xff] %vm1100, %v1056
        %1122 = vst.msk [vmem:[%s207 + $0xa8] sm:$0xff] %vm1100, %v1057
        %1123 = vst.msk [vmem:[%s207 + $0xb0] sm:$0xff] %vm1100, %v1058
        %1124 = vst.msk [vmem:[%s207 + $0xb8] sm:$0xff] %vm1100, %v1059
        %1125 = vst.msk [vmem:[%s207 + $0xc0] sm:$0xff] %vm1100, %v1060
        %1126 = vst.msk [vmem:[%s207 + $0xc8] sm:$0xff] %vm1100, %v1061
        %1127 = vst.msk [vmem:[%s207 + $0xd0] sm:$0xff] %vm1100, %v1062
        %1128 = vst.msk [vmem:[%s207 + $0xd8] sm:$0xff] %vm1100, %v1063
        %1129 = vst.msk [vmem:[%s207 + $0xe0] sm:$0xff] %vm1100, %v1064
        %1130 = vst.msk [vmem:[%s207 + $0xe8] sm:$0xff] %vm1100, %v1065
        %1131 = vst.msk [vmem:[%s207 + $0xf0] sm:$0xff] %vm1100, %v1066
        %1132 = vst.msk [vmem:[%s207 + $0xf8] sm:$0xff] %vm1100, %v1067
        %1133 = vst.msk [vmem:[%s207 + $0x100] sm:$0xff] %vm1100, %v1068
        %1134 = vst.msk [vmem:[%s207 + $0x108] sm:$0xff] %vm1100, %v1069
        %1135 = vst.msk [vmem:[%s207 + $0x110] sm:$0xff] %vm1100, %v1070
        %1136 = vst.msk [vmem:[%s207 + $0x118] sm:$0xff] %vm1100, %v1071
        %1137 = vst.msk [vmem:[%s207 + $0x120] sm:$0xff] %vm1100, %v1072
        %1138 = vst.msk [vmem:[%s207 + $0x128] sm:$0xff] %vm1100, %v1073
        %1139 = vst.msk [vmem:[%s207 + $0x130] sm:$0xff] %vm1100, %v1074
        %1140 = vst.msk [vmem:[%s207 + $0x138] sm:$0xff] %vm1100, %v1075
        %1141 = vst.msk [vmem:[%s207 + $0x140] sm:$0xff] %vm1100, %v1076
        %1142 = vst.msk [vmem:[%s207 + $0x148] sm:$0xff] %vm1100, %v1077
        %1143 = vst.msk [vmem:[%s207 + $0x150] sm:$0xff] %vm1100, %v1078
        %1144 = vst.msk [vmem:[%s207 + $0x158] sm:$0xff] %vm1100, %v1079
        %1145 = vst.msk [vmem:[%s207 + $0x160] sm:$0xff] %vm1100, %v1080
        %1146 = vst.msk [vmem:[%s207 + $0x168] sm:$0xff] %vm1100, %v1081
        %1147 = vst.msk [vmem:[%s207 + $0x170] sm:$0xff] %vm1100, %v1082
        %1148 = vst.msk [vmem:[%s207 + $0x178] sm:$0xff] %vm1100, %v1083
        %1149 = vst.msk [vmem:[%s207 + $0x180] sm:$0xff] %vm1100, %v1084
        %1150 = vst.msk [vmem:[%s207 + $0x188] sm:$0xff] %vm1100, %v1085
        %1151 = vst.msk [vmem:[%s207 + $0x190] sm:$0xff] %vm1100, %v1086
        %1152 = vst.msk [vmem:[%s207 + $0x198] sm:$0xff] %vm1100, %v1087
        %1153 = vst.msk [vmem:[%s207 + $0x1a0] sm:$0xff] %vm1100, %v1088
        %1154 = vst.msk [vmem:[%s207 + $0x1a8] sm:$0xff] %vm1100, %v1089
        %1155 = vst.msk [vmem:[%s207 + $0x1b0] sm:$0xff] %vm1100, %v1090
        %1156 = vst.msk [vmem:[%s207 + $0x1b8] sm:$0xff] %vm1100, %v1091
        %1157 = vst.msk [vmem:[%s207 + $0x1c0] sm:$0xff] %vm1100, %v1092
        %1158 = vst.msk [vmem:[%s207 + $0x1c8] sm:$0xff] %vm1100, %v1093
        %1159 = vst.msk [vmem:[%s207 + $0x1d0] sm:$0xff] %vm1100, %v1094
        %1160 = vst.msk [vmem:[%s207 + $0x1d8] sm:$0xff] %vm1100, %v1095
        %1161 = vst.msk [vmem:[%s207 + $0x1e0] sm:$0xff] %vm1100, %v1096
        %1162 = vst.msk [vmem:[%s207 + $0x1e8] sm:$0xff] %vm1100, %v1097
        %1163 = vst.msk [vmem:[%s207 + $0x1f0] sm:$0xff] %vm1100, %v1098
        %1164 = vst.msk [vmem:[%s207 + $0x1f8] sm:$0xff] %vm1100, %v1099
        %s1165 = sand.u32 %s120, 1
        %s1166 = scalar_lea.sflag [#allocation3], %s1165
        %s1167 = sand.u32 %s120, 1
        %s1168 = smul.addr %s1167, 512
        %s1169 = scalar_lea.vmem [#allocation2], %s1168
        // Predicated region
        $region37: #{bottleneck_forward.5} parent=35 // pred_check
          %p1170 = pneg %p130
        $region38: #{bottleneck_forward.5} parent=35 // pred_check_branch
          %1172 = sbr.rel (%p1170) target = $region40
        $region39: #{bottleneck_forward.5} parent=35 // pred_region
          %s1173 = smul.u32 64, %s18
          %s1175 = ssub.s32 8192, 8192
          %1176 = vsyncadd %s1166, %s1175
          %s1177 = smul.addr %s1173, 128
          %s1178 = scalar_lea.hbm %s4, %s1177
          %s1179 = sshll.u32 %s1169, 4
          %s1180 = int_to_ptr.vmem [resolvable:$true] %s1179
          %1185 = dma.vmem_to_hbm [thread:$0]  %s1180, 8192, %s1178, %s1166, 128, 128, 8
        $region40: #{bottleneck_forward.5} parent=35 // pred_fallthru
          _
      $region36: #{bottleneck_forward.5} parent=5 // pred_fallthru
        _
      %p1186 = scmp.le.s32.totalorder 2, %s13
      // Predicated region
      $region41: #{bottleneck_forward.5} parent=5 // pred_check
        %p1187 = pneg %p1186
      $region42: #{bottleneck_forward.5} parent=5 // pred_check_branch
        %1189 = sbr.rel (%p1187) target = $region44
      $region43: #{bottleneck_forward.5} parent=5 // pred_region
        %s1190 = ssub.s32 %s13, 2
        // Predicated region
        $region45: #{bottleneck_forward.5} parent=43 // pred_check
          %p1191 = pneg %p136
        $region46: #{bottleneck_forward.5} parent=43 // pred_check_branch
          %1193 = sbr.rel (%p1191) target = $region48
        $region47: #{bottleneck_forward.5} parent=43 // pred_region
          %s1194 = sand.u32 %s121, 1
          %s1195 = scalar_lea.sflag [#allocation3], %s1194
          %s1196 = sand.u32 %s121, 1
          %s1197 = smul.addr %s1196, 512
          %s1198 = scalar_lea.vmem [#allocation2], %s1197
          %1199 = dma.done %s1195, 8192
        $region48: #{bottleneck_forward.5} parent=43 // pred_fallthru
          _
      $region44: #{bottleneck_forward.5} parent=5 // pred_fallthru
        _
    $region6: #{bottleneck_forward.5} parent=1 // loop_footer
      %s17 = sadd.s32 1, %s13
    $region7: #{bottleneck_forward.5} parent=1 // loop_footer_branch
      %12 = sbr.rel target = $region3
    $region8: #{bottleneck_forward.5} parent=1 // loop_exit
      _
    %1200 = vsyncpa [#allocation3], 1
    %s1201 = scalar_lea.sflag [#allocation3], 1
    %1202 = vsyncpa %s1201, 1

// kernel: bottleneck_forward.4
$region0: #{bottleneck_forward.4}
  #allocation0 [shape = 'u32[]', space=smem, size = 0x4, offset = 0x4, fixed_abs, tag = 'smem constant byte address 0x4 - core index']
  #allocation1 [shape = 'u32[144,128]{1,0:T(1,128)}', space=vmem, size = 0x12000, scoped, tag = 'internal scratch']
  #allocation2 [shape = 'f32[64,4]{1,0:T(8,128)}', space=vmem, size = 0x8000, scoped, tag = 'scratch operand']
  %s0 = inlined_call_operand.vmem [shape: bf16[2,10,10,10,4], index: 0, kind: input, shape index: {}]
  %s1 = inlined_call_operand.vmem [shape: bf16[3,3,3,4,4], index: 1, kind: input, shape index: {}]
  %s2 = inlined_call_operand.vmem [shape: f32[1,4], index: 2, kind: input, shape index: {}]
  %s3 = inlined_call_operand.vmem [shape: bf16[2,8,64,4], index: 3, kind: output, shape index: {}]
  %s4 = sld [smem:[#allocation0]]
  $region53: #{bottleneck_forward.4} parent=0
    _
  %s6 = ssub.s32 1, %s4
  %s7 = scalar_select 0, %s6, %s4
  loop: start=0, step=1, limit=50
  $region2: #{bottleneck_forward.4} parent=0 // loop_pre_header
    _
  $region3: #{bottleneck_forward.4} parent=0 // loop_header
    %s9 = sphi 0, %s13
    %p10 = scmp.ge.s32.totalorder %s9, 50
    %s16 = sphi 0, %s35
    %s17 = sphi 0, %s31
    %s18 = sphi 0, %s27
    %s19 = sphi 0, %s16
    %s20 = sphi 0, %s17
    %s21 = sphi 0, %s18
    %s22 = sphi 0, %s19
    %s23 = sphi 0, %s20
    %s24 = sphi 0, %s21
    %s42 = sphi 0, %s44
    %s45 = sphi 0, %s42
    %s46 = sphi 0, %s45
    %s62 = sphi 0, %s46
    %s66 = sphi 0, %s66
    %s68 = sphi 0, %s66
    %s69 = sphi 0, %s68
    %s83 = sphi 0, %s69
    %s87 = sphi 0, %s87
    %s89 = sphi 0, %s87
    %s90 = sphi 0, %s89
    %s104 = sphi 0, %s90
    %s112 = sphi 0, %s114
    %s115 = sphi 0, %s112
    %s116 = sphi 0, %s115
    %s132 = sphi 0, %s116
  $region4: #{bottleneck_forward.4} parent=0 // loop_header_branch
    %12 = sbr.rel (%p10) target = $region8
  $region5: #{bottleneck_forward.4} parent=0 // loop_body
    %s14 = ssub.s32 %s9, 1
    %s15 = ssub.s32 %s9, 2
    %s25 = sadd.s32 1, %s18
    %p26 = scmp.ge.s32.totalorder %s25, 3
    %s27 = scalar_select %p26, 0, %s25
    %s28 = sadd.s32 1, %s17
    %s29 = scalar_select %p26, %s28, %s17
    %p30 = scmp.ge.s32.totalorder %s29, 8
    %s31 = scalar_select %p30, 0, %s29
    %s32 = sadd.s32 1, %s16
    %s33 = scalar_select %p30, %s32, %s16
    %p34 = scmp.ge.s32.totalorder %s33, 2
    %s35 = scalar_select %p34, 0, %s33
    %s36 = sadd.s32 %s17, %s18
    %s37 = sadd.s32 %s31, %s27
    %s38 = ssub.s32 %s16, %s35
    %s39 = ssub.s32 %s36, %s37
    %s40 = sor.u32 %s38, %s39
    %p41 = scmp.eq.s32.totalorder %s40, 0
    %s43 = sadd.s32 %s42, 1
    %s44 = scalar_select %p41, %s42, %s43
    %p47 = pneg %p41
    %p48 = scmp.eq.s32.totalorder %s9, 47
    %p49 = por %p47, %p48
    %p50 = scmp.ne.s32.totalorder %s42, %s45
    %p51 = scmp.eq.s32.totalorder %s9, 0
    %p52 = por %p50, %p51
    %p53 = scmp.ne.s32.totalorder %s42, %s45
    %p54 = scmp.eq.s32.totalorder %s14, 47
    %p55 = por %p53, %p54
    %p56 = scmp.ne.s32.totalorder %s45, %s46
    %p57 = scmp.eq.s32.totalorder %s14, 0
    %p58 = por %p56, %p57
    %p59 = scmp.ne.s32.totalorder %s45, %s46
    %p60 = scmp.eq.s32.totalorder %s15, 47
    %p61 = por %p59, %p60
    %p63 = scmp.ne.s32.totalorder %s46, %s62
    %p64 = scmp.eq.s32.totalorder %s15, 0
    %p65 = por %p63, %p64
    %s67 = sadd.s32 %s66, 1
    %p70 = scmp.eq.s32.totalorder %s9, 47
    %p71 = scmp.ne.s32.totalorder %s66, %s68
    %p72 = scmp.eq.s32.totalorder %s9, 0
    %p73 = por %p71, %p72
    %p74 = scmp.ne.s32.totalorder %s66, %s68
    %p75 = scmp.eq.s32.totalorder %s14, 47
    %p76 = por %p74, %p75
    %p77 = scmp.ne.s32.totalorder %s68, %s69
    %p78 = scmp.eq.s32.totalorder %s14, 0
    %p79 = por %p77, %p78
    %p80 = scmp.ne.s32.totalorder %s68, %s69
    %p81 = scmp.eq.s32.totalorder %s15, 47
    %p82 = por %p80, %p81
    %p84 = scmp.ne.s32.totalorder %s69, %s83
    %p85 = scmp.eq.s32.totalorder %s15, 0
    %p86 = por %p84, %p85
    %s88 = sadd.s32 %s87, 1
    %p91 = scmp.eq.s32.totalorder %s9, 47
    %p92 = scmp.ne.s32.totalorder %s87, %s89
    %p93 = scmp.eq.s32.totalorder %s9, 0
    %p94 = por %p92, %p93
    %p95 = scmp.ne.s32.totalorder %s87, %s89
    %p96 = scmp.eq.s32.totalorder %s14, 47
    %p97 = por %p95, %p96
    %p98 = scmp.ne.s32.totalorder %s89, %s90
    %p99 = scmp.eq.s32.totalorder %s14, 0
    %p100 = por %p98, %p99
    %p101 = scmp.ne.s32.totalorder %s89, %s90
    %p102 = scmp.eq.s32.totalorder %s15, 47
    %p103 = por %p101, %p102
    %p105 = scmp.ne.s32.totalorder %s90, %s104
    %p106 = scmp.eq.s32.totalorder %s15, 0
    %p107 = por %p105, %p106
    %s108 = ssub.s32 %s16, %s35
    %s109 = ssub.s32 %s17, %s31
    %s110 = sor.u32 %s108, %s109
    %p111 = scmp.eq.s32.totalorder %s110, 0
    %s113 = sadd.s32 %s112, 1
    %s114 = scalar_select %p111, %s112, %s113
    %p117 = pneg %p111
    %p118 = scmp.eq.s32.totalorder %s9, 47
    %p119 = por %p117, %p118
    %p120 = scmp.ne.s32.totalorder %s112, %s115
    %p121 = scmp.eq.s32.totalorder %s9, 0
    %p122 = por %p120, %p121
    %p123 = scmp.ne.s32.totalorder %s112, %s115
    %p124 = scmp.eq.s32.totalorder %s14, 47
    %p125 = por %p123, %p124
    %p126 = scmp.ne.s32.totalorder %s115, %s116
    %p127 = scmp.eq.s32.totalorder %s14, 0
    %p128 = por %p126, %p127
    %p129 = scmp.ne.s32.totalorder %s115, %s116
    %p130 = scmp.eq.s32.totalorder %s15, 47
    %p131 = por %p129, %p130
    %p133 = scmp.ne.s32.totalorder %s116, %s132
    %p134 = scmp.eq.s32.totalorder %s15, 0
    %p135 = por %p133, %p134
    %p136 = scmp.le.s32.totalorder 1, %s9
    %p137 = scmp.lt.s32.totalorder %s9, 49
    %p138 = pnand %p136, %p137
    %p139 = pneg %p138
    // Predicated region
    $region9: #{bottleneck_forward.4} parent=5 // pred_check
      _
    $region10: #{bottleneck_forward.4} parent=5 // pred_check_branch
      %141 = sbr.rel (%p138) target = $region12
    $region11: #{bottleneck_forward.4} parent=5 // pred_region
      %s142 = ssub.s32 %s9, 1
      // Predicated region
      $region13: #{bottleneck_forward.4} parent=11 // pred_check
        %p143 = pneg %p79
      $region14: #{bottleneck_forward.4} parent=11 // pred_check_branch
        %145 = sbr.rel (%p143) target = $region16
      $region15: #{bottleneck_forward.4} parent=11 // pred_region
        _
      $region16: #{bottleneck_forward.4} parent=11 // pred_fallthru
        _
      // Predicated region
      $region17: #{bottleneck_forward.4} parent=11 // pred_check
        %p146 = pneg %p100
      $region18: #{bottleneck_forward.4} parent=11 // pred_check_branch
        %148 = sbr.rel (%p146) target = $region20
      $region19: #{bottleneck_forward.4} parent=11 // pred_region
        _
      $region20: #{bottleneck_forward.4} parent=11 // pred_fallthru
        _
    $region12: #{bottleneck_forward.4} parent=5 // pred_fallthru
      _
    %p149 = scmp.lt.s32.totalorder %s9, 48
    // Predicated region
    $region21: #{bottleneck_forward.4} parent=5 // pred_check
      %p150 = pneg %p149
    $region22: #{bottleneck_forward.4} parent=5 // pred_check_branch
      %152 = sbr.rel (%p150) target = $region24
    $region23: #{bottleneck_forward.4} parent=5 // pred_region
      // Predicated region
      $region25: #{bottleneck_forward.4} parent=23 // pred_check
        %p153 = pneg %p52
      $region26: #{bottleneck_forward.4} parent=23 // pred_check_branch
        %155 = sbr.rel (%p153) target = $region28
      $region27: #{bottleneck_forward.4} parent=23 // pred_region
        %s156 = sadd.s32 %s17, %s18
        %p157 = scmp.lt.s32.totalorder %s16, 1
        %s158 = scalar_select %p157, %s16, 1
        %p159 = scmp.lt.s32.totalorder %s156, 9
        %s160 = scalar_select %p159, %s156, 9
        %s161 = smul.addr %s160, 20
        %s162 = smul.addr %s158, 200
        %s163 = sadd.s32 %s161, %s162
        %s164 = smul.addr %s163, 4
        %s165 = scalar_lea.vmem %s0, %s164
        %s166 = sadd.s32 %s17, %s18
      $region28: #{bottleneck_forward.4} parent=23 // pred_fallthru
        _
    $region24: #{bottleneck_forward.4} parent=5 // pred_fallthru
      _
    %p167 = scmp.le.s32.totalorder 1, %s9
    %p168 = scmp.lt.s32.totalorder %s9, 49
    %p169 = pnand %p167, %p168
    %p170 = pneg %p169
    // Predicated region
    $region29: #{bottleneck_forward.4} parent=5 // pred_check
      _
    $region30: #{bottleneck_forward.4} parent=5 // pred_check_branch
      %172 = sbr.rel (%p169) target = $region32
    $region31: #{bottleneck_forward.4} parent=5 // pred_region
      %s173 = ssub.s32 %s9, 1
      %s174 = sadd.s32 %s20, %s21
      %p175 = scmp.lt.s32.totalorder %s19, 1
      %s176 = scalar_select %p175, %s19, 1
      %p177 = scmp.lt.s32.totalorder %s174, 9
      %s178 = scalar_select %p177, %s174, 9
      %s179 = smul.addr %s178, 20
      %s180 = smul.addr %s176, 200
      %s181 = sadd.s32 %s179, %s180
      %s182 = smul.addr %s181, 4
      %s183 = scalar_lea.vmem %s0, %s182
      %p184 = pneg %p58
      %p185 = pneg %p55
      %p186 = pneg %p79
      %p187 = pneg %p76
      %p188 = pneg %p100
      %p189 = pneg %p97
      %p190 = pneg %p128
      %p191 = pneg %p125
      %p192 = scmp.lt.s32.totalorder %s19, 1
      %s193 = scalar_select %p192, %s19, 1
      %p194 = scmp.lt.s32.totalorder %s20, 7
      %s195 = scalar_select %p194, %s20, 7
      %s196 = smul.addr %s195, 8
      %s197 = smul.addr %s193, 64
      %s198 = sadd.s32 %s196, %s197
      %s199 = smul.addr %s198, 4
      %s200 = scalar_lea.vmem %s3, %s199
      %s201 = sadd.s32 %s20, %s21
      %p202 = scmp.lt.s32.totalorder %s19, 1
      %s203 = scalar_select %p202, %s19, 1
      %p204 = scmp.lt.s32.totalorder %s201, 9
      %s205 = scalar_select %p204, %s201, 9
      %s206 = smul.addr %s205, 20
      %s207 = smul.addr %s203, 200
      %s208 = sadd.s32 %s206, %s207
      %s209 = smul.addr %s208, 4
      %s210 = scalar_lea.vmem %s0, %s209
      %s211 = sadd.s32 %s20, %s21
      %p212 = scmp.lt.s32.totalorder %s19, 1
      %s213 = scalar_select %p212, %s19, 1
      %p214 = scmp.lt.s32.totalorder %s20, 7
      %s215 = scalar_select %p214, %s20, 7
      %s216 = smul.addr %s215, 8
      %s217 = smul.addr %s213, 64
      %s218 = sadd.s32 %s216, %s217
      %s219 = smul.addr %s218, 4
      %s220 = scalar_lea.vmem %s3, %s219
      %p222 = scmp.eq.s32.totalorder %s21, 0
      // Predicated region
      $region33: #{bottleneck_forward.4} parent=31 // pred_check
        %p223 = pneg %p222
      $region34: #{bottleneck_forward.4} parent=31 // pred_check_branch
        %225 = sbr.rel (%p223) target = $region36
      $region35: #{bottleneck_forward.4} parent=31 // pred_region
        %vm226 = vcmask 31744
        %227 = vst.msk [vmem:[#allocation2] sm:$0xff] %vm226, 0.0
        %228 = vst.msk [vmem:[#allocation2 + $0x8] sm:$0xff] %vm226, 0.0
        %229 = vst.msk [vmem:[#allocation2 + $0x10] sm:$0xff] %vm226, 0.0
        %230 = vst.msk [vmem:[#allocation2 + $0x18] sm:$0xff] %vm226, 0.0
        %231 = vst.msk [vmem:[#allocation2 + $0x20] sm:$0xff] %vm226, 0.0
        %232 = vst.msk [vmem:[#allocation2 + $0x28] sm:$0xff] %vm226, 0.0
        %233 = vst.msk [vmem:[#allocation2 + $0x30] sm:$0xff] %vm226, 0.0
        %234 = vst.msk [vmem:[#allocation2 + $0x38] sm:$0xff] %vm226, 0.0
      $region36: #{bottleneck_forward.4} parent=31 // pred_fallthru
        _
      %v235 = vld [vmem:[%s210] sm:$0xf]
      %v236 = vld [vmem:[%s210 + $0x8] sm:$0xf]
      %v237 = vld [vmem:[%s210 + $0x10] sm:$0xf]
      %v238 = vld [vmem:[%s210 + $0x18] sm:$0xf]
      %v239 = vld [vmem:[%s210 + $0x20] sm:$0xf]
      %v240 = vld [vmem:[%s210 + $0x28] sm:$0xf]
      %v241 = vld [vmem:[%s210 + $0x30] sm:$0xf]
      %v242 = vld [vmem:[%s210 + $0x38] sm:$0xf]
      %s243 = smul.u32 %s21, 9
      %s244 = smul.addr %s243, 2
      %s245 = scalar_lea.vmem %s1, %s244
      %v246 = vld [vmem:[%s245] sm:$0x3]
      %v247 = vld [vmem:[%s210 + $0x4] sm:$0x1]
      %v248 = vld [vmem:[%s210 + $0xc] sm:$0x1]
      %v249 = vld [vmem:[%s210 + $0x14] sm:$0x1]
      %v250 = vld [vmem:[%s210 + $0x1c] sm:$0x1]
      %v251 = vld [vmem:[%s210 + $0x24] sm:$0x1]
      %v252 = vld [vmem:[%s210 + $0x2c] sm:$0x1]
      %v253 = vld [vmem:[%s210 + $0x34] sm:$0x1]
      %v254 = vld [vmem:[%s210 + $0x3c] sm:$0x1]
      %vm255 = vsmask.f32 3328
      %vm256 = vsmask.f32 7440
      %vm257 = vmor %vm255, %vm256
      %v259 = vshrl.u32 %v235, 16
      %v261 = vrot.slane %v259, 4
      %v262 = vshll.u32 %v235, 16
      %v264 = vrot.slane %v262, 5
      %v265 = vor.u32 %v261, %v264
      %v266 = vrot.slane %v265, 4
      %v268 = vshll.u32 %v247, 16
      %v270 = vrot.slane %v268, 5
      %v271 = vsel %vm257, %v266, %v270
      %v273 = vshrl.u32 %v236, 16
      %v275 = vrot.slane %v273, 4
      %v276 = vshll.u32 %v236, 16
      %v278 = vrot.slane %v276, 5
      %v279 = vor.u32 %v275, %v278
      %v280 = vrot.slane %v279, 4
      %v282 = vshll.u32 %v248, 16
      %v284 = vrot.slane %v282, 5
      %v285 = vsel %vm257, %v280, %v284
      %v287 = vshrl.u32 %v237, 16
      %v289 = vrot.slane %v287, 4
      %v290 = vshll.u32 %v237, 16
      %v292 = vrot.slane %v290, 5
      %v293 = vor.u32 %v289, %v292
      %v294 = vrot.slane %v293, 4
      %v296 = vshll.u32 %v249, 16
      %v298 = vrot.slane %v296, 5
      %v299 = vsel %vm257, %v294, %v298
      %v301 = vshrl.u32 %v238, 16
      %v303 = vrot.slane %v301, 4
      %v304 = vshll.u32 %v238, 16
      %v306 = vrot.slane %v304, 5
      %v307 = vor.u32 %v303, %v306
      %v308 = vrot.slane %v307, 4
      %v310 = vshll.u32 %v250, 16
      %v312 = vrot.slane %v310, 5
      %v313 = vsel %vm257, %v308, %v312
      %v315 = vshrl.u32 %v239, 16
      %v317 = vrot.slane %v315, 4
      %v318 = vshll.u32 %v239, 16
      %v320 = vrot.slane %v318, 5
      %v321 = vor.u32 %v317, %v320
      %v322 = vrot.slane %v321, 4
      %v324 = vshll.u32 %v251, 16
      %v326 = vrot.slane %v324, 5
      %v327 = vsel %vm257, %v322, %v326
      %v329 = vshrl.u32 %v240, 16
      %v331 = vrot.slane %v329, 4
      %v332 = vshll.u32 %v240, 16
      %v334 = vrot.slane %v332, 5
      %v335 = vor.u32 %v331, %v334
      %v336 = vrot.slane %v335, 4
      %v338 = vshll.u32 %v252, 16
      %v340 = vrot.slane %v338, 5
      %v341 = vsel %vm257, %v336, %v340
      %v343 = vshrl.u32 %v241, 16
      %v345 = vrot.slane %v343, 4
      %v346 = vshll.u32 %v241, 16
      %v348 = vrot.slane %v346, 5
      %v349 = vor.u32 %v345, %v348
      %v350 = vrot.slane %v349, 4
      %v352 = vshll.u32 %v253, 16
      %v354 = vrot.slane %v352, 5
      %v355 = vsel %vm257, %v350, %v354
      %v357 = vshrl.u32 %v242, 16
      %v359 = vrot.slane %v357, 4
      %v360 = vshll.u32 %v242, 16
      %v362 = vrot.slane %v360, 5
      %v363 = vor.u32 %v359, %v362
      %v364 = vrot.slane %v363, 4
      %v366 = vshll.u32 %v254, 16
      %v368 = vrot.slane %v366, 5
      %v369 = vsel %vm257, %v364, %v368
      %s370 = sadd.s32 1, %s243
      %s371 = smul.addr %s370, 2
      %s372 = scalar_lea.vmem %s1, %s371
      %v373 = vld [vmem:[%s372] sm:$0x3]
      %v374 = vunpack.c.l.b16 %v271
      %v375 = vunpack.c.l.b16 %v285
      %v376 = vunpack.c.l.b16 %v299
      %v377 = vunpack.c.l.b16 %v313
      %v378 = vunpack.c.l.b16 %v327
      %v379 = vunpack.c.l.b16 %v341
      %v380 = vunpack.c.l.b16 %v355
      %v381 = vunpack.c.l.b16 %v369
      %v382 = vpack.c.b16 %v375, %v374
      %v383 = vpack.c.b16 %v377, %v376
      %v384 = vpack.c.b16 %v379, %v378
      %v385 = vpack.c.b16 %v381, %v380
      %vm386 = vcmask 31744
      %v388 = vsel %vm386, %v382, 0
      %v391 = vsel %vm386, %v383, 0
      %v394 = vsel %vm386, %v384, 0
      %v397 = vsel %vm386, %v385, 0
      %vm399 = vcmask 1041408
      %v401 = vsel %vm399, %v373, 0
      %403 = vmatprep.subr.bf16.mxu0 0
      %404 = vmatpush1.bf16.msra.mxu0 %v401
      %405 = vmatprep.subr.bf16.mxu0 0
      %406 = vmatpush1.bf16.msra.mxu0 0
      %407 = vmatprep.subr.bf16.mxu0 0
      %408 = vmatpush1.bf16.msra.mxu0 0
      %409 = vmatprep.subr.bf16.mxu0 0
      %410 = vmatpush1.bf16.msra.mxu0 0
      %411 = vmatprep.subr.bf16.mxu0 0
      %412 = vmatpush1.bf16.msra.mxu0 0
      %413 = vmatprep.subr.bf16.mxu0 0
      %414 = vmatpush1.bf16.msra.mxu0 0
      %415 = vmatprep.subr.bf16.mxu0 0
      %416 = vmatpush1.bf16.msra.mxu0 0
      %417 = vmatprep.subr.bf16.mxu0 0
      %418 = vmatpush1.bf16.msra.mxu0 0
      %419 = vmatprep.subr.bf16.mxu0 0
      %420 = vmatpush1.bf16.msra.mxu0 0
      %421 = vmatprep.subr.bf16.mxu0 0
      %422 = vmatpush1.bf16.msra.mxu0 0
      %423 = vmatprep.subr.bf16.mxu0 0
      %424 = vmatpush1.bf16.msra.mxu0 0
      %425 = vmatprep.subr.bf16.mxu0 0
      %426 = vmatpush1.bf16.msra.mxu0 0
      %427 = vmatprep.subr.bf16.mxu0 0
      %428 = vmatpush1.bf16.msra.mxu0 0
      %429 = vmatprep.subr.bf16.mxu0 0
      %430 = vmatpush1.bf16.msra.mxu0 0
      %431 = vmatprep.subr.bf16.mxu0 0
      %432 = vmatpush1.bf16.msra.mxu0 0
      %433 = vmatprep.subr.bf16.mxu0 0
      %434 = vmatpush1.bf16.msra.mxu0 0
      %435 = vmatprep.mubr.bf16.mxu0 0
      %436 = vmatmul.mubr.bf16.gmra.mrb[0].mxu0 %v388
      %v437 = vpop.f32.mrb[0].mxu0
      %v438 = vadd.f32 0.0, %v437
      %v439 = vpop.f32.mrb[0].mxu0
      %v440 = vpop.f32.mrb[0].mxu0
      %v441 = vadd.f32 0.0, %v440
      %v442 = vpop.f32.mrb[0].mxu0
      %443 = vmatprep.mubr.bf16.mxu0 0
      %444 = vmatmul.mubr.bf16.gmra.mrb[0].mxu0 %v391
      %v445 = vpop.f32.mrb[0].mxu0
      %v446 = vadd.f32 0.0, %v445
      %v447 = vpop.f32.mrb[0].mxu0
      %v448 = vpop.f32.mrb[0].mxu0
      %v449 = vadd.f32 0.0, %v448
      %v450 = vpop.f32.mrb[0].mxu0
      %451 = vmatprep.mubr.bf16.mxu0 0
      %452 = vmatmul.mubr.bf16.gmra.mrb[0].mxu0 %v394
      %v453 = vpop.f32.mrb[0].mxu0
      %v454 = vadd.f32 0.0, %v453
      %v455 = vpop.f32.mrb[0].mxu0
      %v456 = vpop.f32.mrb[0].mxu0
      %v457 = vadd.f32 0.0, %v456
      %v458 = vpop.f32.mrb[0].mxu0
      %459 = vmatprep.mubr.bf16.mxu0 0
      %460 = vmatmul.mubr.bf16.gmra.mrb[0].mxu0 %v397
      %v461 = vpop.f32.mrb[0].mxu0
      %v462 = vadd.f32 0.0, %v461
      %v463 = vpop.f32.mrb[0].mxu0
      %v464 = vpop.f32.mrb[0].mxu0
      %v465 = vadd.f32 0.0, %v464
      %v466 = vpop.f32.mrb[0].mxu0
      %467 = vdwg.mxu0
      %v476 = vunpack.c.l.b16 %v235
      %v477 = vunpack.c.l.b16 %v236
      %v478 = vunpack.c.l.b16 %v237
      %v479 = vunpack.c.l.b16 %v238
      %v480 = vunpack.c.l.b16 %v239
      %v481 = vunpack.c.l.b16 %v240
      %v482 = vunpack.c.l.b16 %v241
      %v483 = vunpack.c.l.b16 %v242
      %v484 = vpack.c.b16 %v477, %v476
      %v485 = vpack.c.b16 %v479, %v478
      %v486 = vpack.c.b16 %v481, %v480
      %v487 = vpack.c.b16 %v483, %v482
      %v489 = vsel %vm386, %v484, 0
      %v492 = vsel %vm386, %v485, 0
      %v495 = vsel %vm386, %v486, 0
      %v498 = vsel %vm386, %v487, 0
      %v501 = vsel %vm399, %v246, 0
      %503 = vmatprep.subr.bf16.mxu0 0
      %504 = vmatpush1.bf16.msra.mxu0 %v501
      %505 = vmatprep.subr.bf16.mxu0 0
      %506 = vmatpush1.bf16.msra.mxu0 0
      %507 = vmatprep.subr.bf16.mxu0 0
      %508 = vmatpush1.bf16.msra.mxu0 0
      %509 = vmatprep.subr.bf16.mxu0 0
      %510 = vmatpush1.bf16.msra.mxu0 0
      %511 = vmatprep.subr.bf16.mxu0 0
      %512 = vmatpush1.bf16.msra.mxu0 0
      %513 = vmatprep.subr.bf16.mxu0 0
      %514 = vmatpush1.bf16.msra.mxu0 0
      %515 = vmatprep.subr.bf16.mxu0 0
      %516 = vmatpush1.bf16.msra.mxu0 0
      %517 = vmatprep.subr.bf16.mxu0 0
      %518 = vmatpush1.bf16.msra.mxu0 0
      %519 = vmatprep.subr.bf16.mxu0 0
      %520 = vmatpush1.bf16.msra.mxu0 0
      %521 = vmatprep.subr.bf16.mxu0 0
      %522 = vmatpush1.bf16.msra.mxu0 0
      %523 = vmatprep.subr.bf16.mxu0 0
      %524 = vmatpush1.bf16.msra.mxu0 0
      %525 = vmatprep.subr.bf16.mxu0 0
      %526 = vmatpush1.bf16.msra.mxu0 0
      %527 = vmatprep.subr.bf16.mxu0 0
      %528 = vmatpush1.bf16.msra.mxu0 0
      %529 = vmatprep.subr.bf16.mxu0 0
      %530 = vmatpush1.bf16.msra.mxu0 0
      %531 = vmatprep.subr.bf16.mxu0 0
      %532 = vmatpush1.bf16.msra.mxu0 0
      %533 = vmatprep.subr.bf16.mxu0 0
      %534 = vmatpush1.bf16.msra.mxu0 0
      %535 = vmatprep.mubr.bf16.mxu0 0
      %536 = vmatmul.mubr.bf16.gmra.mrb[0].mxu0 %v489
      %v537 = vpop.f32.mrb[0].mxu0
      %v538 = vadd.f32 %v438, %v537
      %v539 = vpop.f32.mrb[0].mxu0
      %v540 = vpop.f32.mrb[0].mxu0
      %v541 = vadd.f32 %v441, %v540
      %v542 = vpop.f32.mrb[0].mxu0
      %543 = vmatprep.mubr.bf16.mxu0 0
      %544 = vmatmul.mubr.bf16.gmra.mrb[0].mxu0 %v492
      %v545 = vpop.f32.mrb[0].mxu0
      %v546 = vadd.f32 %v446, %v545
      %v547 = vpop.f32.mrb[0].mxu0
      %v548 = vpop.f32.mrb[0].mxu0
      %v549 = vadd.f32 %v449, %v548
      %v550 = vpop.f32.mrb[0].mxu0
      %551 = vmatprep.mubr.bf16.mxu0 0
      %552 = vmatmul.mubr.bf16.gmra.mrb[0].mxu0 %v495
      %v553 = vpop.f32.mrb[0].mxu0
      %v554 = vadd.f32 %v454, %v553
      %v555 = vpop.f32.mrb[0].mxu0
      %v556 = vpop.f32.mrb[0].mxu0
      %v557 = vadd.f32 %v457, %v556
      %v558 = vpop.f32.mrb[0].mxu0
      %559 = vmatprep.mubr.bf16.mxu0 0
      %560 = vmatmul.mubr.bf16.gmra.mrb[0].mxu0 %v498
      %v561 = vpop.f32.mrb[0].mxu0
      %v562 = vadd.f32 %v462, %v561
      %v563 = vpop.f32.mrb[0].mxu0
      %v564 = vpop.f32.mrb[0].mxu0
      %v565 = vadd.f32 %v465, %v564
      %v566 = vpop.f32.mrb[0].mxu0
      %567 = vdwg.mxu0
      %v568 = vld [vmem:[%s210] sm:$0xe]
      %v569 = vld [vmem:[%s210 + $0x8] sm:$0xe]
      %v570 = vld [vmem:[%s210 + $0x10] sm:$0xe]
      %v571 = vld [vmem:[%s210 + $0x18] sm:$0xe]
      %v572 = vld [vmem:[%s210 + $0x20] sm:$0xe]
      %v573 = vld [vmem:[%s210 + $0x28] sm:$0xe]
      %v574 = vld [vmem:[%s210 + $0x30] sm:$0xe]
      %v575 = vld [vmem:[%s210 + $0x38] sm:$0xe]
      %vm592 = vcmask 1042432
      %vm593 = vcmask 1046532
      %vm594 = vmor %vm592, %vm593
      %v595 = vrot.slane %v568, 5
      %v596 = vrot.slane %v595, 4
      %v597 = vrot.slane %v247, 5
      %v598 = vsel %vm594, %v596, %v597
      %v599 = vrot.slane %v569, 5
      %v600 = vrot.slane %v599, 4
      %v601 = vrot.slane %v248, 5
      %v602 = vsel %vm594, %v600, %v601
      %v603 = vrot.slane %v570, 5
      %v604 = vrot.slane %v603, 4
      %v605 = vrot.slane %v249, 5
      %v606 = vsel %vm594, %v604, %v605
      %v607 = vrot.slane %v571, 5
      %v608 = vrot.slane %v607, 4
      %v609 = vrot.slane %v250, 5
      %v610 = vsel %vm594, %v608, %v609
      %v611 = vrot.slane %v572, 5
      %v612 = vrot.slane %v611, 4
      %v613 = vrot.slane %v251, 5
      %v614 = vsel %vm594, %v612, %v613
      %v615 = vrot.slane %v573, 5
      %v616 = vrot.slane %v615, 4
      %v617 = vrot.slane %v252, 5
      %v618 = vsel %vm594, %v616, %v617
      %v619 = vrot.slane %v574, 5
      %v620 = vrot.slane %v619, 4
      %v621 = vrot.slane %v253, 5
      %v622 = vsel %vm594, %v620, %v621
      %v623 = vrot.slane %v575, 5
      %v624 = vrot.slane %v623, 4
      %v625 = vrot.slane %v254, 5
      %v626 = vsel %vm594, %v624, %v625
      %s627 = sadd.s32 2, %s243
      %s628 = smul.addr %s627, 2
      %s629 = scalar_lea.vmem %s1, %s628
      %v630 = vld [vmem:[%s629] sm:$0x3]
      %v631 = vunpack.c.l.b16 %v598
      %v632 = vunpack.c.l.b16 %v602
      %v633 = vunpack.c.l.b16 %v606
      %v634 = vunpack.c.l.b16 %v610
      %v635 = vunpack.c.l.b16 %v614
      %v636 = vunpack.c.l.b16 %v618
      %v637 = vunpack.c.l.b16 %v622
      %v638 = vunpack.c.l.b16 %v626
      %v639 = vpack.c.b16 %v632, %v631
      %v640 = vpack.c.b16 %v634, %v633
      %v641 = vpack.c.b16 %v636, %v635
      %v642 = vpack.c.b16 %v638, %v637
      %v644 = vsel %vm386, %v639, 0
      %v647 = vsel %vm386, %v640, 0
      %v650 = vsel %vm386, %v641, 0
      %v653 = vsel %vm386, %v642, 0
      %v656 = vsel %vm399, %v630, 0
      %658 = vmatprep.subr.bf16.mxu0 0
      %659 = vmatpush1.bf16.msra.mxu0 %v656
      %660 = vmatprep.subr.bf16.mxu0 0
      %661 = vmatpush1.bf16.msra.mxu0 0
      %662 = vmatprep.subr.bf16.mxu0 0
      %663 = vmatpush1.bf16.msra.mxu0 0
      %664 = vmatprep.subr.bf16.mxu0 0
      %665 = vmatpush1.bf16.msra.mxu0 0
      %666 = vmatprep.subr.bf16.mxu0 0
      %667 = vmatpush1.bf16.msra.mxu0 0
      %668 = vmatprep.subr.bf16.mxu0 0
      %669 = vmatpush1.bf16.msra.mxu0 0
      %670 = vmatprep.subr.bf16.mxu0 0
      %671 = vmatpush1.bf16.msra.mxu0 0
      %672 = vmatprep.subr.bf16.mxu0 0
      %673 = vmatpush1.bf16.msra.mxu0 0
      %674 = vmatprep.subr.bf16.mxu0 0
      %675 = vmatpush1.bf16.msra.mxu0 0
      %676 = vmatprep.subr.bf16.mxu0 0
      %677 = vmatpush1.bf16.msra.mxu0 0
      %678 = vmatprep.subr.bf16.mxu0 0
      %679 = vmatpush1.bf16.msra.mxu0 0
      %680 = vmatprep.subr.bf16.mxu0 0
      %681 = vmatpush1.bf16.msra.mxu0 0
      %682 = vmatprep.subr.bf16.mxu0 0
      %683 = vmatpush1.bf16.msra.mxu0 0
      %684 = vmatprep.subr.bf16.mxu0 0
      %685 = vmatpush1.bf16.msra.mxu0 0
      %686 = vmatprep.subr.bf16.mxu0 0
      %687 = vmatpush1.bf16.msra.mxu0 0
      %688 = vmatprep.subr.bf16.mxu0 0
      %689 = vmatpush1.bf16.msra.mxu0 0
      %690 = vmatprep.mubr.bf16.mxu0 0
      %691 = vmatmul.mubr.bf16.gmra.mrb[0].mxu0 %v644
      %v692 = vpop.f32.mrb[0].mxu0
      %v693 = vadd.f32 0.0, %v692
      %v694 = vpop.f32.mrb[0].mxu0
      %v695 = vpop.f32.mrb[0].mxu0
      %v696 = vadd.f32 0.0, %v695
      %v697 = vpop.f32.mrb[0].mxu0
      %698 = vmatprep.mubr.bf16.mxu0 0
      %699 = vmatmul.mubr.bf16.gmra.mrb[0].mxu0 %v647
      %v700 = vpop.f32.mrb[0].mxu0
      %v701 = vadd.f32 0.0, %v700
      %v702 = vpop.f32.mrb[0].mxu0
      %v703 = vpop.f32.mrb[0].mxu0
      %v704 = vadd.f32 0.0, %v703
      %v705 = vpop.f32.mrb[0].mxu0
      %706 = vmatprep.mubr.bf16.mxu0 0
      %707 = vmatmul.mubr.bf16.gmra.mrb[0].mxu0 %v650
      %v708 = vpop.f32.mrb[0].mxu0
      %v709 = vadd.f32 0.0, %v708
      %v710 = vpop.f32.mrb[0].mxu0
      %v711 = vpop.f32.mrb[0].mxu0
      %v712 = vadd.f32 0.0, %v711
      %v713 = vpop.f32.mrb[0].mxu0
      %714 = vmatprep.mubr.bf16.mxu0 0
      %715 = vmatmul.mubr.bf16.gmra.mrb[0].mxu0 %v653
      %v716 = vpop.f32.mrb[0].mxu0
      %v717 = vadd.f32 0.0, %v716
      %v718 = vpop.f32.mrb[0].mxu0
      %v719 = vpop.f32.mrb[0].mxu0
      %v720 = vadd.f32 0.0, %v719
      %v721 = vpop.f32.mrb[0].mxu0
      %722 = vdwg.mxu0
      %v723 = vadd.f32 %v538, %v693
      %v724 = vadd.f32 %v541, %v696
      %v725 = vadd.f32 %v546, %v701
      %v726 = vadd.f32 %v549, %v704
      %v727 = vadd.f32 %v554, %v709
      %v728 = vadd.f32 %v557, %v712
      %v729 = vadd.f32 %v562, %v717
      %v730 = vadd.f32 %v565, %v720
      %s731 = scalar_lea.vmem %s210, 8
      %v732 = vld [vmem:[%s731] sm:$0xf]
      %v733 = vld [vmem:[%s731 + $0x8] sm:$0xf]
      %v734 = vld [vmem:[%s731 + $0x10] sm:$0xf]
      %v735 = vld [vmem:[%s731 + $0x18] sm:$0xf]
      %v736 = vld [vmem:[%s731 + $0x20] sm:$0xf]
      %v737 = vld [vmem:[%s731 + $0x28] sm:$0xf]
      %v738 = vld [vmem:[%s731 + $0x30] sm:$0xf]
      %v739 = vld [vmem:[%s731 + $0x38] sm:$0xf]
      %s740 = sadd.s32 3, %s243
      %s741 = smul.addr %s740, 2
      %s742 = scalar_lea.vmem %s1, %s741
      %v743 = vld [vmem:[%s742] sm:$0x3]
      %v752 = vunpack.c.l.b16 %v732
      %v753 = vunpack.c.l.b16 %v733
      %v754 = vunpack.c.l.b16 %v734
      %v755 = vunpack.c.l.b16 %v735
      %v756 = vunpack.c.l.b16 %v736
      %v757 = vunpack.c.l.b16 %v737
      %v758 = vunpack.c.l.b16 %v738
      %v759 = vunpack.c.l.b16 %v739
      %v760 = vpack.c.b16 %v753, %v752
      %v761 = vpack.c.b16 %v755, %v754
      %v762 = vpack.c.b16 %v757, %v756
      %v763 = vpack.c.b16 %v759, %v758
      %v765 = vsel %vm386, %v760, 0
      %v768 = vsel %vm386, %v761, 0
      %v771 = vsel %vm386, %v762, 0
      %v774 = vsel %vm386, %v763, 0
      %v777 = vsel %vm399, %v743, 0
      %779 = vmatprep.subr.bf16.mxu0 0
      %780 = vmatpush1.bf16.msra.mxu0 %v777
      %781 = vmatprep.subr.bf16.mxu0 0
      %782 = vmatpush1.bf16.msra.mxu0 0
      %783 = vmatprep.subr.bf16.mxu0 0
      %784 = vmatpush1.bf16.msra.mxu0 0
      %785 = vmatprep.subr.bf16.mxu0 0
      %786 = vmatpush1.bf16.msra.mxu0 0
      %787 = vmatprep.subr.bf16.mxu0 0
      %788 = vmatpush1.bf16.msra.mxu0 0
      %789 = vmatprep.subr.bf16.mxu0 0
      %790 = vmatpush1.bf16.msra.mxu0 0
      %791 = vmatprep.subr.bf16.mxu0 0
      %792 = vmatpush1.bf16.msra.mxu0 0
      %793 = vmatprep.subr.bf16.mxu0 0
      %794 = vmatpush1.bf16.msra.mxu0 0
      %795 = vmatprep.subr.bf16.mxu0 0
      %796 = vmatpush1.bf16.msra.mxu0 0
      %797 = vmatprep.subr.bf16.mxu0 0
      %798 = vmatpush1.bf16.msra.mxu0 0
      %799 = vmatprep.subr.bf16.mxu0 0
      %800 = vmatpush1.bf16.msra.mxu0 0
      %801 = vmatprep.subr.bf16.mxu0 0
      %802 = vmatpush1.bf16.msra.mxu0 0
      %803 = vmatprep.subr.bf16.mxu0 0
      %804 = vmatpush1.bf16.msra.mxu0 0
      %805 = vmatprep.subr.bf16.mxu0 0
      %806 = vmatpush1.bf16.msra.mxu0 0
      %807 = vmatprep.subr.bf16.mxu0 0
      %808 = vmatpush1.bf16.msra.mxu0 0
      %809 = vmatprep.subr.bf16.mxu0 0
      %810 = vmatpush1.bf16.msra.mxu0 0
      %811 = vmatprep.mubr.bf16.mxu0 0
      %812 = vmatmul.mubr.bf16.gmra.mrb[0].mxu0 %v765
      %v813 = vpop.f32.mrb[0].mxu0
      %v814 = vadd.f32 0.0, %v813
      %v815 = vpop.f32.mrb[0].mxu0
      %v816 = vpop.f32.mrb[0].mxu0
      %v817 = vadd.f32 0.0, %v816
      %v818 = vpop.f32.mrb[0].mxu0
      %819 = vmatprep.mubr.bf16.mxu0 0
      %820 = vmatmul.mubr.bf16.gmra.mrb[0].mxu0 %v768
      %v821 = vpop.f32.mrb[0].mxu0
      %v822 = vadd.f32 0.0, %v821
      %v823 = vpop.f32.mrb[0].mxu0
      %v824 = vpop.f32.mrb[0].mxu0
      %v825 = vadd.f32 0.0, %v824
      %v826 = vpop.f32.mrb[0].mxu0
      %827 = vmatprep.mubr.bf16.mxu0 0
      %828 = vmatmul.mubr.bf16.gmra.mrb[0].mxu0 %v771
      %v829 = vpop.f32.mrb[0].mxu0
      %v830 = vadd.f32 0.0, %v829
      %v831 = vpop.f32.mrb[0].mxu0
      %v832 = vpop.f32.mrb[0].mxu0
      %v833 = vadd.f32 0.0, %v832
      %v834 = vpop.f32.mrb[0].mxu0
      %835 = vmatprep.mubr.bf16.mxu0 0
      %836 = vmatmul.mubr.bf16.gmra.mrb[0].mxu0 %v774
      %v837 = vpop.f32.mrb[0].mxu0
      %v838 = vadd.f32 0.0, %v837
      %v839 = vpop.f32.mrb[0].mxu0
      %v840 = vpop.f32.mrb[0].mxu0
      %v841 = vadd.f32 0.0, %v840
      %v842 = vpop.f32.mrb[0].mxu0
      %843 = vdwg.mxu0
      %v844 = vadd.f32 %v723, %v814
      %v845 = vadd.f32 %v724, %v817
      %v846 = vadd.f32 %v725, %v822
      %v847 = vadd.f32 %v726, %v825
      %v848 = vadd.f32 %v727, %v830
      %v849 = vadd.f32 %v728, %v833
      %v850 = vadd.f32 %v729, %v838
      %v851 = vadd.f32 %v730, %v841
      %v852 = vld [vmem:[%s731] sm:$0xf]
      %v853 = vld [vmem:[%s731 + $0x4] sm:$0x1]
      %v854 = vld [vmem:[%s731 + $0x8] sm:$0xf]
      %v855 = vld [vmem:[%s731 + $0xc] sm:$0x1]
      %v856 = vld [vmem:[%s731 + $0x10] sm:$0xf]
      %v857 = vld [vmem:[%s731 + $0x14] sm:$0x1]
      %v858 = vld [vmem:[%s731 + $0x18] sm:$0xf]
      %v859 = vld [vmem:[%s731 + $0x1c] sm:$0x1]
      %v860 = vld [vmem:[%s731 + $0x20] sm:$0xf]
      %v861 = vld [vmem:[%s731 + $0x24] sm:$0x1]
      %v862 = vld [vmem:[%s731 + $0x28] sm:$0xf]
      %v863 = vld [vmem:[%s731 + $0x2c] sm:$0x1]
      %v864 = vld [vmem:[%s731 + $0x30] sm:$0xf]
      %v865 = vld [vmem:[%s731 + $0x34] sm:$0x1]
      %v866 = vld [vmem:[%s731 + $0x38] sm:$0xf]
      %v867 = vld [vmem:[%s731 + $0x3c] sm:$0x1]
      %v869 = vshrl.u32 %v852, 16
      %v871 = vrot.slane %v869, 4
      %v872 = vshll.u32 %v852, 16
      %v874 = vrot.slane %v872, 5
      %v875 = vor.u32 %v871, %v874
      %v876 = vrot.slane %v875, 4
      %v878 = vshll.u32 %v853, 16
      %v880 = vrot.slane %v878, 5
      %v881 = vsel %vm257, %v876, %v880
      %v883 = vshrl.u32 %v854, 16
      %v885 = vrot.slane %v883, 4
      %v886 = vshll.u32 %v854, 16
      %v888 = vrot.slane %v886, 5
      %v889 = vor.u32 %v885, %v888
      %v890 = vrot.slane %v889, 4
      %v892 = vshll.u32 %v855, 16
      %v894 = vrot.slane %v892, 5
      %v895 = vsel %vm257, %v890, %v894
      %v897 = vshrl.u32 %v856, 16
      %v899 = vrot.slane %v897, 4
      %v900 = vshll.u32 %v856, 16
      %v902 = vrot.slane %v900, 5
      %v903 = vor.u32 %v899, %v902
      %v904 = vrot.slane %v903, 4
      %v906 = vshll.u32 %v857, 16
      %v908 = vrot.slane %v906, 5
      %v909 = vsel %vm257, %v904, %v908
      %v911 = vshrl.u32 %v858, 16
      %v913 = vrot.slane %v911, 4
      %v914 = vshll.u32 %v858, 16
      %v916 = vrot.slane %v914, 5
      %v917 = vor.u32 %v913, %v916
      %v918 = vrot.slane %v917, 4
      %v920 = vshll.u32 %v859, 16
      %v922 = vrot.slane %v920, 5
      %v923 = vsel %vm257, %v918, %v922
      %v925 = vshrl.u32 %v860, 16
      %v927 = vrot.slane %v925, 4
      %v928 = vshll.u32 %v860, 16
      %v930 = vrot.slane %v928, 5
      %v931 = vor.u32 %v927, %v930
      %v932 = vrot.slane %v931, 4
      %v934 = vshll.u32 %v861, 16
      %v936 = vrot.slane %v934, 5
      %v937 = vsel %vm257, %v932, %v936
      %v939 = vshrl.u32 %v862, 16
      %v941 = vrot.slane %v939, 4
      %v942 = vshll.u32 %v862, 16
      %v944 = vrot.slane %v942, 5
      %v945 = vor.u32 %v941, %v944
      %v946 = vrot.slane %v945, 4
      %v948 = vshll.u32 %v863, 16
      %v950 = vrot.slane %v948, 5
      %v951 = vsel %vm257, %v946, %v950
      %v953 = vshrl.u32 %v864, 16
      %v955 = vrot.slane %v953, 4
      %v956 = vshll.u32 %v864, 16
      %v958 = vrot.slane %v956, 5
      %v959 = vor.u32 %v955, %v958
      %v960 = vrot.slane %v959, 4
      %v962 = vshll.u32 %v865, 16
      %v964 = vrot.slane %v962, 5
      %v965 = vsel %vm257, %v960, %v964
      %v967 = vshrl.u32 %v866, 16
      %v969 = vrot.slane %v967, 4
      %v970 = vshll.u32 %v866, 16
      %v972 = vrot.slane %v970, 5
      %v973 = vor.u32 %v969, %v972
      %v974 = vrot.slane %v973, 4
      %v976 = vshll.u32 %v867, 16
      %v978 = vrot.slane %v976, 5
      %v979 = vsel %vm257, %v974, %v978
      %s980 = sadd.s32 4, %s243
      %s981 = smul.addr %s980, 2
      %s982 = scalar_lea.vmem %s1, %s981
      %v983 = vld [vmem:[%s982] sm:$0x3]
      %v984 = vunpack.c.l.b16 %v881
      %v985 = vunpack.c.l.b16 %v895
      %v986 = vunpack.c.l.b16 %v909
      %v987 = vunpack.c.l.b16 %v923
      %v988 = vunpack.c.l.b16 %v937
      %v989 = vunpack.c.l.b16 %v951
      %v990 = vunpack.c.l.b16 %v965
      %v991 = vunpack.c.l.b16 %v979
      %v992 = vpack.c.b16 %v985, %v984
      %v993 = vpack.c.b16 %v987, %v986
      %v994 = vpack.c.b16 %v989, %v988
      %v995 = vpack.c.b16 %v991, %v990
      %v997 = vsel %vm386, %v992, 0
      %v1000 = vsel %vm386, %v993, 0
      %v1003 = vsel %vm386, %v994, 0
      %v1006 = vsel %vm386, %v995, 0
      %v1009 = vsel %vm399, %v983, 0
      %1011 = vmatprep.subr.bf16.mxu0 0
      %1012 = vmatpush1.bf16.msra.mxu0 %v1009
      %1013 = vmatprep.subr.bf16.mxu0 0
      %1014 = vmatpush1.bf16.msra.mxu0 0
      %1015 = vmatprep.subr.bf16.mxu0 0
      %1016 = vmatpush1.bf16.msra.mxu0 0
      %1017 = vmatprep.subr.bf16.mxu0 0
      %1018 = vmatpush1.bf16.msra.mxu0 0
      %1019 = vmatprep.subr.bf16.mxu0 0
      %1020 = vmatpush1.bf16.msra.mxu0 0
      %1021 = vmatprep.subr.bf16.mxu0 0
      %1022 = vmatpush1.bf16.msra.mxu0 0
      %1023 = vmatprep.subr.bf16.mxu0 0
      %1024 = vmatpush1.bf16.msra.mxu0 0
      %1025 = vmatprep.subr.bf16.mxu0 0
      %1026 = vmatpush1.bf16.msra.mxu0 0
      %1027 = vmatprep.subr.bf16.mxu0 0
      %1028 = vmatpush1.bf16.msra.mxu0 0
      %1029 = vmatprep.subr.bf16.mxu0 0
      %1030 = vmatpush1.bf16.msra.mxu0 0
      %1031 = vmatprep.subr.bf16.mxu0 0
      %1032 = vmatpush1.bf16.msra.mxu0 0
      %1033 = vmatprep.subr.bf16.mxu0 0
      %1034 = vmatpush1.bf16.msra.mxu0 0
      %1035 = vmatprep.subr.bf16.mxu0 0
      %1036 = vmatpush1.bf16.msra.mxu0 0
      %1037 = vmatprep.subr.bf16.mxu0 0
      %1038 = vmatpush1.bf16.msra.mxu0 0
      %1039 = vmatprep.subr.bf16.mxu0 0
      %1040 = vmatpush1.bf16.msra.mxu0 0
      %1041 = vmatprep.subr.bf16.mxu0 0
      %1042 = vmatpush1.bf16.msra.mxu0 0
      %1043 = vmatprep.mubr.bf16.mxu0 0
      %1044 = vmatmul.mubr.bf16.gmra.mrb[0].mxu0 %v997
      %v1045 = vpop.f32.mrb[0].mxu0
      %v1046 = vadd.f32 0.0, %v1045
      %v1047 = vpop.f32.mrb[0].mxu0
      %v1048 = vpop.f32.mrb[0].mxu0
      %v1049 = vadd.f32 0.0, %v1048
      %v1050 = vpop.f32.mrb[0].mxu0
      %1051 = vmatprep.mubr.bf16.mxu0 0
      %1052 = vmatmul.mubr.bf16.gmra.mrb[0].mxu0 %v1000
      %v1053 = vpop.f32.mrb[0].mxu0
      %v1054 = vadd.f32 0.0, %v1053
      %v1055 = vpop.f32.mrb[0].mxu0
      %v1056 = vpop.f32.mrb[0].mxu0
      %v1057 = vadd.f32 0.0, %v1056
      %v1058 = vpop.f32.mrb[0].mxu0
      %1059 = vmatprep.mubr.bf16.mxu0 0
      %1060 = vmatmul.mubr.bf16.gmra.mrb[0].mxu0 %v1003
      %v1061 = vpop.f32.mrb[0].mxu0
      %v1062 = vadd.f32 0.0, %v1061
      %v1063 = vpop.f32.mrb[0].mxu0
      %v1064 = vpop.f32.mrb[0].mxu0
      %v1065 = vadd.f32 0.0, %v1064
      %v1066 = vpop.f32.mrb[0].mxu0
      %1067 = vmatprep.mubr.bf16.mxu0 0
      %1068 = vmatmul.mubr.bf16.gmra.mrb[0].mxu0 %v1006
      %v1069 = vpop.f32.mrb[0].mxu0
      %v1070 = vadd.f32 0.0, %v1069
      %v1071 = vpop.f32.mrb[0].mxu0
      %v1072 = vpop.f32.mrb[0].mxu0
      %v1073 = vadd.f32 0.0, %v1072
      %v1074 = vpop.f32.mrb[0].mxu0
      %1075 = vdwg.mxu0
      %v1076 = vadd.f32 %v844, %v1046
      %v1077 = vadd.f32 %v845, %v1049
      %v1078 = vadd.f32 %v846, %v1054
      %v1079 = vadd.f32 %v847, %v1057
      %v1080 = vadd.f32 %v848, %v1062
      %v1081 = vadd.f32 %v849, %v1065
      %v1082 = vadd.f32 %v850, %v1070
      %v1083 = vadd.f32 %v851, %v1073
      %v1084 = vld [vmem:[%s731] sm:$0xe]
      %v1085 = vld [vmem:[%s731 + $0x8] sm:$0xe]
      %v1086 = vld [vmem:[%s731 + $0x10] sm:$0xe]
      %v1087 = vld [vmem:[%s731 + $0x18] sm:$0xe]
      %v1088 = vld [vmem:[%s731 + $0x20] sm:$0xe]
      %v1089 = vld [vmem:[%s731 + $0x28] sm:$0xe]
      %v1090 = vld [vmem:[%s731 + $0x30] sm:$0xe]
      %v1091 = vld [vmem:[%s731 + $0x38] sm:$0xe]
      %v1108 = vrot.slane %v1084, 5
      %v1109 = vrot.slane %v1108, 4
      %v1110 = vrot.slane %v853, 5
      %v1111 = vsel %vm594, %v1109, %v1110
      %v1112 = vrot.slane %v1085, 5
      %v1113 = vrot.slane %v1112, 4
      %v1114 = vrot.slane %v855, 5
      %v1115 = vsel %vm594, %v1113, %v1114
      %v1116 = vrot.slane %v1086, 5
      %v1117 = vrot.slane %v1116, 4
      %v1118 = vrot.slane %v857, 5
      %v1119 = vsel %vm594, %v1117, %v1118
      %v1120 = vrot.slane %v1087, 5
      %v1121 = vrot.slane %v1120, 4
      %v1122 = vrot.slane %v859, 5
      %v1123 = vsel %vm594, %v1121, %v1122
      %v1124 = vrot.slane %v1088, 5
      %v1125 = vrot.slane %v1124, 4
      %v1126 = vrot.slane %v861, 5
      %v1127 = vsel %vm594, %v1125, %v1126
      %v1128 = vrot.slane %v1089, 5
      %v1129 = vrot.slane %v1128, 4
      %v1130 = vrot.slane %v863, 5
      %v1131 = vsel %vm594, %v1129, %v1130
      %v1132 = vrot.slane %v1090, 5
      %v1133 = vrot.slane %v1132, 4
      %v1134 = vrot.slane %v865, 5
      %v1135 = vsel %vm594, %v1133, %v1134
      %v1136 = vrot.slane %v1091, 5
      %v1137 = vrot.slane %v1136, 4
      %v1138 = vrot.slane %v867, 5
      %v1139 = vsel %vm594, %v1137, %v1138
      %s1140 = sadd.s32 5, %s243
      %s1141 = smul.addr %s1140, 2
      %s1142 = scalar_lea.vmem %s1, %s1141
      %v1143 = vld [vmem:[%s1142] sm:$0x3]
      %v1144 = vunpack.c.l.b16 %v1111
      %v1145 = vunpack.c.l.b16 %v1115
      %v1146 = vunpack.c.l.b16 %v1119
      %v1147 = vunpack.c.l.b16 %v1123
      %v1148 = vunpack.c.l.b16 %v1127
      %v1149 = vunpack.c.l.b16 %v1131
      %v1150 = vunpack.c.l.b16 %v1135
      %v1151 = vunpack.c.l.b16 %v1139
      %v1152 = vpack.c.b16 %v1145, %v1144
      %v1153 = vpack.c.b16 %v1147, %v1146
      %v1154 = vpack.c.b16 %v1149, %v1148
      %v1155 = vpack.c.b16 %v1151, %v1150
      %v1157 = vsel %vm386, %v1152, 0
      %v1160 = vsel %vm386, %v1153, 0
      %v1163 = vsel %vm386, %v1154, 0
      %v1166 = vsel %vm386, %v1155, 0
      %v1169 = vsel %vm399, %v1143, 0
      %1171 = vmatprep.subr.bf16.mxu0 0
      %1172 = vmatpush1.bf16.msra.mxu0 %v1169
      %1173 = vmatprep.subr.bf16.mxu0 0
      %1174 = vmatpush1.bf16.msra.mxu0 0
      %1175 = vmatprep.subr.bf16.mxu0 0
      %1176 = vmatpush1.bf16.msra.mxu0 0
      %1177 = vmatprep.subr.bf16.mxu0 0
      %1178 = vmatpush1.bf16.msra.mxu0 0
      %1179 = vmatprep.subr.bf16.mxu0 0
      %1180 = vmatpush1.bf16.msra.mxu0 0
      %1181 = vmatprep.subr.bf16.mxu0 0
      %1182 = vmatpush1.bf16.msra.mxu0 0
      %1183 = vmatprep.subr.bf16.mxu0 0
      %1184 = vmatpush1.bf16.msra.mxu0 0
      %1185 = vmatprep.subr.bf16.mxu0 0
      %1186 = vmatpush1.bf16.msra.mxu0 0
      %1187 = vmatprep.subr.bf16.mxu0 0
      %1188 = vmatpush1.bf16.msra.mxu0 0
      %1189 = vmatprep.subr.bf16.mxu0 0
      %1190 = vmatpush1.bf16.msra.mxu0 0
      %1191 = vmatprep.subr.bf16.mxu0 0
      %1192 = vmatpush1.bf16.msra.mxu0 0
      %1193 = vmatprep.subr.bf16.mxu0 0
      %1194 = vmatpush1.bf16.msra.mxu0 0
      %1195 = vmatprep.subr.bf16.mxu0 0
      %1196 = vmatpush1.bf16.msra.mxu0 0
      %1197 = vmatprep.subr.bf16.mxu0 0
      %1198 = vmatpush1.bf16.msra.mxu0 0
      %1199 = vmatprep.subr.bf16.mxu0 0
      %1200 = vmatpush1.bf16.msra.mxu0 0
      %1201 = vmatprep.subr.bf16.mxu0 0
      %1202 = vmatpush1.bf16.msra.mxu0 0
      %1203 = vmatprep.mubr.bf16.mxu0 0
      %1204 = vmatmul.mubr.bf16.gmra.mrb[0].mxu0 %v1157
      %v1205 = vpop.f32.mrb[0].mxu0
      %v1206 = vadd.f32 0.0, %v1205
      %v1207 = vpop.f32.mrb[0].mxu0
      %v1208 = vpop.f32.mrb[0].mxu0
      %v1209 = vadd.f32 0.0, %v1208
      %v1210 = vpop.f32.mrb[0].mxu0
      %1211 = vmatprep.mubr.bf16.mxu0 0
      %1212 = vmatmul.mubr.bf16.gmra.mrb[0].mxu0 %v1160
      %v1213 = vpop.f32.mrb[0].mxu0
      %v1214 = vadd.f32 0.0, %v1213
      %v1215 = vpop.f32.mrb[0].mxu0
      %v1216 = vpop.f32.mrb[0].mxu0
      %v1217 = vadd.f32 0.0, %v1216
      %v1218 = vpop.f32.mrb[0].mxu0
      %1219 = vmatprep.mubr.bf16.mxu0 0
      %1220 = vmatmul.mubr.bf16.gmra.mrb[0].mxu0 %v1163
      %v1221 = vpop.f32.mrb[0].mxu0
      %v1222 = vadd.f32 0.0, %v1221
      %v1223 = vpop.f32.mrb[0].mxu0
      %v1224 = vpop.f32.mrb[0].mxu0
      %v1225 = vadd.f32 0.0, %v1224
      %v1226 = vpop.f32.mrb[0].mxu0
      %1227 = vmatprep.mubr.bf16.mxu0 0
      %1228 = vmatmul.mubr.bf16.gmra.mrb[0].mxu0 %v1166
      %v1229 = vpop.f32.mrb[0].mxu0
      %v1230 = vadd.f32 0.0, %v1229
      %v1231 = vpop.f32.mrb[0].mxu0
      %v1232 = vpop.f32.mrb[0].mxu0
      %v1233 = vadd.f32 0.0, %v1232
      %v1234 = vpop.f32.mrb[0].mxu0
      %1235 = vdwg.mxu0
      %v1236 = vadd.f32 %v1076, %v1206
      %v1237 = vadd.f32 %v1077, %v1209
      %v1238 = vadd.f32 %v1078, %v1214
      %v1239 = vadd.f32 %v1079, %v1217
      %v1240 = vadd.f32 %v1080, %v1222
      %v1241 = vadd.f32 %v1081, %v1225
      %v1242 = vadd.f32 %v1082, %v1230
      %v1243 = vadd.f32 %v1083, %v1233
      %s1244 = scalar_lea.vmem %s210, 16
      %v1245 = vld [vmem:[%s1244] sm:$0xf]
      %v1246 = vld [vmem:[%s1244 + $0x8] sm:$0xf]
      %v1247 = vld [vmem:[%s1244 + $0x10] sm:$0xf]
      %v1248 = vld [vmem:[%s1244 + $0x18] sm:$0xf]
      %v1249 = vld [vmem:[%s1244 + $0x20] sm:$0xf]
      %v1250 = vld [vmem:[%s1244 + $0x28] sm:$0xf]
      %v1251 = vld [vmem:[%s1244 + $0x30] sm:$0xf]
      %v1252 = vld [vmem:[%s1244 + $0x38] sm:$0xf]
      %s1253 = sadd.s32 6, %s243
      %s1254 = smul.addr %s1253, 2
      %s1255 = scalar_lea.vmem %s1, %s1254
      %v1256 = vld [vmem:[%s1255] sm:$0x3]
      %v1265 = vunpack.c.l.b16 %v1245
      %v1266 = vunpack.c.l.b16 %v1246
      %v1267 = vunpack.c.l.b16 %v1247
      %v1268 = vunpack.c.l.b16 %v1248
      %v1269 = vunpack.c.l.b16 %v1249
      %v1270 = vunpack.c.l.b16 %v1250
      %v1271 = vunpack.c.l.b16 %v1251
      %v1272 = vunpack.c.l.b16 %v1252
      %v1273 = vpack.c.b16 %v1266, %v1265
      %v1274 = vpack.c.b16 %v1268, %v1267
      %v1275 = vpack.c.b16 %v1270, %v1269
      %v1276 = vpack.c.b16 %v1272, %v1271
      %v1278 = vsel %vm386, %v1273, 0
      %v1281 = vsel %vm386, %v1274, 0
      %v1284 = vsel %vm386, %v1275, 0
      %v1287 = vsel %vm386, %v1276, 0
      %v1290 = vsel %vm399, %v1256, 0
      %1292 = vmatprep.subr.bf16.mxu0 0
      %1293 = vmatpush1.bf16.msra.mxu0 %v1290
      %1294 = vmatprep.subr.bf16.mxu0 0
      %1295 = vmatpush1.bf16.msra.mxu0 0
      %1296 = vmatprep.subr.bf16.mxu0 0
      %1297 = vmatpush1.bf16.msra.mxu0 0
      %1298 = vmatprep.subr.bf16.mxu0 0
      %1299 = vmatpush1.bf16.msra.mxu0 0
      %1300 = vmatprep.subr.bf16.mxu0 0
      %1301 = vmatpush1.bf16.msra.mxu0 0
      %1302 = vmatprep.subr.bf16.mxu0 0
      %1303 = vmatpush1.bf16.msra.mxu0 0
      %1304 = vmatprep.subr.bf16.mxu0 0
      %1305 = vmatpush1.bf16.msra.mxu0 0
      %1306 = vmatprep.subr.bf16.mxu0 0
      %1307 = vmatpush1.bf16.msra.mxu0 0
      %1308 = vmatprep.subr.bf16.mxu0 0
      %1309 = vmatpush1.bf16.msra.mxu0 0
      %1310 = vmatprep.subr.bf16.mxu0 0
      %1311 = vmatpush1.bf16.msra.mxu0 0
      %1312 = vmatprep.subr.bf16.mxu0 0
      %1313 = vmatpush1.bf16.msra.mxu0 0
      %1314 = vmatprep.subr.bf16.mxu0 0
      %1315 = vmatpush1.bf16.msra.mxu0 0
      %1316 = vmatprep.subr.bf16.mxu0 0
      %1317 = vmatpush1.bf16.msra.mxu0 0
      %1318 = vmatprep.subr.bf16.mxu0 0
      %1319 = vmatpush1.bf16.msra.mxu0 0
      %1320 = vmatprep.subr.bf16.mxu0 0
      %1321 = vmatpush1.bf16.msra.mxu0 0
      %1322 = vmatprep.subr.bf16.mxu0 0
      %1323 = vmatpush1.bf16.msra.mxu0 0
      %1324 = vmatprep.mubr.bf16.mxu0 0
      %1325 = vmatmul.mubr.bf16.gmra.mrb[0].mxu0 %v1278
      %v1326 = vpop.f32.mrb[0].mxu0
      %v1327 = vadd.f32 0.0, %v1326
      %v1328 = vpop.f32.mrb[0].mxu0
      %v1329 = vpop.f32.mrb[0].mxu0
      %v1330 = vadd.f32 0.0, %v1329
      %v1331 = vpop.f32.mrb[0].mxu0
      %1332 = vmatprep.mubr.bf16.mxu0 0
      %1333 = vmatmul.mubr.bf16.gmra.mrb[0].mxu0 %v1281
      %v1334 = vpop.f32.mrb[0].mxu0
      %v1335 = vadd.f32 0.0, %v1334
      %v1336 = vpop.f32.mrb[0].mxu0
      %v1337 = vpop.f32.mrb[0].mxu0
      %v1338 = vadd.f32 0.0, %v1337
      %v1339 = vpop.f32.mrb[0].mxu0
      %1340 = vmatprep.mubr.bf16.mxu0 0
      %1341 = vmatmul.mubr.bf16.gmra.mrb[0].mxu0 %v1284
      %v1342 = vpop.f32.mrb[0].mxu0
      %v1343 = vadd.f32 0.0, %v1342
      %v1344 = vpop.f32.mrb[0].mxu0
      %v1345 = vpop.f32.mrb[0].mxu0
      %v1346 = vadd.f32 0.0, %v1345
      %v1347 = vpop.f32.mrb[0].mxu0
      %1348 = vmatprep.mubr.bf16.mxu0 0
      %1349 = vmatmul.mubr.bf16.gmra.mrb[0].mxu0 %v1287
      %v1350 = vpop.f32.mrb[0].mxu0
      %v1351 = vadd.f32 0.0, %v1350
      %v1352 = vpop.f32.mrb[0].mxu0
      %v1353 = vpop.f32.mrb[0].mxu0
      %v1354 = vadd.f32 0.0, %v1353
      %v1355 = vpop.f32.mrb[0].mxu0
      %1356 = vdwg.mxu0
      %v1357 = vadd.f32 %v1236, %v1327
      %v1358 = vadd.f32 %v1237, %v1330
      %v1359 = vadd.f32 %v1238, %v1335
      %v1360 = vadd.f32 %v1239, %v1338
      %v1361 = vadd.f32 %v1240, %v1343
      %v1362 = vadd.f32 %v1241, %v1346
      %v1363 = vadd.f32 %v1242, %v1351
      %v1364 = vadd.f32 %v1243, %v1354
      %v1365 = vld [vmem:[%s1244] sm:$0xf]
      %v1366 = vld [vmem:[%s1244 + $0x4] sm:$0x1]
      %v1367 = vld [vmem:[%s1244 + $0x8] sm:$0xf]
      %v1368 = vld [vmem:[%s1244 + $0xc] sm:$0x1]
      %v1369 = vld [vmem:[%s1244 + $0x10] sm:$0xf]
      %v1370 = vld [vmem:[%s1244 + $0x14] sm:$0x1]
      %v1371 = vld [vmem:[%s1244 + $0x18] sm:$0xf]
      %v1372 = vld [vmem:[%s1244 + $0x1c] sm:$0x1]
      %v1373 = vld [vmem:[%s1244 + $0x20] sm:$0xf]
      %v1374 = vld [vmem:[%s1244 + $0x24] sm:$0x1]
      %v1375 = vld [vmem:[%s1244 + $0x28] sm:$0xf]
      %v1376 = vld [vmem:[%s1244 + $0x2c] sm:$0x1]
      %v1377 = vld [vmem:[%s1244 + $0x30] sm:$0xf]
      %v1378 = vld [vmem:[%s1244 + $0x34] sm:$0x1]
      %v1379 = vld [vmem:[%s1244 + $0x38] sm:$0xf]
      %v1380 = vld [vmem:[%s1244 + $0x3c] sm:$0x1]
      %v1382 = vshrl.u32 %v1365, 16
      %v1384 = vrot.slane %v1382, 4
      %v1385 = vshll.u32 %v1365, 16
      %v1387 = vrot.slane %v1385, 5
      %v1388 = vor.u32 %v1384, %v1387
      %v1389 = vrot.slane %v1388, 4
      %v1391 = vshll.u32 %v1366, 16
      %v1393 = vrot.slane %v1391, 5
      %v1394 = vsel %vm257, %v1389, %v1393
      %v1396 = vshrl.u32 %v1367, 16
      %v1398 = vrot.slane %v1396, 4
      %v1399 = vshll.u32 %v1367, 16
      %v1401 = vrot.slane %v1399, 5
      %v1402 = vor.u32 %v1398, %v1401
      %v1403 = vrot.slane %v1402, 4
      %v1405 = vshll.u32 %v1368, 16
      %v1407 = vrot.slane %v1405, 5
      %v1408 = vsel %vm257, %v1403, %v1407
      %v1410 = vshrl.u32 %v1369, 16
      %v1412 = vrot.slane %v1410, 4
      %v1413 = vshll.u32 %v1369, 16
      %v1415 = vrot.slane %v1413, 5
      %v1416 = vor.u32 %v1412, %v1415
      %v1417 = vrot.slane %v1416, 4
      %v1419 = vshll.u32 %v1370, 16
      %v1421 = vrot.slane %v1419, 5
      %v1422 = vsel %vm257, %v1417, %v1421
      %v1424 = vshrl.u32 %v1371, 16
      %v1426 = vrot.slane %v1424, 4
      %v1427 = vshll.u32 %v1371, 16
      %v1429 = vrot.slane %v1427, 5
      %v1430 = vor.u32 %v1426, %v1429
      %v1431 = vrot.slane %v1430, 4
      %v1433 = vshll.u32 %v1372, 16
      %v1435 = vrot.slane %v1433, 5
      %v1436 = vsel %vm257, %v1431, %v1435
      %v1438 = vshrl.u32 %v1373, 16
      %v1440 = vrot.slane %v1438, 4
      %v1441 = vshll.u32 %v1373, 16
      %v1443 = vrot.slane %v1441, 5
      %v1444 = vor.u32 %v1440, %v1443
      %v1445 = vrot.slane %v1444, 4
      %v1447 = vshll.u32 %v1374, 16
      %v1449 = vrot.slane %v1447, 5
      %v1450 = vsel %vm257, %v1445, %v1449
      %v1452 = vshrl.u32 %v1375, 16
      %v1454 = vrot.slane %v1452, 4
      %v1455 = vshll.u32 %v1375, 16
      %v1457 = vrot.slane %v1455, 5
      %v1458 = vor.u32 %v1454, %v1457
      %v1459 = vrot.slane %v1458, 4
      %v1461 = vshll.u32 %v1376, 16
      %v1463 = vrot.slane %v1461, 5
      %v1464 = vsel %vm257, %v1459, %v1463
      %v1466 = vshrl.u32 %v1377, 16
      %v1468 = vrot.slane %v1466, 4
      %v1469 = vshll.u32 %v1377, 16
      %v1471 = vrot.slane %v1469, 5
      %v1472 = vor.u32 %v1468, %v1471
      %v1473 = vrot.slane %v1472, 4
      %v1475 = vshll.u32 %v1378, 16
      %v1477 = vrot.slane %v1475, 5
      %v1478 = vsel %vm257, %v1473, %v1477
      %v1480 = vshrl.u32 %v1379, 16
      %v1482 = vrot.slane %v1480, 4
      %v1483 = vshll.u32 %v1379, 16
      %v1485 = vrot.slane %v1483, 5
      %v1486 = vor.u32 %v1482, %v1485
      %v1487 = vrot.slane %v1486, 4
      %v1489 = vshll.u32 %v1380, 16
      %v1491 = vrot.slane %v1489, 5
      %v1492 = vsel %vm257, %v1487, %v1491
      %s1493 = sadd.s32 7, %s243
      %s1494 = smul.addr %s1493, 2
      %s1495 = scalar_lea.vmem %s1, %s1494
      %v1496 = vld [vmem:[%s1495] sm:$0x3]
      %v1497 = vunpack.c.l.b16 %v1394
      %v1498 = vunpack.c.l.b16 %v1408
      %v1499 = vunpack.c.l.b16 %v1422
      %v1500 = vunpack.c.l.b16 %v1436
      %v1501 = vunpack.c.l.b16 %v1450
      %v1502 = vunpack.c.l.b16 %v1464
      %v1503 = vunpack.c.l.b16 %v1478
      %v1504 = vunpack.c.l.b16 %v1492
      %v1505 = vpack.c.b16 %v1498, %v1497
      %v1506 = vpack.c.b16 %v1500, %v1499
      %v1507 = vpack.c.b16 %v1502, %v1501
      %v1508 = vpack.c.b16 %v1504, %v1503
      %v1510 = vsel %vm386, %v1505, 0
      %v1513 = vsel %vm386, %v1506, 0
      %v1516 = vsel %vm386, %v1507, 0
      %v1519 = vsel %vm386, %v1508, 0
      %v1522 = vsel %vm399, %v1496, 0
      %1524 = vmatprep.subr.bf16.mxu0 0
      %1525 = vmatpush1.bf16.msra.mxu0 %v1522
      %1526 = vmatprep.subr.bf16.mxu0 0
      %1527 = vmatpush1.bf16.msra.mxu0 0
      %1528 = vmatprep.subr.bf16.mxu0 0
      %1529 = vmatpush1.bf16.msra.mxu0 0
      %1530 = vmatprep.subr.bf16.mxu0 0
      %1531 = vmatpush1.bf16.msra.mxu0 0
      %1532 = vmatprep.subr.bf16.mxu0 0
      %1533 = vmatpush1.bf16.msra.mxu0 0
      %1534 = vmatprep.subr.bf16.mxu0 0
      %1535 = vmatpush1.bf16.msra.mxu0 0
      %1536 = vmatprep.subr.bf16.mxu0 0
      %1537 = vmatpush1.bf16.msra.mxu0 0
      %1538 = vmatprep.subr.bf16.mxu0 0
      %1539 = vmatpush1.bf16.msra.mxu0 0
      %1540 = vmatprep.subr.bf16.mxu0 0
      %1541 = vmatpush1.bf16.msra.mxu0 0
      %1542 = vmatprep.subr.bf16.mxu0 0
      %1543 = vmatpush1.bf16.msra.mxu0 0
      %1544 = vmatprep.subr.bf16.mxu0 0
      %1545 = vmatpush1.bf16.msra.mxu0 0
      %1546 = vmatprep.subr.bf16.mxu0 0
      %1547 = vmatpush1.bf16.msra.mxu0 0
      %1548 = vmatprep.subr.bf16.mxu0 0
      %1549 = vmatpush1.bf16.msra.mxu0 0
      %1550 = vmatprep.subr.bf16.mxu0 0
      %1551 = vmatpush1.bf16.msra.mxu0 0
      %1552 = vmatprep.subr.bf16.mxu0 0
      %1553 = vmatpush1.bf16.msra.mxu0 0
      %1554 = vmatprep.subr.bf16.mxu0 0
      %1555 = vmatpush1.bf16.msra.mxu0 0
      %1556 = vmatprep.mubr.bf16.mxu0 0
      %1557 = vmatmul.mubr.bf16.gmra.mrb[0].mxu0 %v1510
      %v1558 = vpop.f32.mrb[0].mxu0
      %v1559 = vadd.f32 0.0, %v1558
      %v1560 = vpop.f32.mrb[0].mxu0
      %v1561 = vpop.f32.mrb[0].mxu0
      %v1562 = vadd.f32 0.0, %v1561
      %v1563 = vpop.f32.mrb[0].mxu0
      %1564 = vmatprep.mubr.bf16.mxu0 0
      %1565 = vmatmul.mubr.bf16.gmra.mrb[0].mxu0 %v1513
      %v1566 = vpop.f32.mrb[0].mxu0
      %v1567 = vadd.f32 0.0, %v1566
      %v1568 = vpop.f32.mrb[0].mxu0
      %v1569 = vpop.f32.mrb[0].mxu0
      %v1570 = vadd.f32 0.0, %v1569
      %v1571 = vpop.f32.mrb[0].mxu0
      %1572 = vmatprep.mubr.bf16.mxu0 0
      %1573 = vmatmul.mubr.bf16.gmra.mrb[0].mxu0 %v1516
      %v1574 = vpop.f32.mrb[0].mxu0
      %v1575 = vadd.f32 0.0, %v1574
      %v1576 = vpop.f32.mrb[0].mxu0
      %v1577 = vpop.f32.mrb[0].mxu0
      %v1578 = vadd.f32 0.0, %v1577
      %v1579 = vpop.f32.mrb[0].mxu0
      %1580 = vmatprep.mubr.bf16.mxu0 0
      %1581 = vmatmul.mubr.bf16.gmra.mrb[0].mxu0 %v1519
      %v1582 = vpop.f32.mrb[0].mxu0
      %v1583 = vadd.f32 0.0, %v1582
      %v1584 = vpop.f32.mrb[0].mxu0
      %v1585 = vpop.f32.mrb[0].mxu0
      %v1586 = vadd.f32 0.0, %v1585
      %v1587 = vpop.f32.mrb[0].mxu0
      %1588 = vdwg.mxu0
      %v1589 = vadd.f32 %v1357, %v1559
      %v1590 = vadd.f32 %v1358, %v1562
      %v1591 = vadd.f32 %v1359, %v1567
      %v1592 = vadd.f32 %v1360, %v1570
      %v1593 = vadd.f32 %v1361, %v1575
      %v1594 = vadd.f32 %v1362, %v1578
      %v1595 = vadd.f32 %v1363, %v1583
      %v1596 = vadd.f32 %v1364, %v1586
      %v1597 = vld [vmem:[%s1244] sm:$0xe]
      %v1598 = vld [vmem:[%s1244 + $0x8] sm:$0xe]
      %v1599 = vld [vmem:[%s1244 + $0x10] sm:$0xe]
      %v1600 = vld [vmem:[%s1244 + $0x18] sm:$0xe]
      %v1601 = vld [vmem:[%s1244 + $0x20] sm:$0xe]
      %v1602 = vld [vmem:[%s1244 + $0x28] sm:$0xe]
      %v1603 = vld [vmem:[%s1244 + $0x30] sm:$0xe]
      %v1604 = vld [vmem:[%s1244 + $0x38] sm:$0xe]
      %v1621 = vrot.slane %v1597, 5
      %v1622 = vrot.slane %v1621, 4
      %v1623 = vrot.slane %v1366, 5
      %v1624 = vsel %vm594, %v1622, %v1623
      %v1625 = vrot.slane %v1598, 5
      %v1626 = vrot.slane %v1625, 4
      %v1627 = vrot.slane %v1368, 5
      %v1628 = vsel %vm594, %v1626, %v1627
      %v1629 = vrot.slane %v1599, 5
      %v1630 = vrot.slane %v1629, 4
      %v1631 = vrot.slane %v1370, 5
      %v1632 = vsel %vm594, %v1630, %v1631
      %v1633 = vrot.slane %v1600, 5
      %v1634 = vrot.slane %v1633, 4
      %v1635 = vrot.slane %v1372, 5
      %v1636 = vsel %vm594, %v1634, %v1635
      %v1637 = vrot.slane %v1601, 5
      %v1638 = vrot.slane %v1637, 4
      %v1639 = vrot.slane %v1374, 5
      %v1640 = vsel %vm594, %v1638, %v1639
      %v1641 = vrot.slane %v1602, 5
      %v1642 = vrot.slane %v1641, 4
      %v1643 = vrot.slane %v1376, 5
      %v1644 = vsel %vm594, %v1642, %v1643
      %v1645 = vrot.slane %v1603, 5
      %v1646 = vrot.slane %v1645, 4
      %v1647 = vrot.slane %v1378, 5
      %v1648 = vsel %vm594, %v1646, %v1647
      %v1649 = vrot.slane %v1604, 5
      %v1650 = vrot.slane %v1649, 4
      %v1651 = vrot.slane %v1380, 5
      %v1652 = vsel %vm594, %v1650, %v1651
      %s1653 = sadd.s32 8, %s243
      %s1654 = smul.addr %s1653, 2
      %s1655 = scalar_lea.vmem %s1, %s1654
      %v1656 = vld [vmem:[%s1655] sm:$0x3]
      %v1657 = vunpack.c.l.b16 %v1624
      %v1658 = vunpack.c.l.b16 %v1628
      %v1659 = vunpack.c.l.b16 %v1632
      %v1660 = vunpack.c.l.b16 %v1636
      %v1661 = vunpack.c.l.b16 %v1640
      %v1662 = vunpack.c.l.b16 %v1644
      %v1663 = vunpack.c.l.b16 %v1648
      %v1664 = vunpack.c.l.b16 %v1652
      %v1665 = vpack.c.b16 %v1658, %v1657
      %v1666 = vpack.c.b16 %v1660, %v1659
      %v1667 = vpack.c.b16 %v1662, %v1661
      %v1668 = vpack.c.b16 %v1664, %v1663
      %v1670 = vsel %vm386, %v1665, 0
      %v1673 = vsel %vm386, %v1666, 0
      %v1676 = vsel %vm386, %v1667, 0
      %v1679 = vsel %vm386, %v1668, 0
      %v1682 = vsel %vm399, %v1656, 0
      %1684 = vmatprep.subr.bf16.mxu0 0
      %1685 = vmatpush1.bf16.msra.mxu0 %v1682
      %1686 = vmatprep.subr.bf16.mxu0 0
      %1687 = vmatpush1.bf16.msra.mxu0 0
      %1688 = vmatprep.subr.bf16.mxu0 0
      %1689 = vmatpush1.bf16.msra.mxu0 0
      %1690 = vmatprep.subr.bf16.mxu0 0
      %1691 = vmatpush1.bf16.msra.mxu0 0
      %1692 = vmatprep.subr.bf16.mxu0 0
      %1693 = vmatpush1.bf16.msra.mxu0 0
      %1694 = vmatprep.subr.bf16.mxu0 0
      %1695 = vmatpush1.bf16.msra.mxu0 0
      %1696 = vmatprep.subr.bf16.mxu0 0
      %1697 = vmatpush1.bf16.msra.mxu0 0
      %1698 = vmatprep.subr.bf16.mxu0 0
      %1699 = vmatpush1.bf16.msra.mxu0 0
      %1700 = vmatprep.subr.bf16.mxu0 0
      %1701 = vmatpush1.bf16.msra.mxu0 0
      %1702 = vmatprep.subr.bf16.mxu0 0
      %1703 = vmatpush1.bf16.msra.mxu0 0
      %1704 = vmatprep.subr.bf16.mxu0 0
      %1705 = vmatpush1.bf16.msra.mxu0 0
      %1706 = vmatprep.subr.bf16.mxu0 0
      %1707 = vmatpush1.bf16.msra.mxu0 0
      %1708 = vmatprep.subr.bf16.mxu0 0
      %1709 = vmatpush1.bf16.msra.mxu0 0
      %1710 = vmatprep.subr.bf16.mxu0 0
      %1711 = vmatpush1.bf16.msra.mxu0 0
      %1712 = vmatprep.subr.bf16.mxu0 0
      %1713 = vmatpush1.bf16.msra.mxu0 0
      %1714 = vmatprep.subr.bf16.mxu0 0
      %1715 = vmatpush1.bf16.msra.mxu0 0
      %1716 = vmatprep.mubr.bf16.mxu0 0
      %1717 = vmatmul.mubr.bf16.gmra.mrb[0].mxu0 %v1670
      %v1718 = vpop.f32.mrb[0].mxu0
      %v1719 = vadd.f32 0.0, %v1718
      %v1720 = vpop.f32.mrb[0].mxu0
      %v1721 = vpop.f32.mrb[0].mxu0
      %v1722 = vadd.f32 0.0, %v1721
      %v1723 = vpop.f32.mrb[0].mxu0
      %1724 = vmatprep.mubr.bf16.mxu0 0
      %1725 = vmatmul.mubr.bf16.gmra.mrb[0].mxu0 %v1673
      %v1726 = vpop.f32.mrb[0].mxu0
      %v1727 = vadd.f32 0.0, %v1726
      %v1728 = vpop.f32.mrb[0].mxu0
      %v1729 = vpop.f32.mrb[0].mxu0
      %v1730 = vadd.f32 0.0, %v1729
      %v1731 = vpop.f32.mrb[0].mxu0
      %1732 = vmatprep.mubr.bf16.mxu0 0
      %1733 = vmatmul.mubr.bf16.gmra.mrb[0].mxu0 %v1676
      %v1734 = vpop.f32.mrb[0].mxu0
      %v1735 = vadd.f32 0.0, %v1734
      %v1736 = vpop.f32.mrb[0].mxu0
      %v1737 = vpop.f32.mrb[0].mxu0
      %v1738 = vadd.f32 0.0, %v1737
      %v1739 = vpop.f32.mrb[0].mxu0
      %1740 = vmatprep.mubr.bf16.mxu0 0
      %1741 = vmatmul.mubr.bf16.gmra.mrb[0].mxu0 %v1679
      %v1742 = vpop.f32.mrb[0].mxu0
      %v1743 = vadd.f32 0.0, %v1742
      %v1744 = vpop.f32.mrb[0].mxu0
      %v1745 = vpop.f32.mrb[0].mxu0
      %v1746 = vadd.f32 0.0, %v1745
      %v1747 = vpop.f32.mrb[0].mxu0
      %1748 = vdwg.mxu0
      %v1749 = vadd.f32 %v1589, %v1719
      %v1750 = vadd.f32 %v1590, %v1722
      %v1751 = vadd.f32 %v1591, %v1727
      %v1752 = vadd.f32 %v1592, %v1730
      %v1753 = vadd.f32 %v1593, %v1735
      %v1754 = vadd.f32 %v1594, %v1738
      %v1755 = vadd.f32 %v1595, %v1743
      %v1756 = vadd.f32 %v1596, %v1746
      %v1757 = vld [vmem:[#allocation2] sm:$0xff]
      %v1758 = vld [vmem:[#allocation2 + $0x8] sm:$0xff]
      %v1759 = vld [vmem:[#allocation2 + $0x10] sm:$0xff]
      %v1760 = vld [vmem:[#allocation2 + $0x18] sm:$0xff]
      %v1761 = vld [vmem:[#allocation2 + $0x20] sm:$0xff]
      %v1762 = vld [vmem:[#allocation2 + $0x28] sm:$0xff]
      %v1763 = vld [vmem:[#allocation2 + $0x30] sm:$0xff]
      %v1764 = vld [vmem:[#allocation2 + $0x38] sm:$0xff]
      %v1765 = vadd.f32 %v1757, %v1749
      %v1766 = vadd.f32 %v1758, %v1750
      %v1767 = vadd.f32 %v1759, %v1751
      %v1768 = vadd.f32 %v1760, %v1752
      %v1769 = vadd.f32 %v1761, %v1753
      %v1770 = vadd.f32 %v1762, %v1754
      %v1771 = vadd.f32 %v1763, %v1755
      %v1772 = vadd.f32 %v1764, %v1756
      %1773 = vst.msk [vmem:[#allocation2] sm:$0xff] %vm386, %v1765
      %1774 = vst.msk [vmem:[#allocation2 + $0x8] sm:$0xff] %vm386, %v1766
      %1775 = vst.msk [vmem:[#allocation2 + $0x10] sm:$0xff] %vm386, %v1767
      %1776 = vst.msk [vmem:[#allocation2 + $0x18] sm:$0xff] %vm386, %v1768
      %1777 = vst.msk [vmem:[#allocation2 + $0x20] sm:$0xff] %vm386, %v1769
      %1778 = vst.msk [vmem:[#allocation2 + $0x28] sm:$0xff] %vm386, %v1770
      %1779 = vst.msk [vmem:[#allocation2 + $0x30] sm:$0xff] %vm386, %v1771
      %1780 = vst.msk [vmem:[#allocation2 + $0x38] sm:$0xff] %vm386, %v1772
      %p1781 = scmp.eq.s32.totalorder %s21, 2
      // Predicated region
      $region37: #{bottleneck_forward.4} parent=31 // pred_check
        %p1782 = pneg %p1781
      $region38: #{bottleneck_forward.4} parent=31 // pred_check_branch
        %1784 = sbr.rel (%p1782) target = $region40
      $region39: #{bottleneck_forward.4} parent=31 // pred_region
        %v1785 = vld [vmem:[#allocation2] sm:$0xff]
        %v1786 = vld [vmem:[#allocation2 + $0x8] sm:$0xff]
        %v1787 = vld [vmem:[#allocation2 + $0x10] sm:$0xff]
        %v1788 = vld [vmem:[#allocation2 + $0x18] sm:$0xff]
        %v1789 = vld [vmem:[#allocation2 + $0x20] sm:$0xff]
        %v1790 = vld [vmem:[#allocation2 + $0x28] sm:$0xff]
        %v1791 = vld [vmem:[#allocation2 + $0x30] sm:$0xff]
        %v1792 = vld [vmem:[#allocation2 + $0x38] sm:$0xff]
        %v1793 = vld [vmem:[%s2] sm:$0x1]
        %v1795 = vlaneseq
        %v1796 = vshrl.u32 %v1795, 7
        %v1797 = vsub.s32 0, %v1796
        %v1798 = vrot.slane %v1793, %v1797
        %v1800 = vadd.f32 %v1785, %v1798
        %v1801 = vadd.f32 %v1786, %v1798
        %v1802 = vadd.f32 %v1787, %v1798
        %v1803 = vadd.f32 %v1788, %v1798
        %v1804 = vadd.f32 %v1789, %v1798
        %v1805 = vadd.f32 %v1790, %v1798
        %v1806 = vadd.f32 %v1791, %v1798
        %v1807 = vadd.f32 %v1792, %v1798
        %v1808 = vmax.f32 %v1800, 0.0
        %v1809 = vmax.f32 %v1801, 0.0
        %v1810 = vmax.f32 %v1802, 0.0
        %v1811 = vmax.f32 %v1803, 0.0
        %v1812 = vmax.f32 %v1804, 0.0
        %v1813 = vmax.f32 %v1805, 0.0
        %v1814 = vmax.f32 %v1806, 0.0
        %v1815 = vmax.f32 %v1807, 0.0
        %v1816 = vpack.c.bf16 %v1809, %v1808
        %v1817 = vpack.c.bf16 %v1811, %v1810
        %v1818 = vpack.c.bf16 %v1813, %v1812
        %v1819 = vpack.c.bf16 %v1815, %v1814
        %v1824 = vunpack.c.l.b16 %v1816
        %v1825 = vunpack.c.h.b16 %v1816
        %v1826 = vunpack.c.l.b16 %v1817
        %v1827 = vunpack.c.h.b16 %v1817
        %v1828 = vunpack.c.l.b16 %v1818
        %v1829 = vunpack.c.h.b16 %v1818
        %v1830 = vunpack.c.l.b16 %v1819
        %v1831 = vunpack.c.h.b16 %v1819
        %v1832 = vpack.c.b16 %v1824, %v1824
        %v1833 = vpack.c.b16 %v1825, %v1825
        %v1834 = vpack.c.b16 %v1826, %v1826
        %v1835 = vpack.c.b16 %v1827, %v1827
        %v1836 = vpack.c.b16 %v1828, %v1828
        %v1837 = vpack.c.b16 %v1829, %v1829
        %v1838 = vpack.c.b16 %v1830, %v1830
        %v1839 = vpack.c.b16 %v1831, %v1831
        %vm1848 = vcmask 27648
        %1849 = vst.msk [vmem:[%s220] sm:$0xf] %vm1848, %v1832
        %1850 = vst.msk [vmem:[%s220 + $0x4] sm:$0xf] %vm1848, %v1833
        %1851 = vst.msk [vmem:[%s220 + $0x8] sm:$0xf] %vm1848, %v1834
        %1852 = vst.msk [vmem:[%s220 + $0xc] sm:$0xf] %vm1848, %v1835
        %1853 = vst.msk [vmem:[%s220 + $0x10] sm:$0xf] %vm1848, %v1836
        %1854 = vst.msk [vmem:[%s220 + $0x14] sm:$0xf] %vm1848, %v1837
        %1855 = vst.msk [vmem:[%s220 + $0x18] sm:$0xf] %vm1848, %v1838
        %1856 = vst.msk [vmem:[%s220 + $0x1c] sm:$0xf] %vm1848, %v1839
      $region40: #{bottleneck_forward.4} parent=31 // pred_fallthru
        _
      %p1857 = scmp.lt.s32.totalorder %s19, 1
      %s1858 = scalar_select %p1857, %s19, 1
      %p1859 = scmp.lt.s32.totalorder %s20, 7
      %s1860 = scalar_select %p1859, %s20, 7
      %s1861 = smul.addr %s1860, 8
      %s1862 = smul.addr %s1858, 64
      %s1863 = sadd.s32 %s1861, %s1862
      %s1864 = smul.addr %s1863, 4
      %s1865 = scalar_lea.vmem %s3, %s1864
      // Predicated region
      $region41: #{bottleneck_forward.4} parent=31 // pred_check
        %p1866 = pneg %p125
      $region42: #{bottleneck_forward.4} parent=31 // pred_check_branch
        %1868 = sbr.rel (%p1866) target = $region44
      $region43: #{bottleneck_forward.4} parent=31 // pred_region
        _
      $region44: #{bottleneck_forward.4} parent=31 // pred_fallthru
        _
    $region32: #{bottleneck_forward.4} parent=5 // pred_fallthru
      _
    %p1869 = scmp.le.s32.totalorder 2, %s9
    // Predicated region
    $region45: #{bottleneck_forward.4} parent=5 // pred_check
      %p1870 = pneg %p1869
    $region46: #{bottleneck_forward.4} parent=5 // pred_check_branch
      %1872 = sbr.rel (%p1870) target = $region48
    $region47: #{bottleneck_forward.4} parent=5 // pred_region
      %s1873 = ssub.s32 %s9, 2
      // Predicated region
      $region49: #{bottleneck_forward.4} parent=47 // pred_check
        %p1874 = pneg %p131
      $region50: #{bottleneck_forward.4} parent=47 // pred_check_branch
        %1876 = sbr.rel (%p1874) target = $region52
      $region51: #{bottleneck_forward.4} parent=47 // pred_region
        %p1877 = scmp.lt.s32.totalorder %s22, 1
        %s1878 = scalar_select %p1877, %s22, 1
        %p1879 = scmp.lt.s32.totalorder %s23, 7
        %s1880 = scalar_select %p1879, %s23, 7
        %s1881 = smul.addr %s1880, 8
        %s1882 = smul.addr %s1878, 64
        %s1883 = sadd.s32 %s1881, %s1882
        %s1884 = smul.addr %s1883, 4
        %s1885 = scalar_lea.vmem %s3, %s1884
      $region52: #{bottleneck_forward.4} parent=47 // pred_fallthru
        _
    $region48: #{bottleneck_forward.4} parent=5 // pred_fallthru
      _
  $region6: #{bottleneck_forward.4} parent=0 // loop_footer
    %s13 = sadd.s32 1, %s9
  $region7: #{bottleneck_forward.4} parent=0 // loop_footer_branch
    %8 = sbr.rel target = $region3
  $region8: #{bottleneck_forward.4} parent=0 // loop_exit
    _

</llo_original>
